<compile_context>
chip_gen: v6e
topology: v6e:2x2x1
jax: 0.10.0
libtpu: 0.0.40
codegen_flags: <defaults>
</compile_context>

<pallas_src>
import functools
import math

import jax
import jax.numpy as jnp
from jax.experimental import pallas as pl
from jax.experimental.pallas import tpu as pltpu

# ----------------------------- model config (small) -----------------------------
BATCH = 2          # batch_size
PATCHES = 8        # no_patches / patch_length
EMBED = 32         # embed_dim (== input_dim for EncoderBlock's attention)
HEADS = 4          # num_heads
DIM_FF = 64        # dim_ff
NUM_LAYERS = 2
BN_EPS = 1e-5


# ----------------------------- fused Pallas kernel: all layers -----------------------------
def fused_encoder_kernel(x_ref, pe_ref, per_ref,
                         wq_ref, wk_ref, wv_ref, wuq_ref, wuk_ref, wo_ref,
                         w1_ref, b1_ref, w2_ref, b2_ref,
                         g1_ref, be1_ref, g2_ref, be2_ref,
                         out_ref, x_sc,
                         *, num_heads, batch, patches):
    l = pl.program_id(0)
    B, P, H = batch, patches, num_heads
    hd = wq_ref.shape[-1]
    E = H * hd
    scale = 1.0 / math.sqrt(2.0 * hd)

    # Load x into the persistent VMEM carry only on the first layer.
    @pl.when(l == 0)
    def _load_x():
        x_sc[...] = x_ref[...]

    x = x_sc[...]                       # (B*P, E) f32, carried across grid iterations
    pe = pe_ref[...]                    # (B*P, E) f32

    # ---- TUPE multi-head attention (per-head weights, statically unrolled H loop) ----
    attn_out = jnp.zeros((B * P, E), jnp.float32)
    for h in range(H):
        q = jnp.dot(x, wq_ref[0, h], preferred_element_type=jnp.float32).reshape(B, P, hd)
        k = jnp.dot(x, wk_ref[0, h], preferred_element_type=jnp.float32).reshape(B, P, hd)
        v = jnp.dot(x, wv_ref[0, h], preferred_element_type=jnp.float32).reshape(B, P, hd)
        uq = jnp.dot(pe, wuq_ref[0, h], preferred_element_type=jnp.float32).reshape(B, P, hd)
        uk = jnp.dot(pe, wuk_ref[0, h], preferred_element_type=jnp.float32).reshape(B, P, hd)

        logits = (jnp.einsum('bqd,bkd->bqk', q, k, preferred_element_type=jnp.float32)
                  + jnp.einsum('bqd,bkd->bqk', uq, uk, preferred_element_type=jnp.float32)
                  ) * scale + per_ref[h][None]                   # (B, P, P)

        m = jnp.max(logits, axis=-1, keepdims=True)
        p = jnp.exp(logits - m)
        attn = p * pl.reciprocal(jnp.sum(p, axis=-1, keepdims=True), approx=False)

        vals = jnp.einsum('bqk,bkd->bqd', attn, v,
                          preferred_element_type=jnp.float32).reshape(B * P, hd)
        # Per-head slice of Wo.T applied directly -> no concat / scratch writes needed.
        attn_out = attn_out + jnp.dot(vals, wo_ref[0, h],
                                      preferred_element_type=jnp.float32)

    x = x + attn_out                    # residual (+ Dropout(p=0.0) == identity)

    def batchnorm(y, gamma, beta):
        # BatchNorm1d(no_patches), training-mode biased stats over (batch, embed) axes.
        # Single sweep: sum and sum-of-squares, var = E[x^2] - mean^2, rsqrt on the EUP.
        y3 = y.reshape(B, P, E)
        inv_n = 1.0 / float(B * E)
        s = jnp.sum(y3, axis=2, keepdims=True)
        ss = jnp.sum(y3 * y3, axis=2, keepdims=True)
        s = jnp.sum(s, axis=0, keepdims=True)            # (1, P, 1)
        ss = jnp.sum(ss, axis=0, keepdims=True)          # (1, P, 1)
        mean = s * inv_n
        var = ss * inv_n - mean * mean
        inv = jax.lax.rsqrt(var + BN_EPS)
        out = (y3 - mean) * (inv * gamma[None]) + beta[None]
        return out.reshape(B * P, E)

    x = batchnorm(x, g1_ref[0], be1_ref[0])

    # ---- feed-forward: Linear -> ReLU -> Linear (weights pre-transposed) ----
    h1 = jnp.dot(x, w1_ref[0], preferred_element_type=jnp.float32) + b1_ref[0]
    h1 = jnp.maximum(h1, 0.0)
    ff = jnp.dot(h1, w2_ref[0], preferred_element_type=jnp.float32) + b2_ref[0]

    x = batchnorm(x + ff, g2_ref[0], be2_ref[0])

    x_sc[...] = x                       # carry to next layer

    @pl.when(l == pl.num_programs(0) - 1)
    def _store_out():
        out_ref[...] = x.astype(out_ref.dtype)


# ----------------------------- host-side layout plumbing -----------------------------
def to_kernel_params(params_list):
    """Convert torch-layout per-layer params to layer-stacked, per-head, pre-transposed arrays."""
    H, E = HEADS, EMBED
    hd = E // H

    def conv(p):
        qkv = p['wqkv'].reshape(H, 3, hd, E)     # rows of Wqkv are (head, {q,k,v}, dim)
        uqk = p['wuqk'].reshape(H, 2, hd, E)
        return dict(
            wq=jnp.transpose(qkv[:, 0], (0, 2, 1)),   # (H, E, hd)
            wk=jnp.transpose(qkv[:, 1], (0, 2, 1)),
            wv=jnp.transpose(qkv[:, 2], (0, 2, 1)),
            wuq=jnp.transpose(uqk[:, 0], (0, 2, 1)),
            wuk=jnp.transpose(uqk[:, 1], (0, 2, 1)),
            wo=p['wo'].T.reshape(H, hd, E),           # (H, hd, E): per-head slice of Wo.T
            w1=p['w1'].T,                             # (E, F)
            b1=p['b1'].reshape(1, -1),                # (1, F)
            w2=p['w2'].T,                             # (F, E)
            b2=p['b2'].reshape(1, -1),                # (1, E)
            g1=p['g1'], be1=p['be1'], g2=p['g2'], be2=p['be2'],   # (P, 1) each
        )

    convs = [conv(p) for p in params_list]
    return {k: jnp.stack([c[k] for c in convs], axis=0) for k in convs[0]}


def transformer_encoder(x, pe, pe_r, params_list):
    """Run the whole TransformerEncoder in a single fused Pallas call (grid over layers)."""
    B, P, E = x.shape
    H = HEADS
    hd = E // H
    L = len(params_list)
    F = params_list[0]['w1'].shape[0]
    BP = B * P
    kp = to_kernel_params(params_list)

    x2 = x.reshape(BP, E).astype(jnp.float32)
    pe2 = pe.reshape(BP, E).astype(jnp.float32)

    def layer_spec(shape):          # per-layer blocked weight, streamed along the grid axis
        nd = len(shape)
        return pl.BlockSpec((1,) + tuple(int(d) for d in shape[1:]),
                            lambda l, nd=nd: (l,) + (0,) * (nd - 1))

    def fixed_spec(shape):          # same full block every layer (stays VMEM-resident)
        nd = len(shape)
        return pl.BlockSpec(tuple(int(d) for d in shape),
                            lambda l, nd=nd: (0,) * nd)

    in_specs = [
        fixed_spec(x2.shape), fixed_spec(pe2.shape), fixed_spec(pe_r.shape),
        layer_spec(kp['wq'].shape), layer_spec(kp['wk'].shape), layer_spec(kp['wv'].shape),
        layer_spec(kp['wuq'].shape), layer_spec(kp['wuk'].shape), layer_spec(kp['wo'].shape),
        layer_spec(kp['w1'].shape), layer_spec(kp['b1'].shape),
        layer_spec(kp['w2'].shape), layer_spec(kp['b2'].shape),
        layer_spec(kp['g1'].shape), layer_spec(kp['be1'].shape),
        layer_spec(kp['g2'].shape), layer_spec(kp['be2'].shape),
    ]

    # Advisory cost hint for the XLA scheduler.
    flops = L * (2 * BP * E * 5 * E            # q/k/v/uq/uk projections
                 + 6 * B * H * P * P * hd      # logits (x2) + attn@v
                 + 2 * BP * E * E              # Wo
                 + 4 * BP * E * F)             # FFN
    transcendentals = L * (B * H * P * P + B * H * P + 2 * P)
    weight_bytes = sum(int(v.size) for v in kp.values()) * 4
    bytes_accessed = 4 * (int(x2.size) + int(pe2.size) + int(pe_r.size) + BP * E) + weight_bytes

    out = pl.pallas_call(
        functools.partial(fused_encoder_kernel, num_heads=H, batch=B, patches=P),
        grid=(L,),
        in_specs=in_specs,
        out_specs=fixed_spec((BP, E)),
        out_shape=jax.ShapeDtypeStruct((BP, E), jnp.float32),
        scratch_shapes=[pltpu.VMEM((BP, E), jnp.float32)],   # x carried across layers
        compiler_params=pltpu.CompilerParams(dimension_semantics=("arbitrary",)),
        cost_estimate=pl.CostEstimate(flops=int(flops),
                                      transcendentals=int(transcendentals),
                                      bytes_accessed=int(bytes_accessed)),
    )(x2, pe2, pe_r,
      kp['wq'], kp['wk'], kp['wv'], kp['wuq'], kp['wuk'], kp['wo'],
      kp['w1'], kp['b1'], kp['w2'], kp['b2'],
      kp['g1'], kp['be1'], kp['g2'], kp['be2'])

    return out.reshape(B, P, E)


# ----------------------------- deterministic parameter init (torch layout) -----------------------------
def xavier_uniform(key, shape):
    fan_out, fan_in = shape
    bound = math.sqrt(6.0 / (fan_in + fan_out))
    return jax.random.uniform(key, shape, jnp.float32, -bound, bound)


def linear_default(key, out_f, in_f):
    kw, kb = jax.random.split(key)
    bound = 1.0 / math.sqrt(in_f)
    w = jax.random.uniform(kw, (out_f, in_f), jnp.float32, -bound, bound)
    b = jax.random.uniform(kb, (1, out_f), jnp.float32, -bound, bound)
    return w, b


def make_layer_params(key):
    ks = jax.random.split(key, 5)
    wqkv = xavier_uniform(ks[0], (3 * EMBED, EMBED))
    wo = xavier_uniform(ks[1], (EMBED, EMBED))
    wuqk = xavier_uniform(ks[2], (2 * EMBED, EMBED))
    w1, b1 = linear_default(ks[3], DIM_FF, EMBED)
    w2, b2 = linear_default(ks[4], EMBED, DIM_FF)
    return dict(
        wqkv=wqkv, wuqk=wuqk, wo=wo,
        w1=w1, b1=b1, w2=w2, b2=b2,
        g1=jnp.ones((PATCHES, 1), jnp.float32), be1=jnp.zeros((PATCHES, 1), jnp.float32),
        g2=jnp.ones((PATCHES, 1), jnp.float32), be2=jnp.zeros((PATCHES, 1), jnp.float32),
    )


# ----------------------------- pure-JAX reference (mirrors the PyTorch code) -----------------------------
def ref_block(x, pe, pe_r, p):
    B, P, E = x.shape
    hd = E // HEADS
    scale = 1.0 / math.sqrt(2 * hd)

    qkv = x @ p['wqkv'].T
    pe_term = pe @ p['wuqk'].T
    pe_term = pe_term.reshape(B, P, HEADS, 2 * hd).transpose(0, 2, 1, 3)
    uq, uk = pe_term[..., :hd], pe_term[..., hd:]
    qkv = qkv.reshape(B, P, HEADS, 3 * hd).transpose(0, 2, 1, 3)
    q, k, v = qkv[..., :hd], qkv[..., hd:2 * hd], qkv[..., 2 * hd:]
    attn = jax.nn.softmax(jnp.einsum('bhqd,bhkd->bhqk', uq, uk) * scale
                          + jnp.einsum('bhqd,bhkd->bhqk', q, k) * scale
                          + pe_r, axis=-1)
    vals = jnp.einsum('bhqk,bhkd->bhqd', attn, v).transpose(0, 2, 1, 3).reshape(B, P, E)
    attn_out = vals @ p['wo'].T

    def bn(y, g, b):
        mean = y.mean(axis=(0, 2), keepdims=True)
        var = ((y - mean) ** 2).mean(axis=(0, 2), keepdims=True)
        return (y - mean) / jnp.sqrt(var + BN_EPS) * g.reshape(1, -1, 1) + b.reshape(1, -1, 1)

    x = bn(x + attn_out, p['g1'], p['be1'])
    ff = jnp.maximum(x.reshape(B * P, E) @ p['w1'].T + p['b1'], 0.0) @ p['w2'].T + p['b2']
    x = bn(x + ff.reshape(B, P, E), p['g2'], p['be2'])
    return x


def ref_encoder(x, pe, pe_r, params_list):
    for p in params_list:
        x = ref_block(x, pe, pe_r, p)
    return x


# ----------------------------- main -----------------------------
if __name__ == "__main__":
    root = jax.random.PRNGKey(0)
    kx, kpe, kper, kparams = jax.random.split(root, 4)

    x = jax.random.normal(kx, (BATCH, PATCHES, EMBED), jnp.float32)
    pe = jax.random.normal(kpe, (BATCH, PATCHES, EMBED), jnp.float32)
    pe_r = jax.random.normal(kper, (HEADS, PATCHES, PATCHES), jnp.float32) * 0.1

    params_list = [make_layer_params(k) for k in jax.random.split(kparams, NUM_LAYERS)]

    out = jax.block_until_ready(transformer_encoder(x, pe, pe_r, params_list))
    ref = jax.block_until_ready(ref_encoder(x, pe, pe_r, params_list))

    max_err = float(jnp.max(jnp.abs(out - ref)))
    assert out.shape == (BATCH, PATCHES, EMBED)
    assert max_err < 2e-4, f"mismatch vs reference: {max_err}"

    print("KERNEL_OK")
</pallas_src>

<mosaic_0001>
module attributes {stable_mosaic.version = 11 : i64} {
  func.func @fused_encoder_kernel(%arg0: i32, %arg1: memref<16x32xf32, #tpu.memory_space<vmem>>, %arg2: memref<16x32xf32, #tpu.memory_space<vmem>>, %arg3: memref<4x8x8xf32, #tpu.memory_space<vmem>>, %arg4: memref<1x4x32x8xf32, #tpu.memory_space<vmem>>, %arg5: memref<1x4x32x8xf32, #tpu.memory_space<vmem>>, %arg6: memref<1x4x32x8xf32, #tpu.memory_space<vmem>>, %arg7: memref<1x4x32x8xf32, #tpu.memory_space<vmem>>, %arg8: memref<1x4x32x8xf32, #tpu.memory_space<vmem>>, %arg9: memref<1x4x8x32xf32, #tpu.memory_space<vmem>>, %arg10: memref<1x32x64xf32, #tpu.memory_space<vmem>>, %arg11: memref<1x1x64xf32, #tpu.memory_space<vmem>>, %arg12: memref<1x64x32xf32, #tpu.memory_space<vmem>>, %arg13: memref<1x1x32xf32, #tpu.memory_space<vmem>>, %arg14: memref<1x8x1xf32, #tpu.memory_space<vmem>>, %arg15: memref<1x8x1xf32, #tpu.memory_space<vmem>>, %arg16: memref<1x8x1xf32, #tpu.memory_space<vmem>>, %arg17: memref<1x8x1xf32, #tpu.memory_space<vmem>>, %arg18: memref<16x32xf32, #tpu.memory_space<vmem>>, %arg19: memref<16x32xf32, #tpu.memory_space<vmem>>) attributes {dimension_semantics = [#tpu.dimension_semantics<arbitrary>], iteration_bounds = array<i64: 2>, scalar_prefetch = 0 : i64, scratch_operands = 1 : i64, tpu.core_type = #tpu.core_type<tc>, window_params = [{pipeline_mode = #tpu.pipeline_mode<synchronous>, transform_indices = @transform_0, window_bounds = array<i64: 16, 32>}, {pipeline_mode = #tpu.pipeline_mode<synchronous>, transform_indices = @transform_1, window_bounds = array<i64: 16, 32>}, {pipeline_mode = #tpu.pipeline_mode<synchronous>, transform_indices = @transform_2, window_bounds = array<i64: 4, 8, 8>}, {transform_indices = @transform_3, window_bounds = array<i64: 1, 4, 32, 8>}, {transform_indices = @transform_4, window_bounds = array<i64: 1, 4, 32, 8>}, {transform_indices = @transform_5, window_bounds = array<i64: 1, 4, 32, 8>}, {transform_indices = @transform_6, window_bounds = array<i64: 1, 4, 32, 8>}, {transform_indices = @transform_7, window_bounds = array<i64: 1, 4, 32, 8>}, {transform_indices = @transform_8, window_bounds = array<i64: 1, 4, 8, 32>}, {transform_indices = @transform_9, window_bounds = array<i64: 1, 32, 64>}, {transform_indices = @transform_10, window_bounds = array<i64: 1, 1, 64>}, {transform_indices = @transform_11, window_bounds = array<i64: 1, 64, 32>}, {transform_indices = @transform_12, window_bounds = array<i64: 1, 1, 32>}, {transform_indices = @transform_13, window_bounds = array<i64: 1, 8, 1>}, {transform_indices = @transform_14, window_bounds = array<i64: 1, 8, 1>}, {transform_indices = @transform_15, window_bounds = array<i64: 1, 8, 1>}, {transform_indices = @transform_16, window_bounds = array<i64: 1, 8, 1>}, {pipeline_mode = #tpu.pipeline_mode<synchronous>, transform_indices = @transform_17, window_bounds = array<i64: 16, 32>}]} {
    %c0_i32 = arith.constant 0 : i32
    %0 = arith.cmpi eq, %arg0, %c0_i32 : i32
    %1 = arith.extui %0 : i1 to i32
    %c0_i32_0 = arith.constant 0 : i32
    %2 = arith.cmpi ne, %1, %c0_i32_0 : i32
    scf.if %2 {
      %c0_201 = arith.constant 0 : index
      %c0_202 = arith.constant 0 : index
      %278 = vector.load %arg1[%c0_201, %c0_202] : memref<16x32xf32, #tpu.memory_space<vmem>>, vector<16x32xf32>
      %c0_203 = arith.constant 0 : index
      %c0_204 = arith.constant 0 : index
      %279 = vector.load %arg19[%c0_203, %c0_204] : memref<16x32xf32, #tpu.memory_space<vmem>>, vector<16x32xf32>
      tpu.vector_store %arg19[%c0_203, %c0_204], %278 {strides = array<i32>} : memref<16x32xf32, #tpu.memory_space<vmem>>, vector<16x32xf32>,
    } else {
    }
    %c0 = arith.constant 0 : index
    %c0_1 = arith.constant 0 : index
    %3 = vector.load %arg19[%c0, %c0_1] : memref<16x32xf32, #tpu.memory_space<vmem>>, vector<16x32xf32>
    %c0_2 = arith.constant 0 : index
    %c0_3 = arith.constant 0 : index
    %4 = vector.load %arg2[%c0_2, %c0_3] : memref<16x32xf32, #tpu.memory_space<vmem>>, vector<16x32xf32>
    %cst = arith.constant 0.000000e+00 : f32
    %5 = vector.broadcast %cst : f32 to vector<16x32xf32>
    %c0_4 = arith.constant 0 : index
    %c0_5 = arith.constant 0 : index
    %c0_6 = arith.constant 0 : index
    %c0_7 = arith.constant 0 : index
    %6 = vector.load %arg4[%c0_4, %c0_5, %c0_6, %c0_7] : memref<1x4x32x8xf32, #tpu.memory_space<vmem>>, vector<1x1x32x8xf32>
    %7 = vector.shape_cast %6 : vector<1x1x32x8xf32> to vector<32x8xf32>
    %cst_8 = arith.constant dense<0.000000e+00> : vector<16x8xf32>
    %8 = tpu.matmul %3, %7, %cst_8 {dimension_numbers = #tpu.dot_dimension_numbers<[1], [0], [0], [1], [0, 0, 1, 1], [], []>} : vector<16x32xf32>, vector<32x8xf32>, vector<16x8xf32> -> vector<16x8xf32>
    %9 = vector.shape_cast %8 : vector<16x8xf32> to vector<2x8x8xf32>
    %c0_9 = arith.constant 0 : index
    %c0_10 = arith.constant 0 : index
    %c0_11 = arith.constant 0 : index
    %c0_12 = arith.constant 0 : index
    %10 = vector.load %arg5[%c0_9, %c0_10, %c0_11, %c0_12] : memref<1x4x32x8xf32, #tpu.memory_space<vmem>>, vector<1x1x32x8xf32>
    %11 = vector.shape_cast %10 : vector<1x1x32x8xf32> to vector<32x8xf32>
    %cst_13 = arith.constant dense<0.000000e+00> : vector<16x8xf32>
    %12 = tpu.matmul %3, %11, %cst_13 {dimension_numbers = #tpu.dot_dimension_numbers<[1], [0], [0], [1], [0, 0, 1, 1], [], []>} : vector<16x32xf32>, vector<32x8xf32>, vector<16x8xf32> -> vector<16x8xf32>
    %13 = vector.shape_cast %12 : vector<16x8xf32> to vector<2x8x8xf32>
    %c0_14 = arith.constant 0 : index
    %c0_15 = arith.constant 0 : index
    %c0_16 = arith.constant 0 : index
    %c0_17 = arith.constant 0 : index
    %14 = vector.load %arg6[%c0_14, %c0_15, %c0_16, %c0_17] : memref<1x4x32x8xf32, #tpu.memory_space<vmem>>, vector<1x1x32x8xf32>
    %15 = vector.shape_cast %14 : vector<1x1x32x8xf32> to vector<32x8xf32>
    %cst_18 = arith.constant dense<0.000000e+00> : vector<16x8xf32>
    %16 = tpu.matmul %3, %15, %cst_18 {dimension_numbers = #tpu.dot_dimension_numbers<[1], [0], [0], [1], [0, 0, 1, 1], [], []>} : vector<16x32xf32>, vector<32x8xf32>, vector<16x8xf32> -> vector<16x8xf32>
    %17 = vector.shape_cast %16 : vector<16x8xf32> to vector<2x8x8xf32>
    %c0_19 = arith.constant 0 : index
    %c0_20 = arith.constant 0 : index
    %c0_21 = arith.constant 0 : index
    %c0_22 = arith.constant 0 : index
    %18 = vector.load %arg7[%c0_19, %c0_20, %c0_21, %c0_22] : memref<1x4x32x8xf32, #tpu.memory_space<vmem>>, vector<1x1x32x8xf32>
    %19 = vector.shape_cast %18 : vector<1x1x32x8xf32> to vector<32x8xf32>
    %cst_23 = arith.constant dense<0.000000e+00> : vector<16x8xf32>
    %20 = tpu.matmul %4, %19, %cst_23 {dimension_numbers = #tpu.dot_dimension_numbers<[1], [0], [0], [1], [0, 0, 1, 1], [], []>} : vector<16x32xf32>, vector<32x8xf32>, vector<16x8xf32> -> vector<16x8xf32>
    %21 = vector.shape_cast %20 : vector<16x8xf32> to vector<2x8x8xf32>
    %c0_24 = arith.constant 0 : index
    %c0_25 = arith.constant 0 : index
    %c0_26 = arith.constant 0 : index
    %c0_27 = arith.constant 0 : index
    %22 = vector.load %arg8[%c0_24, %c0_25, %c0_26, %c0_27] : memref<1x4x32x8xf32, #tpu.memory_space<vmem>>, vector<1x1x32x8xf32>
    %23 = vector.shape_cast %22 : vector<1x1x32x8xf32> to vector<32x8xf32>
    %cst_28 = arith.constant dense<0.000000e+00> : vector<16x8xf32>
    %24 = tpu.matmul %4, %23, %cst_28 {dimension_numbers = #tpu.dot_dimension_numbers<[1], [0], [0], [1], [0, 0, 1, 1], [], []>} : vector<16x32xf32>, vector<32x8xf32>, vector<16x8xf32> -> vector<16x8xf32>
    %25 = vector.shape_cast %24 : vector<16x8xf32> to vector<2x8x8xf32>
    "tpu.trace_start"() <{level = 10 : i32, message = "bqd,bkd->bqk"}> : () -> ()
    %cst_29 = arith.constant dense<0.000000e+00> : vector<2x8x8xf32>
    %26 = tpu.matmul %9, %13, %cst_29 {dimension_numbers = #tpu.dot_dimension_numbers<[2], [2], [1], [1], [0, 0, 0, 1, 1, 1], [0], [0]>} : vector<2x8x8xf32>, vector<2x8x8xf32>, vector<2x8x8xf32> -> vector<2x8x8xf32>
    %cst_30 = arith.constant dense<0.000000e+00> : vector<2x8x8xf32>
    %27 = tpu.matmul %21, %25, %cst_30 {dimension_numbers = #tpu.dot_dimension_numbers<[2], [2], [1], [1], [0, 0, 0, 1, 1, 1], [0], [0]>} : vector<2x8x8xf32>, vector<2x8x8xf32>, vector<2x8x8xf32> -> vector<2x8x8xf32>
    "tpu.trace_stop"() : () -> ()
    %28 = arith.addf %26, %27 : vector<2x8x8xf32>
    %cst_31 = arith.constant 2.500000e-01 : f32
    %29 = vector.broadcast %cst_31 : f32 to vector<2x8x8xf32>
    %30 = arith.mulf %28, %29 : vector<2x8x8xf32>
    %c0_32 = arith.constant 0 : index
    %c0_33 = arith.constant 0 : index
    %c0_34 = arith.constant 0 : index
    %31 = vector.load %arg3[%c0_32, %c0_33, %c0_34] : memref<4x8x8xf32, #tpu.memory_space<vmem>>, vector<1x8x8xf32>
    %32 = vector.shape_cast %31 : vector<1x8x8xf32> to vector<8x8xf32>
    %33 = vector.shape_cast %32 : vector<8x8xf32> to vector<1x8x8xf32>
    %34 = vector.broadcast %33 : vector<1x8x8xf32> to vector<2x8x8xf32>
    %35 = arith.addf %30, %34 : vector<2x8x8xf32>
    %cst_35 = arith.constant dense<0xFF800000> : vector<2x8xf32>
    %36 = vector.multi_reduction <maximumf>, %35, %cst_35 [2] : vector<2x8x8xf32> to vector<2x8xf32>
    %37 = vector.shape_cast %36 : vector<2x8xf32> to vector<2x8x1xf32>
    %38 = vector.broadcast %37 : vector<2x8x1xf32> to vector<2x8x8xf32>
    %39 = arith.subf %35, %38 : vector<2x8x8xf32>
    %40 = math.exp %39 : vector<2x8x8xf32>
    %cst_36 = arith.constant dense<0.000000e+00> : vector<2x8xf32>
    %41 = vector.multi_reduction <add>, %40, %cst_36 [2] : vector<2x8x8xf32> to vector<2x8xf32>
    %42 = vector.shape_cast %41 : vector<2x8xf32> to vector<2x8x1xf32>
    %43 = tpu.reciprocal %42 : vector<2x8x1xf32> -> vector<2x8x1xf32>
    %44 = vector.broadcast %43 : vector<2x8x1xf32> to vector<2x8x8xf32>
    %45 = arith.mulf %40, %44 : vector<2x8x8xf32>
    "tpu.trace_start"() <{level = 10 : i32, message = "bqk,bkd->bqd"}> : () -> ()
    %cst_37 = arith.constant dense<0.000000e+00> : vector<2x8x8xf32>
    %46 = tpu.matmul %45, %17, %cst_37 {dimension_numbers = #tpu.dot_dimension_numbers<[2], [1], [1], [2], [0, 0, 0, 1, 1, 2], [0], [0]>} : vector<2x8x8xf32>, vector<2x8x8xf32>, vector<2x8x8xf32> -> vector<2x8x8xf32>
    "tpu.trace_stop"() : () -> ()
    %47 = vector.shape_cast %46 : vector<2x8x8xf32> to vector<16x8xf32>
    %c0_38 = arith.constant 0 : index
    %c0_39 = arith.constant 0 : index
    %c0_40 = arith.constant 0 : index
    %c0_41 = arith.constant 0 : index
    %48 = vector.load %arg9[%c0_38, %c0_39, %c0_40, %c0_41] : memref<1x4x8x32xf32, #tpu.memory_space<vmem>>, vector<1x1x8x32xf32>
    %49 = vector.shape_cast %48 : vector<1x1x8x32xf32> to vector<8x32xf32>
    %cst_42 = arith.constant dense<0.000000e+00> : vector<16x32xf32>
    %50 = tpu.matmul %47, %49, %cst_42 {dimension_numbers = #tpu.dot_dimension_numbers<[1], [0], [0], [1], [0, 0, 1, 1], [], []>} : vector<16x8xf32>, vector<8x32xf32>, vector<16x32xf32> -> vector<16x32xf32>
    %51 = arith.addf %5, %50 : vector<16x32xf32>
    %c0_43 = arith.constant 0 : index
    %c1 = arith.constant 1 : index
    %c0_44 = arith.constant 0 : index
    %c0_45 = arith.constant 0 : index
    %52 = vector.load %arg4[%c0_43, %c1, %c0_44, %c0_45] : memref<1x4x32x8xf32, #tpu.memory_space<vmem>>, vector<1x1x32x8xf32>
    %53 = vector.shape_cast %52 : vector<1x1x32x8xf32> to vector<32x8xf32>
    %cst_46 = arith.constant dense<0.000000e+00> : vector<16x8xf32>
    %54 = tpu.matmul %3, %53, %cst_46 {dimension_numbers = #tpu.dot_dimension_numbers<[1], [0], [0], [1], [0, 0, 1, 1], [], []>} : vector<16x32xf32>, vector<32x8xf32>, vector<16x8xf32> -> vector<16x8xf32>
    %55 = vector.shape_cast %54 : vector<16x8xf32> to vector<2x8x8xf32>
    %c0_47 = arith.constant 0 : index
    %c1_48 = arith.constant 1 : index
    %c0_49 = arith.constant 0 : index
    %c0_50 = arith.constant 0 : index
    %56 = vector.load %arg5[%c0_47, %c1_48, %c0_49, %c0_50] : memref<1x4x32x8xf32, #tpu.memory_space<vmem>>, vector<1x1x32x8xf32>
    %57 = vector.shape_cast %56 : vector<1x1x32x8xf32> to vector<32x8xf32>
    %cst_51 = arith.constant dense<0.000000e+00> : vector<16x8xf32>
    %58 = tpu.matmul %3, %57, %cst_51 {dimension_numbers = #tpu.dot_dimension_numbers<[1], [0], [0], [1], [0, 0, 1, 1], [], []>} : vector<16x32xf32>, vector<32x8xf32>, vector<16x8xf32> -> vector<16x8xf32>
    %59 = vector.shape_cast %58 : vector<16x8xf32> to vector<2x8x8xf32>
    %c0_52 = arith.constant 0 : index
    %c1_53 = arith.constant 1 : index
    %c0_54 = arith.constant 0 : index
    %c0_55 = arith.constant 0 : index
    %60 = vector.load %arg6[%c0_52, %c1_53, %c0_54, %c0_55] : memref<1x4x32x8xf32, #tpu.memory_space<vmem>>, vector<1x1x32x8xf32>
    %61 = vector.shape_cast %60 : vector<1x1x32x8xf32> to vector<32x8xf32>
    %cst_56 = arith.constant dense<0.000000e+00> : vector<16x8xf32>
    %62 = tpu.matmul %3, %61, %cst_56 {dimension_numbers = #tpu.dot_dimension_numbers<[1], [0], [0], [1], [0, 0, 1, 1], [], []>} : vector<16x32xf32>, vector<32x8xf32>, vector<16x8xf32> -> vector<16x8xf32>
    %63 = vector.shape_cast %62 : vector<16x8xf32> to vector<2x8x8xf32>
    %c0_57 = arith.constant 0 : index
    %c1_58 = arith.constant 1 : index
    %c0_59 = arith.constant 0 : index
    %c0_60 = arith.constant 0 : index
    %64 = vector.load %arg7[%c0_57, %c1_58, %c0_59, %c0_60] : memref<1x4x32x8xf32, #tpu.memory_space<vmem>>, vector<1x1x32x8xf32>
    %65 = vector.shape_cast %64 : vector<1x1x32x8xf32> to vector<32x8xf32>
    %cst_61 = arith.constant dense<0.000000e+00> : vector<16x8xf32>
    %66 = tpu.matmul %4, %65, %cst_61 {dimension_numbers = #tpu.dot_dimension_numbers<[1], [0], [0], [1], [0, 0, 1, 1], [], []>} : vector<16x32xf32>, vector<32x8xf32>, vector<16x8xf32> -> vector<16x8xf32>
    %67 = vector.shape_cast %66 : vector<16x8xf32> to vector<2x8x8xf32>
    %c0_62 = arith.constant 0 : index
    %c1_63 = arith.constant 1 : index
    %c0_64 = arith.constant 0 : index
    %c0_65 = arith.constant 0 : index
    %68 = vector.load %arg8[%c0_62, %c1_63, %c0_64, %c0_65] : memref<1x4x32x8xf32, #tpu.memory_space<vmem>>, vector<1x1x32x8xf32>
    %69 = vector.shape_cast %68 : vector<1x1x32x8xf32> to vector<32x8xf32>
    %cst_66 = arith.constant dense<0.000000e+00> : vector<16x8xf32>
    %70 = tpu.matmul %4, %69, %cst_66 {dimension_numbers = #tpu.dot_dimension_numbers<[1], [0], [0], [1], [0, 0, 1, 1], [], []>} : vector<16x32xf32>, vector<32x8xf32>, vector<16x8xf32> -> vector<16x8xf32>
    %71 = vector.shape_cast %70 : vector<16x8xf32> to vector<2x8x8xf32>
    "tpu.trace_start"() <{level = 10 : i32, message = "bqd,bkd->bqk"}> : () -> ()
    %cst_67 = arith.constant dense<0.000000e+00> : vector<2x8x8xf32>
    %72 = tpu.matmul %55, %59, %cst_67 {dimension_numbers = #tpu.dot_dimension_numbers<[2], [2], [1], [1], [0, 0, 0, 1, 1, 1], [0], [0]>} : vector<2x8x8xf32>, vector<2x8x8xf32>, vector<2x8x8xf32> -> vector<2x8x8xf32>
    %cst_68 = arith.constant dense<0.000000e+00> : vector<2x8x8xf32>
    %73 = tpu.matmul %67, %71, %cst_68 {dimension_numbers = #tpu.dot_dimension_numbers<[2], [2], [1], [1], [0, 0, 0, 1, 1, 1], [0], [0]>} : vector<2x8x8xf32>, vector<2x8x8xf32>, vector<2x8x8xf32> -> vector<2x8x8xf32>
    "tpu.trace_stop"() : () -> ()
    %74 = arith.addf %72, %73 : vector<2x8x8xf32>
    %cst_69 = arith.constant 2.500000e-01 : f32
    %75 = vector.broadcast %cst_69 : f32 to vector<2x8x8xf32>
    %76 = arith.mulf %74, %75 : vector<2x8x8xf32>
    %c1_70 = arith.constant 1 : index
    %c0_71 = arith.constant 0 : index
    %c0_72 = arith.constant 0 : index
    %77 = vector.load %arg3[%c1_70, %c0_71, %c0_72] : memref<4x8x8xf32, #tpu.memory_space<vmem>>, vector<1x8x8xf32>
    %78 = vector.shape_cast %77 : vector<1x8x8xf32> to vector<8x8xf32>
    %79 = vector.shape_cast %78 : vector<8x8xf32> to vector<1x8x8xf32>
    %80 = vector.broadcast %79 : vector<1x8x8xf32> to vector<2x8x8xf32>
    %81 = arith.addf %76, %80 : vector<2x8x8xf32>
    %cst_73 = arith.constant dense<0xFF800000> : vector<2x8xf32>
    %82 = vector.multi_reduction <maximumf>, %81, %cst_73 [2] : vector<2x8x8xf32> to vector<2x8xf32>
    %83 = vector.shape_cast %82 : vector<2x8xf32> to vector<2x8x1xf32>
    %84 = vector.broadcast %83 : vector<2x8x1xf32> to vector<2x8x8xf32>
    %85 = arith.subf %81, %84 : vector<2x8x8xf32>
    %86 = math.exp %85 : vector<2x8x8xf32>
    %cst_74 = arith.constant dense<0.000000e+00> : vector<2x8xf32>
    %87 = vector.multi_reduction <add>, %86, %cst_74 [2] : vector<2x8x8xf32> to vector<2x8xf32>
    %88 = vector.shape_cast %87 : vector<2x8xf32> to vector<2x8x1xf32>
    %89 = tpu.reciprocal %88 : vector<2x8x1xf32> -> vector<2x8x1xf32>
    %90 = vector.broadcast %89 : vector<2x8x1xf32> to vector<2x8x8xf32>
    %91 = arith.mulf %86, %90 : vector<2x8x8xf32>
    "tpu.trace_start"() <{level = 10 : i32, message = "bqk,bkd->bqd"}> : () -> ()
    %cst_75 = arith.constant dense<0.000000e+00> : vector<2x8x8xf32>
    %92 = tpu.matmul %91, %63, %cst_75 {dimension_numbers = #tpu.dot_dimension_numbers<[2], [1], [1], [2], [0, 0, 0, 1, 1, 2], [0], [0]>} : vector<2x8x8xf32>, vector<2x8x8xf32>, vector<2x8x8xf32> -> vector<2x8x8xf32>
    "tpu.trace_stop"() : () -> ()
    %93 = vector.shape_cast %92 : vector<2x8x8xf32> to vector<16x8xf32>
    %c0_76 = arith.constant 0 : index
    %c1_77 = arith.constant 1 : index
    %c0_78 = arith.constant 0 : index
    %c0_79 = arith.constant 0 : index
    %94 = vector.load %arg9[%c0_76, %c1_77, %c0_78, %c0_79] : memref<1x4x8x32xf32, #tpu.memory_space<vmem>>, vector<1x1x8x32xf32>
    %95 = vector.shape_cast %94 : vector<1x1x8x32xf32> to vector<8x32xf32>
    %cst_80 = arith.constant dense<0.000000e+00> : vector<16x32xf32>
    %96 = tpu.matmul %93, %95, %cst_80 {dimension_numbers = #tpu.dot_dimension_numbers<[1], [0], [0], [1], [0, 0, 1, 1], [], []>} : vector<16x8xf32>, vector<8x32xf32>, vector<16x32xf32> -> vector<16x32xf32>
    %97 = arith.addf %51, %96 : vector<16x32xf32>
    %c0_81 = arith.constant 0 : index
    %c2 = arith.constant 2 : index
    %c0_82 = arith.constant 0 : index
    %c0_83 = arith.constant 0 : index
    %98 = vector.load %arg4[%c0_81, %c2, %c0_82, %c0_83] : memref<1x4x32x8xf32, #tpu.memory_space<vmem>>, vector<1x1x32x8xf32>
    %99 = vector.shape_cast %98 : vector<1x1x32x8xf32> to vector<32x8xf32>
    %cst_84 = arith.constant dense<0.000000e+00> : vector<16x8xf32>
    %100 = tpu.matmul %3, %99, %cst_84 {dimension_numbers = #tpu.dot_dimension_numbers<[1], [0], [0], [1], [0, 0, 1, 1], [], []>} : vector<16x32xf32>, vector<32x8xf32>, vector<16x8xf32> -> vector<16x8xf32>
    %101 = vector.shape_cast %100 : vector<16x8xf32> to vector<2x8x8xf32>
    %c0_85 = arith.constant 0 : index
    %c2_86 = arith.constant 2 : index
    %c0_87 = arith.constant 0 : index
    %c0_88 = arith.constant 0 : index
    %102 = vector.load %arg5[%c0_85, %c2_86, %c0_87, %c0_88] : memref<1x4x32x8xf32, #tpu.memory_space<vmem>>, vector<1x1x32x8xf32>
    %103 = vector.shape_cast %102 : vector<1x1x32x8xf32> to vector<32x8xf32>
    %cst_89 = arith.constant dense<0.000000e+00> : vector<16x8xf32>
    %104 = tpu.matmul %3, %103, %cst_89 {dimension_numbers = #tpu.dot_dimension_numbers<[1], [0], [0], [1], [0, 0, 1, 1], [], []>} : vector<16x32xf32>, vector<32x8xf32>, vector<16x8xf32> -> vector<16x8xf32>
    %105 = vector.shape_cast %104 : vector<16x8xf32> to vector<2x8x8xf32>
    %c0_90 = arith.constant 0 : index
    %c2_91 = arith.constant 2 : index
    %c0_92 = arith.constant 0 : index
    %c0_93 = arith.constant 0 : index
    %106 = vector.load %arg6[%c0_90, %c2_91, %c0_92, %c0_93] : memref<1x4x32x8xf32, #tpu.memory_space<vmem>>, vector<1x1x32x8xf32>
    %107 = vector.shape_cast %106 : vector<1x1x32x8xf32> to vector<32x8xf32>
    %cst_94 = arith.constant dense<0.000000e+00> : vector<16x8xf32>
    %108 = tpu.matmul %3, %107, %cst_94 {dimension_numbers = #tpu.dot_dimension_numbers<[1], [0], [0], [1], [0, 0, 1, 1], [], []>} : vector<16x32xf32>, vector<32x8xf32>, vector<16x8xf32> -> vector<16x8xf32>
    %109 = vector.shape_cast %108 : vector<16x8xf32> to vector<2x8x8xf32>
    %c0_95 = arith.constant 0 : index
    %c2_96 = arith.constant 2 : index
    %c0_97 = arith.constant 0 : index
    %c0_98 = arith.constant 0 : index
    %110 = vector.load %arg7[%c0_95, %c2_96, %c0_97, %c0_98] : memref<1x4x32x8xf32, #tpu.memory_space<vmem>>, vector<1x1x32x8xf32>
    %111 = vector.shape_cast %110 : vector<1x1x32x8xf32> to vector<32x8xf32>
    %cst_99 = arith.constant dense<0.000000e+00> : vector<16x8xf32>
    %112 = tpu.matmul %4, %111, %cst_99 {dimension_numbers = #tpu.dot_dimension_numbers<[1], [0], [0], [1], [0, 0, 1, 1], [], []>} : vector<16x32xf32>, vector<32x8xf32>, vector<16x8xf32> -> vector<16x8xf32>
    %113 = vector.shape_cast %112 : vector<16x8xf32> to vector<2x8x8xf32>
    %c0_100 = arith.constant 0 : index
    %c2_101 = arith.constant 2 : index
    %c0_102 = arith.constant 0 : index
    %c0_103 = arith.constant 0 : index
    %114 = vector.load %arg8[%c0_100, %c2_101, %c0_102, %c0_103] : memref<1x4x32x8xf32, #tpu.memory_space<vmem>>, vector<1x1x32x8xf32>
    %115 = vector.shape_cast %114 : vector<1x1x32x8xf32> to vector<32x8xf32>
    %cst_104 = arith.constant dense<0.000000e+00> : vector<16x8xf32>
    %116 = tpu.matmul %4, %115, %cst_104 {dimension_numbers = #tpu.dot_dimension_numbers<[1], [0], [0], [1], [0, 0, 1, 1], [], []>} : vector<16x32xf32>, vector<32x8xf32>, vector<16x8xf32> -> vector<16x8xf32>
    %117 = vector.shape_cast %116 : vector<16x8xf32> to vector<2x8x8xf32>
    "tpu.trace_start"() <{level = 10 : i32, message = "bqd,bkd->bqk"}> : () -> ()
    %cst_105 = arith.constant dense<0.000000e+00> : vector<2x8x8xf32>
    %118 = tpu.matmul %101, %105, %cst_105 {dimension_numbers = #tpu.dot_dimension_numbers<[2], [2], [1], [1], [0, 0, 0, 1, 1, 1], [0], [0]>} : vector<2x8x8xf32>, vector<2x8x8xf32>, vector<2x8x8xf32> -> vector<2x8x8xf32>
    %cst_106 = arith.constant dense<0.000000e+00> : vector<2x8x8xf32>
    %119 = tpu.matmul %113, %117, %cst_106 {dimension_numbers = #tpu.dot_dimension_numbers<[2], [2], [1], [1], [0, 0, 0, 1, 1, 1], [0], [0]>} : vector<2x8x8xf32>, vector<2x8x8xf32>, vector<2x8x8xf32> -> vector<2x8x8xf32>
    "tpu.trace_stop"() : () -> ()
    %120 = arith.addf %118, %119 : vector<2x8x8xf32>
    %cst_107 = arith.constant 2.500000e-01 : f32
    %121 = vector.broadcast %cst_107 : f32 to vector<2x8x8xf32>
    %122 = arith.mulf %120, %121 : vector<2x8x8xf32>
    %c2_108 = arith.constant 2 : index
    %c0_109 = arith.constant 0 : index
    %c0_110 = arith.constant 0 : index
    %123 = vector.load %arg3[%c2_108, %c0_109, %c0_110] : memref<4x8x8xf32, #tpu.memory_space<vmem>>, vector<1x8x8xf32>
    %124 = vector.shape_cast %123 : vector<1x8x8xf32> to vector<8x8xf32>
    %125 = vector.shape_cast %124 : vector<8x8xf32> to vector<1x8x8xf32>
    %126 = vector.broadcast %125 : vector<1x8x8xf32> to vector<2x8x8xf32>
    %127 = arith.addf %122, %126 : vector<2x8x8xf32>
    %cst_111 = arith.constant dense<0xFF800000> : vector<2x8xf32>
    %128 = vector.multi_reduction <maximumf>, %127, %cst_111 [2] : vector<2x8x8xf32> to vector<2x8xf32>
    %129 = vector.shape_cast %128 : vector<2x8xf32> to vector<2x8x1xf32>
    %130 = vector.broadcast %129 : vector<2x8x1xf32> to vector<2x8x8xf32>
    %131 = arith.subf %127, %130 : vector<2x8x8xf32>
    %132 = math.exp %131 : vector<2x8x8xf32>
    %cst_112 = arith.constant dense<0.000000e+00> : vector<2x8xf32>
    %133 = vector.multi_reduction <add>, %132, %cst_112 [2] : vector<2x8x8xf32> to vector<2x8xf32>
    %134 = vector.shape_cast %133 : vector<2x8xf32> to vector<2x8x1xf32>
    %135 = tpu.reciprocal %134 : vector<2x8x1xf32> -> vector<2x8x1xf32>
    %136 = vector.broadcast %135 : vector<2x8x1xf32> to vector<2x8x8xf32>
    %137 = arith.mulf %132, %136 : vector<2x8x8xf32>
    "tpu.trace_start"() <{level = 10 : i32, message = "bqk,bkd->bqd"}> : () -> ()
    %cst_113 = arith.constant dense<0.000000e+00> : vector<2x8x8xf32>
    %138 = tpu.matmul %137, %109, %cst_113 {dimension_numbers = #tpu.dot_dimension_numbers<[2], [1], [1], [2], [0, 0, 0, 1, 1, 2], [0], [0]>} : vector<2x8x8xf32>, vector<2x8x8xf32>, vector<2x8x8xf32> -> vector<2x8x8xf32>
    "tpu.trace_stop"() : () -> ()
    %139 = vector.shape_cast %138 : vector<2x8x8xf32> to vector<16x8xf32>
    %c0_114 = arith.constant 0 : index
    %c2_115 = arith.constant 2 : index
    %c0_116 = arith.constant 0 : index
    %c0_117 = arith.constant 0 : index
    %140 = vector.load %arg9[%c0_114, %c2_115, %c0_116, %c0_117] : memref<1x4x8x32xf32, #tpu.memory_space<vmem>>, vector<1x1x8x32xf32>
    %141 = vector.shape_cast %140 : vector<1x1x8x32xf32> to vector<8x32xf32>
    %cst_118 = arith.constant dense<0.000000e+00> : vector<16x32xf32>
    %142 = tpu.matmul %139, %141, %cst_118 {dimension_numbers = #tpu.dot_dimension_numbers<[1], [0], [0], [1], [0, 0, 1, 1], [], []>} : vector<16x8xf32>, vector<8x32xf32>, vector<16x32xf32> -> vector<16x32xf32>
    %143 = arith.addf %97, %142 : vector<16x32xf32>
    %c0_119 = arith.constant 0 : index
    %c3 = arith.constant 3 : index
    %c0_120 = arith.constant 0 : index
    %c0_121 = arith.constant 0 : index
    %144 = vector.load %arg4[%c0_119, %c3, %c0_120, %c0_121] : memref<1x4x32x8xf32, #tpu.memory_space<vmem>>, vector<1x1x32x8xf32>
    %145 = vector.shape_cast %144 : vector<1x1x32x8xf32> to vector<32x8xf32>
    %cst_122 = arith.constant dense<0.000000e+00> : vector<16x8xf32>
    %146 = tpu.matmul %3, %145, %cst_122 {dimension_numbers = #tpu.dot_dimension_numbers<[1], [0], [0], [1], [0, 0, 1, 1], [], []>} : vector<16x32xf32>, vector<32x8xf32>, vector<16x8xf32> -> vector<16x8xf32>
    %147 = vector.shape_cast %146 : vector<16x8xf32> to vector<2x8x8xf32>
    %c0_123 = arith.constant 0 : index
    %c3_124 = arith.constant 3 : index
    %c0_125 = arith.constant 0 : index
    %c0_126 = arith.constant 0 : index
    %148 = vector.load %arg5[%c0_123, %c3_124, %c0_125, %c0_126] : memref<1x4x32x8xf32, #tpu.memory_space<vmem>>, vector<1x1x32x8xf32>
    %149 = vector.shape_cast %148 : vector<1x1x32x8xf32> to vector<32x8xf32>
    %cst_127 = arith.constant dense<0.000000e+00> : vector<16x8xf32>
    %150 = tpu.matmul %3, %149, %cst_127 {dimension_numbers = #tpu.dot_dimension_numbers<[1], [0], [0], [1], [0, 0, 1, 1], [], []>} : vector<16x32xf32>, vector<32x8xf32>, vector<16x8xf32> -> vector<16x8xf32>
    %151 = vector.shape_cast %150 : vector<16x8xf32> to vector<2x8x8xf32>
    %c0_128 = arith.constant 0 : index
    %c3_129 = arith.constant 3 : index
    %c0_130 = arith.constant 0 : index
    %c0_131 = arith.constant 0 : index
    %152 = vector.load %arg6[%c0_128, %c3_129, %c0_130, %c0_131] : memref<1x4x32x8xf32, #tpu.memory_space<vmem>>, vector<1x1x32x8xf32>
    %153 = vector.shape_cast %152 : vector<1x1x32x8xf32> to vector<32x8xf32>
    %cst_132 = arith.constant dense<0.000000e+00> : vector<16x8xf32>
    %154 = tpu.matmul %3, %153, %cst_132 {dimension_numbers = #tpu.dot_dimension_numbers<[1], [0], [0], [1], [0, 0, 1, 1], [], []>} : vector<16x32xf32>, vector<32x8xf32>, vector<16x8xf32> -> vector<16x8xf32>
    %155 = vector.shape_cast %154 : vector<16x8xf32> to vector<2x8x8xf32>
    %c0_133 = arith.constant 0 : index
    %c3_134 = arith.constant 3 : index
    %c0_135 = arith.constant 0 : index
    %c0_136 = arith.constant 0 : index
    %156 = vector.load %arg7[%c0_133, %c3_134, %c0_135, %c0_136] : memref<1x4x32x8xf32, #tpu.memory_space<vmem>>, vector<1x1x32x8xf32>
    %157 = vector.shape_cast %156 : vector<1x1x32x8xf32> to vector<32x8xf32>
    %cst_137 = arith.constant dense<0.000000e+00> : vector<16x8xf32>
    %158 = tpu.matmul %4, %157, %cst_137 {dimension_numbers = #tpu.dot_dimension_numbers<[1], [0], [0], [1], [0, 0, 1, 1], [], []>} : vector<16x32xf32>, vector<32x8xf32>, vector<16x8xf32> -> vector<16x8xf32>
    %159 = vector.shape_cast %158 : vector<16x8xf32> to vector<2x8x8xf32>
    %c0_138 = arith.constant 0 : index
    %c3_139 = arith.constant 3 : index
    %c0_140 = arith.constant 0 : index
    %c0_141 = arith.constant 0 : index
    %160 = vector.load %arg8[%c0_138, %c3_139, %c0_140, %c0_141] : memref<1x4x32x8xf32, #tpu.memory_space<vmem>>, vector<1x1x32x8xf32>
    %161 = vector.shape_cast %160 : vector<1x1x32x8xf32> to vector<32x8xf32>
    %cst_142 = arith.constant dense<0.000000e+00> : vector<16x8xf32>
    %162 = tpu.matmul %4, %161, %cst_142 {dimension_numbers = #tpu.dot_dimension_numbers<[1], [0], [0], [1], [0, 0, 1, 1], [], []>} : vector<16x32xf32>, vector<32x8xf32>, vector<16x8xf32> -> vector<16x8xf32>
    %163 = vector.shape_cast %162 : vector<16x8xf32> to vector<2x8x8xf32>
    "tpu.trace_start"() <{level = 10 : i32, message = "bqd,bkd->bqk"}> : () -> ()
    %cst_143 = arith.constant dense<0.000000e+00> : vector<2x8x8xf32>
    %164 = tpu.matmul %147, %151, %cst_143 {dimension_numbers = #tpu.dot_dimension_numbers<[2], [2], [1], [1], [0, 0, 0, 1, 1, 1], [0], [0]>} : vector<2x8x8xf32>, vector<2x8x8xf32>, vector<2x8x8xf32> -> vector<2x8x8xf32>
    %cst_144 = arith.constant dense<0.000000e+00> : vector<2x8x8xf32>
    %165 = tpu.matmul %159, %163, %cst_144 {dimension_numbers = #tpu.dot_dimension_numbers<[2], [2], [1], [1], [0, 0, 0, 1, 1, 1], [0], [0]>} : vector<2x8x8xf32>, vector<2x8x8xf32>, vector<2x8x8xf32> -> vector<2x8x8xf32>
    "tpu.trace_stop"() : () -> ()
    %166 = arith.addf %164, %165 : vector<2x8x8xf32>
    %cst_145 = arith.constant 2.500000e-01 : f32
    %167 = vector.broadcast %cst_145 : f32 to vector<2x8x8xf32>
    %168 = arith.mulf %166, %167 : vector<2x8x8xf32>
    %c3_146 = arith.constant 3 : index
    %c0_147 = arith.constant 0 : index
    %c0_148 = arith.constant 0 : index
    %169 = vector.load %arg3[%c3_146, %c0_147, %c0_148] : memref<4x8x8xf32, #tpu.memory_space<vmem>>, vector<1x8x8xf32>
    %170 = vector.shape_cast %169 : vector<1x8x8xf32> to vector<8x8xf32>
    %171 = vector.shape_cast %170 : vector<8x8xf32> to vector<1x8x8xf32>
    %172 = vector.broadcast %171 : vector<1x8x8xf32> to vector<2x8x8xf32>
    %173 = arith.addf %168, %172 : vector<2x8x8xf32>
    %cst_149 = arith.constant dense<0xFF800000> : vector<2x8xf32>
    %174 = vector.multi_reduction <maximumf>, %173, %cst_149 [2] : vector<2x8x8xf32> to vector<2x8xf32>
    %175 = vector.shape_cast %174 : vector<2x8xf32> to vector<2x8x1xf32>
    %176 = vector.broadcast %175 : vector<2x8x1xf32> to vector<2x8x8xf32>
    %177 = arith.subf %173, %176 : vector<2x8x8xf32>
    %178 = math.exp %177 : vector<2x8x8xf32>
    %cst_150 = arith.constant dense<0.000000e+00> : vector<2x8xf32>
    %179 = vector.multi_reduction <add>, %178, %cst_150 [2] : vector<2x8x8xf32> to vector<2x8xf32>
    %180 = vector.shape_cast %179 : vector<2x8xf32> to vector<2x8x1xf32>
    %181 = tpu.reciprocal %180 : vector<2x8x1xf32> -> vector<2x8x1xf32>
    %182 = vector.broadcast %181 : vector<2x8x1xf32> to vector<2x8x8xf32>
    %183 = arith.mulf %178, %182 : vector<2x8x8xf32>
    "tpu.trace_start"() <{level = 10 : i32, message = "bqk,bkd->bqd"}> : () -> ()
    %cst_151 = arith.constant dense<0.000000e+00> : vector<2x8x8xf32>
    %184 = tpu.matmul %183, %155, %cst_151 {dimension_numbers = #tpu.dot_dimension_numbers<[2], [1], [1], [2], [0, 0, 0, 1, 1, 2], [0], [0]>} : vector<2x8x8xf32>, vector<2x8x8xf32>, vector<2x8x8xf32> -> vector<2x8x8xf32>
    "tpu.trace_stop"() : () -> ()
    %185 = vector.shape_cast %184 : vector<2x8x8xf32> to vector<16x8xf32>
    %c0_152 = arith.constant 0 : index
    %c3_153 = arith.constant 3 : index
    %c0_154 = arith.constant 0 : index
    %c0_155 = arith.constant 0 : index
    %186 = vector.load %arg9[%c0_152, %c3_153, %c0_154, %c0_155] : memref<1x4x8x32xf32, #tpu.memory_space<vmem>>, vector<1x1x8x32xf32>
    %187 = vector.shape_cast %186 : vector<1x1x8x32xf32> to vector<8x32xf32>
    %cst_156 = arith.constant dense<0.000000e+00> : vector<16x32xf32>
    %188 = tpu.matmul %185, %187, %cst_156 {dimension_numbers = #tpu.dot_dimension_numbers<[1], [0], [0], [1], [0, 0, 1, 1], [], []>} : vector<16x8xf32>, vector<8x32xf32>, vector<16x32xf32> -> vector<16x32xf32>
    %189 = arith.addf %143, %188 : vector<16x32xf32>
    %190 = arith.addf %3, %189 : vector<16x32xf32>
    %c0_157 = arith.constant 0 : index
    %c0_158 = arith.constant 0 : index
    %c0_159 = arith.constant 0 : index
    %191 = vector.load %arg14[%c0_157, %c0_158, %c0_159] : memref<1x8x1xf32, #tpu.memory_space<vmem>>, vector<1x8x1xf32>
    %192 = vector.shape_cast %191 : vector<1x8x1xf32> to vector<8x1xf32>
    %c0_160 = arith.constant 0 : index
    %c0_161 = arith.constant 0 : index
    %c0_162 = arith.constant 0 : index
    %193 = vector.load %arg15[%c0_160, %c0_161, %c0_162] : memref<1x8x1xf32, #tpu.memory_space<vmem>>, vector<1x8x1xf32>
    %194 = vector.shape_cast %193 : vector<1x8x1xf32> to vector<8x1xf32>
    %195 = vector.shape_cast %190 : vector<16x32xf32> to vector<2x8x32xf32>
    %cst_163 = arith.constant dense<0.000000e+00> : vector<2x8xf32>
    %196 = vector.multi_reduction <add>, %195, %cst_163 [2] : vector<2x8x32xf32> to vector<2x8xf32>
    %197 = vector.shape_cast %196 : vector<2x8xf32> to vector<2x8x1xf32>
    %198 = arith.mulf %195, %195 : vector<2x8x32xf32>
    %cst_164 = arith.constant dense<0.000000e+00> : vector<2x8xf32>
    %199 = vector.multi_reduction <add>, %198, %cst_164 [2] : vector<2x8x32xf32> to vector<2x8xf32>
    %200 = vector.shape_cast %199 : vector<2x8xf32> to vector<2x8x1xf32>
    %cst_165 = arith.constant dense<0.000000e+00> : vector<8x1xf32>
    %201 = vector.multi_reduction <add>, %197, %cst_165 [0] : vector<2x8x1xf32> to vector<8x1xf32>
    %202 = vector.shape_cast %201 : vector<8x1xf32> to vector<1x8x1xf32>
    %cst_166 = arith.constant dense<0.000000e+00> : vector<8x1xf32>
    %203 = vector.multi_reduction <add>, %200, %cst_166 [0] : vector<2x8x1xf32> to vector<8x1xf32>
    %204 = vector.shape_cast %203 : vector<8x1xf32> to vector<1x8x1xf32>
    %cst_167 = arith.constant 1.562500e-02 : f32
    %205 = vector.broadcast %cst_167 : f32 to vector<1x8x1xf32>
    %206 = arith.mulf %202, %205 : vector<1x8x1xf32>
    %cst_168 = arith.constant 1.562500e-02 : f32
    %207 = vector.broadcast %cst_168 : f32 to vector<1x8x1xf32>
    %208 = arith.mulf %204, %207 : vector<1x8x1xf32>
    %209 = arith.mulf %206, %206 : vector<1x8x1xf32>
    %210 = arith.subf %208, %209 : vector<1x8x1xf32>
    %cst_169 = arith.constant 9.99999974E-6 : f32
    %211 = vector.broadcast %cst_169 : f32 to vector<1x8x1xf32>
    %212 = arith.addf %210, %211 : vector<1x8x1xf32>
    %213 = math.rsqrt %212 : vector<1x8x1xf32>
    %214 = vector.broadcast %206 : vector<1x8x1xf32> to vector<2x8x32xf32>
    %215 = arith.subf %195, %214 : vector<2x8x32xf32>
    %216 = vector.shape_cast %192 : vector<8x1xf32> to vector<1x8x1xf32>
    %217 = arith.mulf %213, %216 : vector<1x8x1xf32>
    %218 = vector.broadcast %217 : vector<1x8x1xf32> to vector<2x8x32xf32>
    %219 = arith.mulf %215, %218 : vector<2x8x32xf32>
    %220 = vector.shape_cast %194 : vector<8x1xf32> to vector<1x8x1xf32>
    %221 = vector.broadcast %220 : vector<1x8x1xf32> to vector<2x8x32xf32>
    %222 = arith.addf %219, %221 : vector<2x8x32xf32>
    %223 = vector.shape_cast %222 : vector<2x8x32xf32> to vector<16x32xf32>
    %c0_170 = arith.constant 0 : index
    %c0_171 = arith.constant 0 : index
    %c0_172 = arith.constant 0 : index
    %224 = vector.load %arg10[%c0_170, %c0_171, %c0_172] : memref<1x32x64xf32, #tpu.memory_space<vmem>>, vector<1x32x64xf32>
    %225 = vector.shape_cast %224 : vector<1x32x64xf32> to vector<32x64xf32>
    %cst_173 = arith.constant dense<0.000000e+00> : vector<16x64xf32>
    %226 = tpu.matmul %223, %225, %cst_173 {dimension_numbers = #tpu.dot_dimension_numbers<[1], [0], [0], [1], [0, 0, 1, 1], [], []>} : vector<16x32xf32>, vector<32x64xf32>, vector<16x64xf32> -> vector<16x64xf32>
    %c0_174 = arith.constant 0 : index
    %c0_175 = arith.constant 0 : index
    %c0_176 = arith.constant 0 : index
    %227 = vector.load %arg11[%c0_174, %c0_175, %c0_176] : memref<1x1x64xf32, #tpu.memory_space<vmem>>, vector<1x1x64xf32>
    %228 = vector.shape_cast %227 : vector<1x1x64xf32> to vector<1x64xf32>
    %229 = vector.broadcast %228 : vector<1x64xf32> to vector<16x64xf32>
    %230 = arith.addf %226, %229 : vector<16x64xf32>
    %cst_177 = arith.constant 0.000000e+00 : f32
    %231 = vector.broadcast %cst_177 : f32 to vector<16x64xf32>
    %232 = arith.maximumf %230, %231 : vector<16x64xf32>
    %c0_178 = arith.constant 0 : index
    %c0_179 = arith.constant 0 : index
    %c0_180 = arith.constant 0 : index
    %233 = vector.load %arg12[%c0_178, %c0_179, %c0_180] : memref<1x64x32xf32, #tpu.memory_space<vmem>>, vector<1x64x32xf32>
    %234 = vector.shape_cast %233 : vector<1x64x32xf32> to vector<64x32xf32>
    %cst_181 = arith.constant dense<0.000000e+00> : vector<16x32xf32>
    %235 = tpu.matmul %232, %234, %cst_181 {dimension_numbers = #tpu.dot_dimension_numbers<[1], [0], [0], [1], [0, 0, 1, 1], [], []>} : vector<16x64xf32>, vector<64x32xf32>, vector<16x32xf32> -> vector<16x32xf32>
    %c0_182 = arith.constant 0 : index
    %c0_183 = arith.constant 0 : index
    %c0_184 = arith.constant 0 : index
    %236 = vector.load %arg13[%c0_182, %c0_183, %c0_184] : memref<1x1x32xf32, #tpu.memory_space<vmem>>, vector<1x1x32xf32>
    %237 = vector.shape_cast %236 : vector<1x1x32xf32> to vector<1x32xf32>
    %238 = vector.broadcast %237 : vector<1x32xf32> to vector<16x32xf32>
    %239 = arith.addf %235, %238 : vector<16x32xf32>
    %240 = arith.addf %223, %239 : vector<16x32xf32>
    %c0_185 = arith.constant 0 : index
    %c0_186 = arith.constant 0 : index
    %c0_187 = arith.constant 0 : index
    %241 = vector.load %arg16[%c0_185, %c0_186, %c0_187] : memref<1x8x1xf32, #tpu.memory_space<vmem>>, vector<1x8x1xf32>
    %242 = vector.shape_cast %241 : vector<1x8x1xf32> to vector<8x1xf32>
    %c0_188 = arith.constant 0 : index
    %c0_189 = arith.constant 0 : index
    %c0_190 = arith.constant 0 : index
    %243 = vector.load %arg17[%c0_188, %c0_189, %c0_190] : memref<1x8x1xf32, #tpu.memory_space<vmem>>, vector<1x8x1xf32>
    %244 = vector.shape_cast %243 : vector<1x8x1xf32> to vector<8x1xf32>
    %245 = vector.shape_cast %240 : vector<16x32xf32> to vector<2x8x32xf32>
    %cst_191 = arith.constant dense<0.000000e+00> : vector<2x8xf32>
    %246 = vector.multi_reduction <add>, %245, %cst_191 [2] : vector<2x8x32xf32> to vector<2x8xf32>
    %247 = vector.shape_cast %246 : vector<2x8xf32> to vector<2x8x1xf32>
    %248 = arith.mulf %245, %245 : vector<2x8x32xf32>
    %cst_192 = arith.constant dense<0.000000e+00> : vector<2x8xf32>
    %249 = vector.multi_reduction <add>, %248, %cst_192 [2] : vector<2x8x32xf32> to vector<2x8xf32>
    %250 = vector.shape_cast %249 : vector<2x8xf32> to vector<2x8x1xf32>
    %cst_193 = arith.constant dense<0.000000e+00> : vector<8x1xf32>
    %251 = vector.multi_reduction <add>, %247, %cst_193 [0] : vector<2x8x1xf32> to vector<8x1xf32>
    %252 = vector.shape_cast %251 : vector<8x1xf32> to vector<1x8x1xf32>
    %cst_194 = arith.constant dense<0.000000e+00> : vector<8x1xf32>
    %253 = vector.multi_reduction <add>, %250, %cst_194 [0] : vector<2x8x1xf32> to vector<8x1xf32>
    %254 = vector.shape_cast %253 : vector<8x1xf32> to vector<1x8x1xf32>
    %cst_195 = arith.constant 1.562500e-02 : f32
    %255 = vector.broadcast %cst_195 : f32 to vector<1x8x1xf32>
    %256 = arith.mulf %252, %255 : vector<1x8x1xf32>
    %cst_196 = arith.constant 1.562500e-02 : f32
    %257 = vector.broadcast %cst_196 : f32 to vector<1x8x1xf32>
    %258 = arith.mulf %254, %257 : vector<1x8x1xf32>
    %259 = arith.mulf %256, %256 : vector<1x8x1xf32>
    %260 = arith.subf %258, %259 : vector<1x8x1xf32>
    %cst_197 = arith.constant 9.99999974E-6 : f32
    %261 = vector.broadcast %cst_197 : f32 to vector<1x8x1xf32>
    %262 = arith.addf %260, %261 : vector<1x8x1xf32>
    %263 = math.rsqrt %262 : vector<1x8x1xf32>
    %264 = vector.broadcast %256 : vector<1x8x1xf32> to vector<2x8x32xf32>
    %265 = arith.subf %245, %264 : vector<2x8x32xf32>
    %266 = vector.shape_cast %242 : vector<8x1xf32> to vector<1x8x1xf32>
    %267 = arith.mulf %263, %266 : vector<1x8x1xf32>
    %268 = vector.broadcast %267 : vector<1x8x1xf32> to vector<2x8x32xf32>
    %269 = arith.mulf %265, %268 : vector<2x8x32xf32>
    %270 = vector.shape_cast %244 : vector<8x1xf32> to vector<1x8x1xf32>
    %271 = vector.broadcast %270 : vector<1x8x1xf32> to vector<2x8x32xf32>
    %272 = arith.addf %269, %271 : vector<2x8x32xf32>
    %273 = vector.shape_cast %272 : vector<2x8x32xf32> to vector<16x32xf32>
    %c0_198 = arith.constant 0 : index
    %c0_199 = arith.constant 0 : index
    %274 = vector.load %arg19[%c0_198, %c0_199] : memref<16x32xf32, #tpu.memory_space<vmem>>, vector<16x32xf32>
    tpu.vector_store %arg19[%c0_198, %c0_199], %273 {strides = array<i32>} : memref<16x32xf32, #tpu.memory_space<vmem>>, vector<16x32xf32>,
    %c1_i32 = arith.constant 1 : i32
    %275 = arith.cmpi eq, %arg0, %c1_i32 : i32
    %276 = arith.extui %275 : i1 to i32
    %c0_i32_200 = arith.constant 0 : i32
    %277 = arith.cmpi ne, %276, %c0_i32_200 : i32
    scf.if %277 {
      %c0_201 = arith.constant 0 : index
      %c0_202 = arith.constant 0 : index
      %278 = vector.load %arg18[%c0_201, %c0_202] : memref<16x32xf32, #tpu.memory_space<vmem>>, vector<16x32xf32>
      tpu.vector_store %arg18[%c0_201, %c0_202], %273 {strides = array<i32>} : memref<16x32xf32, #tpu.memory_space<vmem>>, vector<16x32xf32>,
    } else {
    }
    return
  }
  func.func @transform_0(%arg0: i32) -> (i32, i32) {
    %c0_i32 = arith.constant 0 : i32
    %c0_i32_0 = arith.constant 0 : i32
    %c0_i32_1 = arith.constant 0 : i32
    return %c0_i32, %c0_i32_0 : i32, i32
  }
  func.func @transform_1(%arg0: i32) -> (i32, i32) {
    %c0_i32 = arith.constant 0 : i32
    %c0_i32_0 = arith.constant 0 : i32
    %c0_i32_1 = arith.constant 0 : i32
    return %c0_i32, %c0_i32_0 : i32, i32
  }
  func.func @transform_2(%arg0: i32) -> (i32, i32, i32) {
    %c0_i32 = arith.constant 0 : i32
    %c0_i32_0 = arith.constant 0 : i32
    %c0_i32_1 = arith.constant 0 : i32
    %c0_i32_2 = arith.constant 0 : i32
    return %c0_i32, %c0_i32_0, %c0_i32_1 : i32, i32, i32
  }
  func.func @transform_3(%arg0: i32) -> (i32, i32, i32, i32) {
    %c0_i32 = arith.constant 0 : i32
    %c0_i32_0 = arith.constant 0 : i32
    %c0_i32_1 = arith.constant 0 : i32
    %c0_i32_2 = arith.constant 0 : i32
    return %arg0, %c0_i32, %c0_i32_0, %c0_i32_1 : i32, i32, i32, i32
  }
  func.func @transform_4(%arg0: i32) -> (i32, i32, i32, i32) {
    %c0_i32 = arith.constant 0 : i32
    %c0_i32_0 = arith.constant 0 : i32
    %c0_i32_1 = arith.constant 0 : i32
    %c0_i32_2 = arith.constant 0 : i32
    return %arg0, %c0_i32, %c0_i32_0, %c0_i32_1 : i32, i32, i32, i32
  }
  func.func @transform_5(%arg0: i32) -> (i32, i32, i32, i32) {
    %c0_i32 = arith.constant 0 : i32
    %c0_i32_0 = arith.constant 0 : i32
    %c0_i32_1 = arith.constant 0 : i32
    %c0_i32_2 = arith.constant 0 : i32
    return %arg0, %c0_i32, %c0_i32_0, %c0_i32_1 : i32, i32, i32, i32
  }
  func.func @transform_6(%arg0: i32) -> (i32, i32, i32, i32) {
    %c0_i32 = arith.constant 0 : i32
    %c0_i32_0 = arith.constant 0 : i32
    %c0_i32_1 = arith.constant 0 : i32
    %c0_i32_2 = arith.constant 0 : i32
    return %arg0, %c0_i32, %c0_i32_0, %c0_i32_1 : i32, i32, i32, i32
  }
  func.func @transform_7(%arg0: i32) -> (i32, i32, i32, i32) {
    %c0_i32 = arith.constant 0 : i32
    %c0_i32_0 = arith.constant 0 : i32
    %c0_i32_1 = arith.constant 0 : i32
    %c0_i32_2 = arith.constant 0 : i32
    return %arg0, %c0_i32, %c0_i32_0, %c0_i32_1 : i32, i32, i32, i32
  }
  func.func @transform_8(%arg0: i32) -> (i32, i32, i32, i32) {
    %c0_i32 = arith.constant 0 : i32
    %c0_i32_0 = arith.constant 0 : i32
    %c0_i32_1 = arith.constant 0 : i32
    %c0_i32_2 = arith.constant 0 : i32
    return %arg0, %c0_i32, %c0_i32_0, %c0_i32_1 : i32, i32, i32, i32
  }
  func.func @transform_9(%arg0: i32) -> (i32, i32, i32) {
    %c0_i32 = arith.constant 0 : i32
    %c0_i32_0 = arith.constant 0 : i32
    %c0_i32_1 = arith.constant 0 : i32
    return %arg0, %c0_i32, %c0_i32_0 : i32, i32, i32
  }
  func.func @transform_10(%arg0: i32) -> (i32, i32, i32) {
    %c0_i32 = arith.constant 0 : i32
    %c0_i32_0 = arith.constant 0 : i32
    %c0_i32_1 = arith.constant 0 : i32
    return %arg0, %c0_i32, %c0_i32_0 : i32, i32, i32
  }
  func.func @transform_11(%arg0: i32) -> (i32, i32, i32) {
    %c0_i32 = arith.constant 0 : i32
    %c0_i32_0 = arith.constant 0 : i32
    %c0_i32_1 = arith.constant 0 : i32
    return %arg0, %c0_i32, %c0_i32_0 : i32, i32, i32
  }
  func.func @transform_12(%arg0: i32) -> (i32, i32, i32) {
    %c0_i32 = arith.constant 0 : i32
    %c0_i32_0 = arith.constant 0 : i32
    %c0_i32_1 = arith.constant 0 : i32
    return %arg0, %c0_i32, %c0_i32_0 : i32, i32, i32
  }
  func.func @transform_13(%arg0: i32) -> (i32, i32, i32) {
    %c0_i32 = arith.constant 0 : i32
    %c0_i32_0 = arith.constant 0 : i32
    %c0_i32_1 = arith.constant 0 : i32
    return %arg0, %c0_i32, %c0_i32_0 : i32, i32, i32
  }
  func.func @transform_14(%arg0: i32) -> (i32, i32, i32) {
    %c0_i32 = arith.constant 0 : i32
    %c0_i32_0 = arith.constant 0 : i32
    %c0_i32_1 = arith.constant 0 : i32
    return %arg0, %c0_i32, %c0_i32_0 : i32, i32, i32
  }
  func.func @transform_15(%arg0: i32) -> (i32, i32, i32) {
    %c0_i32 = arith.constant 0 : i32
    %c0_i32_0 = arith.constant 0 : i32
    %c0_i32_1 = arith.constant 0 : i32
    return %arg0, %c0_i32, %c0_i32_0 : i32, i32, i32
  }
  func.func @transform_16(%arg0: i32) -> (i32, i32, i32) {
    %c0_i32 = arith.constant 0 : i32
    %c0_i32_0 = arith.constant 0 : i32
    %c0_i32_1 = arith.constant 0 : i32
    return %arg0, %c0_i32, %c0_i32_0 : i32, i32, i32
  }
  func.func @transform_17(%arg0: i32) -> (i32, i32) {
    %c0_i32 = arith.constant 0 : i32
    %c0_i32_0 = arith.constant 0 : i32
    %c0_i32_1 = arith.constant 0 : i32
    return %c0_i32, %c0_i32_0 : i32, i32
  }
}

</mosaic_0001>

<llo_original>
// kernel: tpu_custom_call.1
$region0: #{tpu_custom_call.1}
  #allocation0 [shape = 'u32[]', space=smem, size = 0x4, offset = 0x4, fixed_abs, tag = 'smem constant byte address 0x4 - core index']
  #allocation1 [shape = 'u32[144,128]{1,0:T(1,128)}', space=vmem, size = 0x12000, scoped, tag = 'internal scratch']
  #allocation2 [shape = 'f32[16,32]{1,0:T(8,128)}', space=vmem, size = 0x2000, scoped, tag = 'scratch operand']
  %s0 = inlined_call_operand.vmem [shape: f32[16,32], index: 0, kind: input, shape index: {}]
  %s1 = inlined_call_operand.vmem [shape: f32[16,32], index: 1, kind: input, shape index: {}]
  %s2 = inlined_call_operand.vmem [shape: f32[4,8,8], index: 2, kind: input, shape index: {}]
  %s3 = inlined_call_operand.vmem [shape: f32[2,4,32,8], index: 3, kind: input, shape index: {}]
  %s4 = inlined_call_operand.vmem [shape: f32[2,4,32,8], index: 4, kind: input, shape index: {}]
  %s5 = inlined_call_operand.vmem [shape: f32[2,4,32,8], index: 5, kind: input, shape index: {}]
  %s6 = inlined_call_operand.vmem [shape: f32[2,4,32,8], index: 6, kind: input, shape index: {}]
  %s7 = inlined_call_operand.vmem [shape: f32[2,4,32,8], index: 7, kind: input, shape index: {}]
  %s8 = inlined_call_operand.vmem [shape: f32[2,4,8,32], index: 8, kind: input, shape index: {}]
  %s9 = inlined_call_operand.vmem [shape: f32[2,32,64], index: 9, kind: input, shape index: {}]
  %s10 = inlined_call_operand.vmem [shape: f32[2,1,64], index: 10, kind: input, shape index: {}]
  %s11 = inlined_call_operand.vmem [shape: f32[2,64,32], index: 11, kind: input, shape index: {}]
  %s12 = inlined_call_operand.vmem [shape: f32[2,1,32], index: 12, kind: input, shape index: {}]
  %s13 = inlined_call_operand.vmem [shape: f32[2,8,1], index: 13, kind: input, shape index: {}]
  %s14 = inlined_call_operand.vmem [shape: f32[2,8,1], index: 14, kind: input, shape index: {}]
  %s15 = inlined_call_operand.vmem [shape: f32[2,8,1], index: 15, kind: input, shape index: {}]
  %s16 = inlined_call_operand.vmem [shape: f32[2,8,1], index: 16, kind: input, shape index: {}]
  %s17 = inlined_call_operand.hbm [shape: f32[16,32], index: 17, kind: output, shape index: {}]
  %s18 = sld [smem:[#allocation0]]
  $region109: #{tpu_custom_call.1} parent=0
    _
  %s20 = ssub.s32 1, %s18
  %s21 = scalar_select 0, %s20, %s18
  $region1: #{tpu_custom_call.1} parent=0
    #allocation3 [shape = 'u8[8192]{0}', space=vmem, size = 0x2000, scoped, tag = 'output window, operand 0, single buffered']
    #allocation4 [shape = 's32[2]{0}', space=sflag, size = 0x8, scoped, tag = 'scoped memory for tpu_custom_call.1']
    %22 = vsyncpa [#allocation4], 0
    loop: start=0, step=1, limit=4
    $region2: #{tpu_custom_call.1} parent=1 // loop_pre_header
      _
    $region3: #{tpu_custom_call.1} parent=1 // loop_header
      %s24 = sphi 0, %s28
      %p25 = scmp.ge.s32.totalorder %s24, 4
      %s32 = sphi 0, %s32
      %s34 = sphi 0, %s32
      %s35 = sphi 0, %s34
      %s49 = sphi 0, %s35
      %s53 = sphi 0, %s53
      %s55 = sphi 0, %s53
      %s56 = sphi 0, %s55
      %s70 = sphi 0, %s56
      %s74 = sphi 0, %s74
      %s76 = sphi 0, %s74
      %s77 = sphi 0, %s76
      %s91 = sphi 0, %s77
      %s97 = sphi 0, %s99
      %s100 = sphi 0, %s97
      %s101 = sphi 0, %s100
      %s117 = sphi 0, %s101
      %s123 = sphi 0, %s125
      %s126 = sphi 0, %s123
      %s127 = sphi 0, %s126
      %s143 = sphi 0, %s127
      %s149 = sphi 0, %s151
      %s152 = sphi 0, %s149
      %s153 = sphi 0, %s152
      %s169 = sphi 0, %s153
      %s175 = sphi 0, %s177
      %s178 = sphi 0, %s175
      %s179 = sphi 0, %s178
      %s195 = sphi 0, %s179
      %s201 = sphi 0, %s203
      %s204 = sphi 0, %s201
      %s205 = sphi 0, %s204
      %s221 = sphi 0, %s205
      %s227 = sphi 0, %s229
      %s230 = sphi 0, %s227
      %s231 = sphi 0, %s230
      %s247 = sphi 0, %s231
      %s253 = sphi 0, %s255
      %s256 = sphi 0, %s253
      %s257 = sphi 0, %s256
      %s273 = sphi 0, %s257
      %s279 = sphi 0, %s281
      %s282 = sphi 0, %s279
      %s283 = sphi 0, %s282
      %s299 = sphi 0, %s283
      %s305 = sphi 0, %s307
      %s308 = sphi 0, %s305
      %s309 = sphi 0, %s308
      %s325 = sphi 0, %s309
      %s331 = sphi 0, %s333
      %s334 = sphi 0, %s331
      %s335 = sphi 0, %s334
      %s351 = sphi 0, %s335
      %s357 = sphi 0, %s359
      %s360 = sphi 0, %s357
      %s361 = sphi 0, %s360
      %s377 = sphi 0, %s361
      %s383 = sphi 0, %s385
      %s386 = sphi 0, %s383
      %s387 = sphi 0, %s386
      %s403 = sphi 0, %s387
      %s409 = sphi 0, %s411
      %s412 = sphi 0, %s409
      %s413 = sphi 0, %s412
      %s429 = sphi 0, %s413
      %s435 = sphi 0, %s437
      %s438 = sphi 0, %s435
      %s439 = sphi 0, %s438
      %s455 = sphi 0, %s439
      %s459 = sphi 0, %s459
      %s461 = sphi 0, %s459
      %s462 = sphi 0, %s461
      %s476 = sphi 0, %s462
    $region4: #{tpu_custom_call.1} parent=1 // loop_header_branch
      %27 = sbr.rel (%p25) target = $region8
    $region5: #{tpu_custom_call.1} parent=1 // loop_body
      %s29 = ssub.s32 %s24, 1
      %s30 = ssub.s32 %s24, 2
      %s31 = sadd.s32 %s24, 1
      %s33 = sadd.s32 %s32, 1
      %p36 = scmp.eq.s32.totalorder %s24, 1
      %p37 = scmp.ne.s32.totalorder %s32, %s34
      %p38 = scmp.eq.s32.totalorder %s24, 0
      %p39 = por %p37, %p38
      %p40 = scmp.ne.s32.totalorder %s32, %s34
      %p41 = scmp.eq.s32.totalorder %s29, 1
      %p42 = por %p40, %p41
      %p43 = scmp.ne.s32.totalorder %s34, %s35
      %p44 = scmp.eq.s32.totalorder %s29, 0
      %p45 = por %p43, %p44
      %p46 = scmp.ne.s32.totalorder %s34, %s35
      %p47 = scmp.eq.s32.totalorder %s30, 1
      %p48 = por %p46, %p47
      %p50 = scmp.ne.s32.totalorder %s35, %s49
      %p51 = scmp.eq.s32.totalorder %s30, 0
      %p52 = por %p50, %p51
      %s54 = sadd.s32 %s53, 1
      %p57 = scmp.eq.s32.totalorder %s24, 1
      %p58 = scmp.ne.s32.totalorder %s53, %s55
      %p59 = scmp.eq.s32.totalorder %s24, 0
      %p60 = por %p58, %p59
      %p61 = scmp.ne.s32.totalorder %s53, %s55
      %p62 = scmp.eq.s32.totalorder %s29, 1
      %p63 = por %p61, %p62
      %p64 = scmp.ne.s32.totalorder %s55, %s56
      %p65 = scmp.eq.s32.totalorder %s29, 0
      %p66 = por %p64, %p65
      %p67 = scmp.ne.s32.totalorder %s55, %s56
      %p68 = scmp.eq.s32.totalorder %s30, 1
      %p69 = por %p67, %p68
      %p71 = scmp.ne.s32.totalorder %s56, %s70
      %p72 = scmp.eq.s32.totalorder %s30, 0
      %p73 = por %p71, %p72
      %s75 = sadd.s32 %s74, 1
      %p78 = scmp.eq.s32.totalorder %s24, 1
      %p79 = scmp.ne.s32.totalorder %s74, %s76
      %p80 = scmp.eq.s32.totalorder %s24, 0
      %p81 = por %p79, %p80
      %p82 = scmp.ne.s32.totalorder %s74, %s76
      %p83 = scmp.eq.s32.totalorder %s29, 1
      %p84 = por %p82, %p83
      %p85 = scmp.ne.s32.totalorder %s76, %s77
      %p86 = scmp.eq.s32.totalorder %s29, 0
      %p87 = por %p85, %p86
      %p88 = scmp.ne.s32.totalorder %s76, %s77
      %p89 = scmp.eq.s32.totalorder %s30, 1
      %p90 = por %p88, %p89
      %p92 = scmp.ne.s32.totalorder %s77, %s91
      %p93 = scmp.eq.s32.totalorder %s30, 0
      %p94 = por %p92, %p93
      %s95 = ssub.s32 %s24, %s31
      %p96 = scmp.eq.s32.totalorder %s95, 0
      %s98 = sadd.s32 %s97, 1
      %s99 = scalar_select %p96, %s97, %s98
      %p102 = pneg %p96
      %p103 = scmp.eq.s32.totalorder %s24, 1
      %p104 = por %p102, %p103
      %p105 = scmp.ne.s32.totalorder %s97, %s100
      %p106 = scmp.eq.s32.totalorder %s24, 0
      %p107 = por %p105, %p106
      %p108 = scmp.ne.s32.totalorder %s97, %s100
      %p109 = scmp.eq.s32.totalorder %s29, 1
      %p110 = por %p108, %p109
      %p111 = scmp.ne.s32.totalorder %s100, %s101
      %p112 = scmp.eq.s32.totalorder %s29, 0
      %p113 = por %p111, %p112
      %p114 = scmp.ne.s32.totalorder %s100, %s101
      %p115 = scmp.eq.s32.totalorder %s30, 1
      %p116 = por %p114, %p115
      %p118 = scmp.ne.s32.totalorder %s101, %s117
      %p119 = scmp.eq.s32.totalorder %s30, 0
      %p120 = por %p118, %p119
      %s121 = ssub.s32 %s24, %s31
      %p122 = scmp.eq.s32.totalorder %s121, 0
      %s124 = sadd.s32 %s123, 1
      %s125 = scalar_select %p122, %s123, %s124
      %p128 = pneg %p122
      %p129 = scmp.eq.s32.totalorder %s24, 1
      %p130 = por %p128, %p129
      %p131 = scmp.ne.s32.totalorder %s123, %s126
      %p132 = scmp.eq.s32.totalorder %s24, 0
      %p133 = por %p131, %p132
      %p134 = scmp.ne.s32.totalorder %s123, %s126
      %p135 = scmp.eq.s32.totalorder %s29, 1
      %p136 = por %p134, %p135
      %p137 = scmp.ne.s32.totalorder %s126, %s127
      %p138 = scmp.eq.s32.totalorder %s29, 0
      %p139 = por %p137, %p138
      %p140 = scmp.ne.s32.totalorder %s126, %s127
      %p141 = scmp.eq.s32.totalorder %s30, 1
      %p142 = por %p140, %p141
      %p144 = scmp.ne.s32.totalorder %s127, %s143
      %p145 = scmp.eq.s32.totalorder %s30, 0
      %p146 = por %p144, %p145
      %s147 = ssub.s32 %s24, %s31
      %p148 = scmp.eq.s32.totalorder %s147, 0
      %s150 = sadd.s32 %s149, 1
      %s151 = scalar_select %p148, %s149, %s150
      %p154 = pneg %p148
      %p155 = scmp.eq.s32.totalorder %s24, 1
      %p156 = por %p154, %p155
      %p157 = scmp.ne.s32.totalorder %s149, %s152
      %p158 = scmp.eq.s32.totalorder %s24, 0
      %p159 = por %p157, %p158
      %p160 = scmp.ne.s32.totalorder %s149, %s152
      %p161 = scmp.eq.s32.totalorder %s29, 1
      %p162 = por %p160, %p161
      %p163 = scmp.ne.s32.totalorder %s152, %s153
      %p164 = scmp.eq.s32.totalorder %s29, 0
      %p165 = por %p163, %p164
      %p166 = scmp.ne.s32.totalorder %s152, %s153
      %p167 = scmp.eq.s32.totalorder %s30, 1
      %p168 = por %p166, %p167
      %p170 = scmp.ne.s32.totalorder %s153, %s169
      %p171 = scmp.eq.s32.totalorder %s30, 0
      %p172 = por %p170, %p171
      %s173 = ssub.s32 %s24, %s31
      %p174 = scmp.eq.s32.totalorder %s173, 0
      %s176 = sadd.s32 %s175, 1
      %s177 = scalar_select %p174, %s175, %s176
      %p180 = pneg %p174
      %p181 = scmp.eq.s32.totalorder %s24, 1
      %p182 = por %p180, %p181
      %p183 = scmp.ne.s32.totalorder %s175, %s178
      %p184 = scmp.eq.s32.totalorder %s24, 0
      %p185 = por %p183, %p184
      %p186 = scmp.ne.s32.totalorder %s175, %s178
      %p187 = scmp.eq.s32.totalorder %s29, 1
      %p188 = por %p186, %p187
      %p189 = scmp.ne.s32.totalorder %s178, %s179
      %p190 = scmp.eq.s32.totalorder %s29, 0
      %p191 = por %p189, %p190
      %p192 = scmp.ne.s32.totalorder %s178, %s179
      %p193 = scmp.eq.s32.totalorder %s30, 1
      %p194 = por %p192, %p193
      %p196 = scmp.ne.s32.totalorder %s179, %s195
      %p197 = scmp.eq.s32.totalorder %s30, 0
      %p198 = por %p196, %p197
      %s199 = ssub.s32 %s24, %s31
      %p200 = scmp.eq.s32.totalorder %s199, 0
      %s202 = sadd.s32 %s201, 1
      %s203 = scalar_select %p200, %s201, %s202
      %p206 = pneg %p200
      %p207 = scmp.eq.s32.totalorder %s24, 1
      %p208 = por %p206, %p207
      %p209 = scmp.ne.s32.totalorder %s201, %s204
      %p210 = scmp.eq.s32.totalorder %s24, 0
      %p211 = por %p209, %p210
      %p212 = scmp.ne.s32.totalorder %s201, %s204
      %p213 = scmp.eq.s32.totalorder %s29, 1
      %p214 = por %p212, %p213
      %p215 = scmp.ne.s32.totalorder %s204, %s205
      %p216 = scmp.eq.s32.totalorder %s29, 0
      %p217 = por %p215, %p216
      %p218 = scmp.ne.s32.totalorder %s204, %s205
      %p219 = scmp.eq.s32.totalorder %s30, 1
      %p220 = por %p218, %p219
      %p222 = scmp.ne.s32.totalorder %s205, %s221
      %p223 = scmp.eq.s32.totalorder %s30, 0
      %p224 = por %p222, %p223
      %s225 = ssub.s32 %s24, %s31
      %p226 = scmp.eq.s32.totalorder %s225, 0
      %s228 = sadd.s32 %s227, 1
      %s229 = scalar_select %p226, %s227, %s228
      %p232 = pneg %p226
      %p233 = scmp.eq.s32.totalorder %s24, 1
      %p234 = por %p232, %p233
      %p235 = scmp.ne.s32.totalorder %s227, %s230
      %p236 = scmp.eq.s32.totalorder %s24, 0
      %p237 = por %p235, %p236
      %p238 = scmp.ne.s32.totalorder %s227, %s230
      %p239 = scmp.eq.s32.totalorder %s29, 1
      %p240 = por %p238, %p239
      %p241 = scmp.ne.s32.totalorder %s230, %s231
      %p242 = scmp.eq.s32.totalorder %s29, 0
      %p243 = por %p241, %p242
      %p244 = scmp.ne.s32.totalorder %s230, %s231
      %p245 = scmp.eq.s32.totalorder %s30, 1
      %p246 = por %p244, %p245
      %p248 = scmp.ne.s32.totalorder %s231, %s247
      %p249 = scmp.eq.s32.totalorder %s30, 0
      %p250 = por %p248, %p249
      %s251 = ssub.s32 %s24, %s31
      %p252 = scmp.eq.s32.totalorder %s251, 0
      %s254 = sadd.s32 %s253, 1
      %s255 = scalar_select %p252, %s253, %s254
      %p258 = pneg %p252
      %p259 = scmp.eq.s32.totalorder %s24, 1
      %p260 = por %p258, %p259
      %p261 = scmp.ne.s32.totalorder %s253, %s256
      %p262 = scmp.eq.s32.totalorder %s24, 0
      %p263 = por %p261, %p262
      %p264 = scmp.ne.s32.totalorder %s253, %s256
      %p265 = scmp.eq.s32.totalorder %s29, 1
      %p266 = por %p264, %p265
      %p267 = scmp.ne.s32.totalorder %s256, %s257
      %p268 = scmp.eq.s32.totalorder %s29, 0
      %p269 = por %p267, %p268
      %p270 = scmp.ne.s32.totalorder %s256, %s257
      %p271 = scmp.eq.s32.totalorder %s30, 1
      %p272 = por %p270, %p271
      %p274 = scmp.ne.s32.totalorder %s257, %s273
      %p275 = scmp.eq.s32.totalorder %s30, 0
      %p276 = por %p274, %p275
      %s277 = ssub.s32 %s24, %s31
      %p278 = scmp.eq.s32.totalorder %s277, 0
      %s280 = sadd.s32 %s279, 1
      %s281 = scalar_select %p278, %s279, %s280
      %p284 = pneg %p278
      %p285 = scmp.eq.s32.totalorder %s24, 1
      %p286 = por %p284, %p285
      %p287 = scmp.ne.s32.totalorder %s279, %s282
      %p288 = scmp.eq.s32.totalorder %s24, 0
      %p289 = por %p287, %p288
      %p290 = scmp.ne.s32.totalorder %s279, %s282
      %p291 = scmp.eq.s32.totalorder %s29, 1
      %p292 = por %p290, %p291
      %p293 = scmp.ne.s32.totalorder %s282, %s283
      %p294 = scmp.eq.s32.totalorder %s29, 0
      %p295 = por %p293, %p294
      %p296 = scmp.ne.s32.totalorder %s282, %s283
      %p297 = scmp.eq.s32.totalorder %s30, 1
      %p298 = por %p296, %p297
      %p300 = scmp.ne.s32.totalorder %s283, %s299
      %p301 = scmp.eq.s32.totalorder %s30, 0
      %p302 = por %p300, %p301
      %s303 = ssub.s32 %s24, %s31
      %p304 = scmp.eq.s32.totalorder %s303, 0
      %s306 = sadd.s32 %s305, 1
      %s307 = scalar_select %p304, %s305, %s306
      %p310 = pneg %p304
      %p311 = scmp.eq.s32.totalorder %s24, 1
      %p312 = por %p310, %p311
      %p313 = scmp.ne.s32.totalorder %s305, %s308
      %p314 = scmp.eq.s32.totalorder %s24, 0
      %p315 = por %p313, %p314
      %p316 = scmp.ne.s32.totalorder %s305, %s308
      %p317 = scmp.eq.s32.totalorder %s29, 1
      %p318 = por %p316, %p317
      %p319 = scmp.ne.s32.totalorder %s308, %s309
      %p320 = scmp.eq.s32.totalorder %s29, 0
      %p321 = por %p319, %p320
      %p322 = scmp.ne.s32.totalorder %s308, %s309
      %p323 = scmp.eq.s32.totalorder %s30, 1
      %p324 = por %p322, %p323
      %p326 = scmp.ne.s32.totalorder %s309, %s325
      %p327 = scmp.eq.s32.totalorder %s30, 0
      %p328 = por %p326, %p327
      %s329 = ssub.s32 %s24, %s31
      %p330 = scmp.eq.s32.totalorder %s329, 0
      %s332 = sadd.s32 %s331, 1
      %s333 = scalar_select %p330, %s331, %s332
      %p336 = pneg %p330
      %p337 = scmp.eq.s32.totalorder %s24, 1
      %p338 = por %p336, %p337
      %p339 = scmp.ne.s32.totalorder %s331, %s334
      %p340 = scmp.eq.s32.totalorder %s24, 0
      %p341 = por %p339, %p340
      %p342 = scmp.ne.s32.totalorder %s331, %s334
      %p343 = scmp.eq.s32.totalorder %s29, 1
      %p344 = por %p342, %p343
      %p345 = scmp.ne.s32.totalorder %s334, %s335
      %p346 = scmp.eq.s32.totalorder %s29, 0
      %p347 = por %p345, %p346
      %p348 = scmp.ne.s32.totalorder %s334, %s335
      %p349 = scmp.eq.s32.totalorder %s30, 1
      %p350 = por %p348, %p349
      %p352 = scmp.ne.s32.totalorder %s335, %s351
      %p353 = scmp.eq.s32.totalorder %s30, 0
      %p354 = por %p352, %p353
      %s355 = ssub.s32 %s24, %s31
      %p356 = scmp.eq.s32.totalorder %s355, 0
      %s358 = sadd.s32 %s357, 1
      %s359 = scalar_select %p356, %s357, %s358
      %p362 = pneg %p356
      %p363 = scmp.eq.s32.totalorder %s24, 1
      %p364 = por %p362, %p363
      %p365 = scmp.ne.s32.totalorder %s357, %s360
      %p366 = scmp.eq.s32.totalorder %s24, 0
      %p367 = por %p365, %p366
      %p368 = scmp.ne.s32.totalorder %s357, %s360
      %p369 = scmp.eq.s32.totalorder %s29, 1
      %p370 = por %p368, %p369
      %p371 = scmp.ne.s32.totalorder %s360, %s361
      %p372 = scmp.eq.s32.totalorder %s29, 0
      %p373 = por %p371, %p372
      %p374 = scmp.ne.s32.totalorder %s360, %s361
      %p375 = scmp.eq.s32.totalorder %s30, 1
      %p376 = por %p374, %p375
      %p378 = scmp.ne.s32.totalorder %s361, %s377
      %p379 = scmp.eq.s32.totalorder %s30, 0
      %p380 = por %p378, %p379
      %s381 = ssub.s32 %s24, %s31
      %p382 = scmp.eq.s32.totalorder %s381, 0
      %s384 = sadd.s32 %s383, 1
      %s385 = scalar_select %p382, %s383, %s384
      %p388 = pneg %p382
      %p389 = scmp.eq.s32.totalorder %s24, 1
      %p390 = por %p388, %p389
      %p391 = scmp.ne.s32.totalorder %s383, %s386
      %p392 = scmp.eq.s32.totalorder %s24, 0
      %p393 = por %p391, %p392
      %p394 = scmp.ne.s32.totalorder %s383, %s386
      %p395 = scmp.eq.s32.totalorder %s29, 1
      %p396 = por %p394, %p395
      %p397 = scmp.ne.s32.totalorder %s386, %s387
      %p398 = scmp.eq.s32.totalorder %s29, 0
      %p399 = por %p397, %p398
      %p400 = scmp.ne.s32.totalorder %s386, %s387
      %p401 = scmp.eq.s32.totalorder %s30, 1
      %p402 = por %p400, %p401
      %p404 = scmp.ne.s32.totalorder %s387, %s403
      %p405 = scmp.eq.s32.totalorder %s30, 0
      %p406 = por %p404, %p405
      %s407 = ssub.s32 %s24, %s31
      %p408 = scmp.eq.s32.totalorder %s407, 0
      %s410 = sadd.s32 %s409, 1
      %s411 = scalar_select %p408, %s409, %s410
      %p414 = pneg %p408
      %p415 = scmp.eq.s32.totalorder %s24, 1
      %p416 = por %p414, %p415
      %p417 = scmp.ne.s32.totalorder %s409, %s412
      %p418 = scmp.eq.s32.totalorder %s24, 0
      %p419 = por %p417, %p418
      %p420 = scmp.ne.s32.totalorder %s409, %s412
      %p421 = scmp.eq.s32.totalorder %s29, 1
      %p422 = por %p420, %p421
      %p423 = scmp.ne.s32.totalorder %s412, %s413
      %p424 = scmp.eq.s32.totalorder %s29, 0
      %p425 = por %p423, %p424
      %p426 = scmp.ne.s32.totalorder %s412, %s413
      %p427 = scmp.eq.s32.totalorder %s30, 1
      %p428 = por %p426, %p427
      %p430 = scmp.ne.s32.totalorder %s413, %s429
      %p431 = scmp.eq.s32.totalorder %s30, 0
      %p432 = por %p430, %p431
      %s433 = ssub.s32 %s24, %s31
      %p434 = scmp.eq.s32.totalorder %s433, 0
      %s436 = sadd.s32 %s435, 1
      %s437 = scalar_select %p434, %s435, %s436
      %p440 = pneg %p434
      %p441 = scmp.eq.s32.totalorder %s24, 1
      %p442 = por %p440, %p441
      %p443 = scmp.ne.s32.totalorder %s435, %s438
      %p444 = scmp.eq.s32.totalorder %s24, 0
      %p445 = por %p443, %p444
      %p446 = scmp.ne.s32.totalorder %s435, %s438
      %p447 = scmp.eq.s32.totalorder %s29, 1
      %p448 = por %p446, %p447
      %p449 = scmp.ne.s32.totalorder %s438, %s439
      %p450 = scmp.eq.s32.totalorder %s29, 0
      %p451 = por %p449, %p450
      %p452 = scmp.ne.s32.totalorder %s438, %s439
      %p453 = scmp.eq.s32.totalorder %s30, 1
      %p454 = por %p452, %p453
      %p456 = scmp.ne.s32.totalorder %s439, %s455
      %p457 = scmp.eq.s32.totalorder %s30, 0
      %p458 = por %p456, %p457
      %s460 = sadd.s32 %s459, 1
      %p463 = scmp.eq.s32.totalorder %s24, 1
      %p464 = scmp.ne.s32.totalorder %s459, %s461
      %p465 = scmp.eq.s32.totalorder %s24, 0
      %p466 = por %p464, %p465
      %p467 = scmp.ne.s32.totalorder %s459, %s461
      %p468 = scmp.eq.s32.totalorder %s29, 1
      %p469 = por %p467, %p468
      %p470 = scmp.ne.s32.totalorder %s461, %s462
      %p471 = scmp.eq.s32.totalorder %s29, 0
      %p472 = por %p470, %p471
      %p473 = scmp.ne.s32.totalorder %s461, %s462
      %p474 = scmp.eq.s32.totalorder %s30, 1
      %p475 = por %p473, %p474
      %p477 = scmp.ne.s32.totalorder %s462, %s476
      %p478 = scmp.eq.s32.totalorder %s30, 0
      %p479 = por %p477, %p478
      %p480 = scmp.le.s32.totalorder 1, %s24
      %p481 = scmp.lt.s32.totalorder %s24, 3
      %p482 = pnand %p480, %p481
      %p483 = pneg %p482
      // Predicated region
      $region9: #{tpu_custom_call.1} parent=5 // pred_check
        _
      $region10: #{tpu_custom_call.1} parent=5 // pred_check_branch
        %485 = sbr.rel (%p482) target = $region12
      $region11: #{tpu_custom_call.1} parent=5 // pred_region
        %s486 = ssub.s32 %s24, 1
        // Predicated region
        $region13: #{tpu_custom_call.1} parent=11 // pred_check
          %p487 = pneg %p45
        $region14: #{tpu_custom_call.1} parent=11 // pred_check_branch
          %489 = sbr.rel (%p487) target = $region16
        $region15: #{tpu_custom_call.1} parent=11 // pred_region
          _
        $region16: #{tpu_custom_call.1} parent=11 // pred_fallthru
          _
        // Predicated region
        $region17: #{tpu_custom_call.1} parent=11 // pred_check
          %p490 = pneg %p66
        $region18: #{tpu_custom_call.1} parent=11 // pred_check_branch
          %492 = sbr.rel (%p490) target = $region20
        $region19: #{tpu_custom_call.1} parent=11 // pred_region
          _
        $region20: #{tpu_custom_call.1} parent=11 // pred_fallthru
          _
        // Predicated region
        $region21: #{tpu_custom_call.1} parent=11 // pred_check
          %p493 = pneg %p87
        $region22: #{tpu_custom_call.1} parent=11 // pred_check_branch
          %495 = sbr.rel (%p493) target = $region24
        $region23: #{tpu_custom_call.1} parent=11 // pred_region
          _
        $region24: #{tpu_custom_call.1} parent=11 // pred_fallthru
          _
      $region12: #{tpu_custom_call.1} parent=5 // pred_fallthru
        _
      %p496 = scmp.lt.s32.totalorder %s24, 2
      // Predicated region
      $region25: #{tpu_custom_call.1} parent=5 // pred_check
        %p497 = pneg %p496
      $region26: #{tpu_custom_call.1} parent=5 // pred_check_branch
        %499 = sbr.rel (%p497) target = $region28
      $region27: #{tpu_custom_call.1} parent=5 // pred_region
        // Predicated region
        $region29: #{tpu_custom_call.1} parent=27 // pred_check
          %p500 = pneg %p107
        $region30: #{tpu_custom_call.1} parent=27 // pred_check_branch
          %502 = sbr.rel (%p500) target = $region32
        $region31: #{tpu_custom_call.1} parent=27 // pred_region
          %p503 = scmp.lt.s32.totalorder %s24, 1
          %s504 = scalar_select %p503, %s24, 1
          %s505 = smul.addr %s504, 16
          %s506 = smul.addr %s505, 8
          %s507 = scalar_lea.vmem %s3, %s506
        $region32: #{tpu_custom_call.1} parent=27 // pred_fallthru
          _
        // Predicated region
        $region33: #{tpu_custom_call.1} parent=27 // pred_check
          %p508 = pneg %p133
        $region34: #{tpu_custom_call.1} parent=27 // pred_check_branch
          %510 = sbr.rel (%p508) target = $region36
        $region35: #{tpu_custom_call.1} parent=27 // pred_region
          %p511 = scmp.lt.s32.totalorder %s24, 1
          %s512 = scalar_select %p511, %s24, 1
          %s513 = smul.addr %s512, 16
          %s514 = smul.addr %s513, 8
          %s515 = scalar_lea.vmem %s4, %s514
        $region36: #{tpu_custom_call.1} parent=27 // pred_fallthru
          _
        // Predicated region
        $region37: #{tpu_custom_call.1} parent=27 // pred_check
          %p516 = pneg %p159
        $region38: #{tpu_custom_call.1} parent=27 // pred_check_branch
          %518 = sbr.rel (%p516) target = $region40
        $region39: #{tpu_custom_call.1} parent=27 // pred_region
          %p519 = scmp.lt.s32.totalorder %s24, 1
          %s520 = scalar_select %p519, %s24, 1
          %s521 = smul.addr %s520, 16
          %s522 = smul.addr %s521, 8
          %s523 = scalar_lea.vmem %s5, %s522
        $region40: #{tpu_custom_call.1} parent=27 // pred_fallthru
          _
        // Predicated region
        $region41: #{tpu_custom_call.1} parent=27 // pred_check
          %p524 = pneg %p185
        $region42: #{tpu_custom_call.1} parent=27 // pred_check_branch
          %526 = sbr.rel (%p524) target = $region44
        $region43: #{tpu_custom_call.1} parent=27 // pred_region
          %p527 = scmp.lt.s32.totalorder %s24, 1
          %s528 = scalar_select %p527, %s24, 1
          %s529 = smul.addr %s528, 16
          %s530 = smul.addr %s529, 8
          %s531 = scalar_lea.vmem %s6, %s530
        $region44: #{tpu_custom_call.1} parent=27 // pred_fallthru
          _
        // Predicated region
        $region45: #{tpu_custom_call.1} parent=27 // pred_check
          %p532 = pneg %p211
        $region46: #{tpu_custom_call.1} parent=27 // pred_check_branch
          %534 = sbr.rel (%p532) target = $region48
        $region47: #{tpu_custom_call.1} parent=27 // pred_region
          %p535 = scmp.lt.s32.totalorder %s24, 1
          %s536 = scalar_select %p535, %s24, 1
          %s537 = smul.addr %s536, 16
          %s538 = smul.addr %s537, 8
          %s539 = scalar_lea.vmem %s7, %s538
        $region48: #{tpu_custom_call.1} parent=27 // pred_fallthru
          _
        // Predicated region
        $region49: #{tpu_custom_call.1} parent=27 // pred_check
          %p540 = pneg %p237
        $region50: #{tpu_custom_call.1} parent=27 // pred_check_branch
          %542 = sbr.rel (%p540) target = $region52
        $region51: #{tpu_custom_call.1} parent=27 // pred_region
          %p543 = scmp.lt.s32.totalorder %s24, 1
          %s544 = scalar_select %p543, %s24, 1
          %s545 = smul.addr %s544, 4
          %s546 = smul.addr %s545, 8
          %s547 = scalar_lea.vmem %s8, %s546
        $region52: #{tpu_custom_call.1} parent=27 // pred_fallthru
          _
        // Predicated region
        $region53: #{tpu_custom_call.1} parent=27 // pred_check
          %p548 = pneg %p263
        $region54: #{tpu_custom_call.1} parent=27 // pred_check_branch
          %550 = sbr.rel (%p548) target = $region56
        $region55: #{tpu_custom_call.1} parent=27 // pred_region
          %p551 = scmp.lt.s32.totalorder %s24, 1
          %s552 = scalar_select %p551, %s24, 1
          %s553 = smul.addr %s552, 4
          %s554 = smul.addr %s553, 8
          %s555 = scalar_lea.vmem %s9, %s554
        $region56: #{tpu_custom_call.1} parent=27 // pred_fallthru
          _
        // Predicated region
        $region57: #{tpu_custom_call.1} parent=27 // pred_check
          %p556 = pneg %p289
        $region58: #{tpu_custom_call.1} parent=27 // pred_check_branch
          %558 = sbr.rel (%p556) target = $region60
        $region59: #{tpu_custom_call.1} parent=27 // pred_region
          %p559 = scmp.lt.s32.totalorder %s24, 1
          %s560 = scalar_select %p559, %s24, 1
          %s561 = scalar_lea.vmem %s10, %s560
        $region60: #{tpu_custom_call.1} parent=27 // pred_fallthru
          _
        // Predicated region
        $region61: #{tpu_custom_call.1} parent=27 // pred_check
          %p562 = pneg %p315
        $region62: #{tpu_custom_call.1} parent=27 // pred_check_branch
          %564 = sbr.rel (%p562) target = $region64
        $region63: #{tpu_custom_call.1} parent=27 // pred_region
          %p565 = scmp.lt.s32.totalorder %s24, 1
          %s566 = scalar_select %p565, %s24, 1
          %s567 = smul.addr %s566, 8
          %s568 = smul.addr %s567, 8
          %s569 = scalar_lea.vmem %s11, %s568
        $region64: #{tpu_custom_call.1} parent=27 // pred_fallthru
          _
        // Predicated region
        $region65: #{tpu_custom_call.1} parent=27 // pred_check
          %p570 = pneg %p341
        $region66: #{tpu_custom_call.1} parent=27 // pred_check_branch
          %572 = sbr.rel (%p570) target = $region68
        $region67: #{tpu_custom_call.1} parent=27 // pred_region
          %p573 = scmp.lt.s32.totalorder %s24, 1
          %s574 = scalar_select %p573, %s24, 1
          %s575 = scalar_lea.vmem %s12, %s574
        $region68: #{tpu_custom_call.1} parent=27 // pred_fallthru
          _
        // Predicated region
        $region69: #{tpu_custom_call.1} parent=27 // pred_check
          %p576 = pneg %p367
        $region70: #{tpu_custom_call.1} parent=27 // pred_check_branch
          %578 = sbr.rel (%p576) target = $region72
        $region71: #{tpu_custom_call.1} parent=27 // pred_region
          %p579 = scmp.lt.s32.totalorder %s24, 1
          %s580 = scalar_select %p579, %s24, 1
          %s581 = smul.addr %s580, 8
          %s582 = scalar_lea.vmem %s13, %s581
        $region72: #{tpu_custom_call.1} parent=27 // pred_fallthru
          _
        // Predicated region
        $region73: #{tpu_custom_call.1} parent=27 // pred_check
          %p583 = pneg %p393
        $region74: #{tpu_custom_call.1} parent=27 // pred_check_branch
          %585 = sbr.rel (%p583) target = $region76
        $region75: #{tpu_custom_call.1} parent=27 // pred_region
          %p586 = scmp.lt.s32.totalorder %s24, 1
          %s587 = scalar_select %p586, %s24, 1
          %s588 = smul.addr %s587, 8
          %s589 = scalar_lea.vmem %s14, %s588
        $region76: #{tpu_custom_call.1} parent=27 // pred_fallthru
          _
        // Predicated region
        $region77: #{tpu_custom_call.1} parent=27 // pred_check
          %p590 = pneg %p419
        $region78: #{tpu_custom_call.1} parent=27 // pred_check_branch
          %592 = sbr.rel (%p590) target = $region80
        $region79: #{tpu_custom_call.1} parent=27 // pred_region
          %p593 = scmp.lt.s32.totalorder %s24, 1
          %s594 = scalar_select %p593, %s24, 1
          %s595 = smul.addr %s594, 8
          %s596 = scalar_lea.vmem %s15, %s595
        $region80: #{tpu_custom_call.1} parent=27 // pred_fallthru
          _
        // Predicated region
        $region81: #{tpu_custom_call.1} parent=27 // pred_check
          %p597 = pneg %p445
        $region82: #{tpu_custom_call.1} parent=27 // pred_check_branch
          %599 = sbr.rel (%p597) target = $region84
        $region83: #{tpu_custom_call.1} parent=27 // pred_region
          %p600 = scmp.lt.s32.totalorder %s24, 1
          %s601 = scalar_select %p600, %s24, 1
          %s602 = smul.addr %s601, 8
          %s603 = scalar_lea.vmem %s16, %s602
        $region84: #{tpu_custom_call.1} parent=27 // pred_fallthru
          _
      $region28: #{tpu_custom_call.1} parent=5 // pred_fallthru
        _
      %p604 = scmp.le.s32.totalorder 1, %s24
      %p605 = scmp.lt.s32.totalorder %s24, 3
      %p606 = pnand %p604, %p605
      %p607 = pneg %p606
      // Predicated region
      $region85: #{tpu_custom_call.1} parent=5 // pred_check
        _
      $region86: #{tpu_custom_call.1} parent=5 // pred_check_branch
        %609 = sbr.rel (%p606) target = $region88
      $region87: #{tpu_custom_call.1} parent=5 // pred_region
        %s610 = ssub.s32 %s24, 1
        %p611 = pneg %p45
        %p612 = pneg %p42
        %p613 = pneg %p66
        %p614 = pneg %p63
        %p615 = pneg %p87
        %p616 = pneg %p84
        %p617 = scmp.lt.s32.totalorder %s29, 1
        %s618 = scalar_select %p617, %s29, 1
        %s619 = smul.addr %s618, 16
        %s620 = smul.addr %s619, 8
        %s621 = scalar_lea.vmem %s3, %s620
        %p622 = pneg %p113
        %p623 = pneg %p110
        %p624 = scmp.lt.s32.totalorder %s29, 1
        %s625 = scalar_select %p624, %s29, 1
        %s626 = smul.addr %s625, 16
        %s627 = smul.addr %s626, 8
        %s628 = scalar_lea.vmem %s4, %s627
        %p629 = pneg %p139
        %p630 = pneg %p136
        %p631 = scmp.lt.s32.totalorder %s29, 1
        %s632 = scalar_select %p631, %s29, 1
        %s633 = smul.addr %s632, 16
        %s634 = smul.addr %s633, 8
        %s635 = scalar_lea.vmem %s5, %s634
        %p636 = pneg %p165
        %p637 = pneg %p162
        %p638 = scmp.lt.s32.totalorder %s29, 1
        %s639 = scalar_select %p638, %s29, 1
        %s640 = smul.addr %s639, 16
        %s641 = smul.addr %s640, 8
        %s642 = scalar_lea.vmem %s6, %s641
        %p643 = pneg %p191
        %p644 = pneg %p188
        %p645 = scmp.lt.s32.totalorder %s29, 1
        %s646 = scalar_select %p645, %s29, 1
        %s647 = smul.addr %s646, 16
        %s648 = smul.addr %s647, 8
        %s649 = scalar_lea.vmem %s7, %s648
        %p650 = pneg %p217
        %p651 = pneg %p214
        %p652 = scmp.lt.s32.totalorder %s29, 1
        %s653 = scalar_select %p652, %s29, 1
        %s654 = smul.addr %s653, 4
        %s655 = smul.addr %s654, 8
        %s656 = scalar_lea.vmem %s8, %s655
        %p657 = pneg %p243
        %p658 = pneg %p240
        %p659 = scmp.lt.s32.totalorder %s29, 1
        %s660 = scalar_select %p659, %s29, 1
        %s661 = smul.addr %s660, 4
        %s662 = smul.addr %s661, 8
        %s663 = scalar_lea.vmem %s9, %s662
        %p664 = pneg %p269
        %p665 = pneg %p266
        %p666 = scmp.lt.s32.totalorder %s29, 1
        %s667 = scalar_select %p666, %s29, 1
        %s668 = scalar_lea.vmem %s10, %s667
        %p669 = pneg %p295
        %p670 = pneg %p292
        %p671 = scmp.lt.s32.totalorder %s29, 1
        %s672 = scalar_select %p671, %s29, 1
        %s673 = smul.addr %s672, 8
        %s674 = smul.addr %s673, 8
        %s675 = scalar_lea.vmem %s11, %s674
        %p676 = pneg %p321
        %p677 = pneg %p318
        %p678 = scmp.lt.s32.totalorder %s29, 1
        %s679 = scalar_select %p678, %s29, 1
        %s680 = scalar_lea.vmem %s12, %s679
        %p681 = pneg %p347
        %p682 = pneg %p344
        %p683 = scmp.lt.s32.totalorder %s29, 1
        %s684 = scalar_select %p683, %s29, 1
        %s685 = smul.addr %s684, 8
        %s686 = scalar_lea.vmem %s13, %s685
        %p687 = pneg %p373
        %p688 = pneg %p370
        %p689 = scmp.lt.s32.totalorder %s29, 1
        %s690 = scalar_select %p689, %s29, 1
        %s691 = smul.addr %s690, 8
        %s692 = scalar_lea.vmem %s14, %s691
        %p693 = pneg %p399
        %p694 = pneg %p396
        %p695 = scmp.lt.s32.totalorder %s29, 1
        %s696 = scalar_select %p695, %s29, 1
        %s697 = smul.addr %s696, 8
        %s698 = scalar_lea.vmem %s15, %s697
        %p699 = pneg %p425
        %p700 = pneg %p422
        %p701 = scmp.lt.s32.totalorder %s29, 1
        %s702 = scalar_select %p701, %s29, 1
        %s703 = smul.addr %s702, 8
        %s704 = scalar_lea.vmem %s16, %s703
        %p705 = pneg %p451
        %p706 = pneg %p448
        %p707 = pneg %p472
        %p708 = pneg %p469
        %p709 = scmp.lt.s32.totalorder %s29, 1
        %s710 = scalar_select %p709, %s29, 1
        %s711 = smul.addr %s710, 16
        %s712 = smul.addr %s711, 8
        %s713 = scalar_lea.vmem %s3, %s712
        %p714 = scmp.lt.s32.totalorder %s29, 1
        %s715 = scalar_select %p714, %s29, 1
        %s716 = smul.addr %s715, 16
        %s717 = smul.addr %s716, 8
        %s718 = scalar_lea.vmem %s4, %s717
        %p719 = scmp.lt.s32.totalorder %s29, 1
        %s720 = scalar_select %p719, %s29, 1
        %s721 = smul.addr %s720, 16
        %s722 = smul.addr %s721, 8
        %s723 = scalar_lea.vmem %s5, %s722
        %p724 = scmp.lt.s32.totalorder %s29, 1
        %s725 = scalar_select %p724, %s29, 1
        %s726 = smul.addr %s725, 16
        %s727 = smul.addr %s726, 8
        %s728 = scalar_lea.vmem %s6, %s727
        %p729 = scmp.lt.s32.totalorder %s29, 1
        %s730 = scalar_select %p729, %s29, 1
        %s731 = smul.addr %s730, 16
        %s732 = smul.addr %s731, 8
        %s733 = scalar_lea.vmem %s7, %s732
        %p734 = scmp.lt.s32.totalorder %s29, 1
        %s735 = scalar_select %p734, %s29, 1
        %s736 = smul.addr %s735, 4
        %s737 = smul.addr %s736, 8
        %s738 = scalar_lea.vmem %s8, %s737
        %p739 = scmp.lt.s32.totalorder %s29, 1
        %s740 = scalar_select %p739, %s29, 1
        %s741 = smul.addr %s740, 4
        %s742 = smul.addr %s741, 8
        %s743 = scalar_lea.vmem %s9, %s742
        %p744 = scmp.lt.s32.totalorder %s29, 1
        %s745 = scalar_select %p744, %s29, 1
        %s746 = scalar_lea.vmem %s10, %s745
        %p747 = scmp.lt.s32.totalorder %s29, 1
        %s748 = scalar_select %p747, %s29, 1
        %s749 = smul.addr %s748, 8
        %s750 = smul.addr %s749, 8
        %s751 = scalar_lea.vmem %s11, %s750
        %p752 = scmp.lt.s32.totalorder %s29, 1
        %s753 = scalar_select %p752, %s29, 1
        %s754 = scalar_lea.vmem %s12, %s753
        %p755 = scmp.lt.s32.totalorder %s29, 1
        %s756 = scalar_select %p755, %s29, 1
        %s757 = smul.addr %s756, 8
        %s758 = scalar_lea.vmem %s13, %s757
        %p759 = scmp.lt.s32.totalorder %s29, 1
        %s760 = scalar_select %p759, %s29, 1
        %s761 = smul.addr %s760, 8
        %s762 = scalar_lea.vmem %s14, %s761
        %p763 = scmp.lt.s32.totalorder %s29, 1
        %s764 = scalar_select %p763, %s29, 1
        %s765 = smul.addr %s764, 8
        %s766 = scalar_lea.vmem %s15, %s765
        %p767 = scmp.lt.s32.totalorder %s29, 1
        %s768 = scalar_select %p767, %s29, 1
        %s769 = smul.addr %s768, 8
        %s770 = scalar_lea.vmem %s16, %s769
        %p771 = scmp.eq.s32.totalorder %s29, 0
        // Predicated region
        $region89: #{tpu_custom_call.1} parent=87 // pred_check
          %p772 = pneg %p771
        $region90: #{tpu_custom_call.1} parent=87 // pred_check_branch
          %774 = sbr.rel (%p772) target = $region92
        $region91: #{tpu_custom_call.1} parent=87 // pred_region
          %v775 = vld [vmem:[%s0] sm:$0xff]
          %v776 = vld [vmem:[%s0 + $0x8] sm:$0xff]
          %vm777 = vcmask 261120
          %778 = vst.msk [vmem:[#allocation2] sm:$0xff] %vm777, %v775
          %779 = vst.msk [vmem:[#allocation2 + $0x8] sm:$0xff] %vm777, %v776
        $region92: #{tpu_custom_call.1} parent=87 // pred_fallthru
          _
        %v780 = vld [vmem:[#allocation2] sm:$0xff]
        %v781 = vld [vmem:[#allocation2 + $0x8] sm:$0xff]
        %v782 = vld [vmem:[%s1] sm:$0xff]
        %v783 = vld [vmem:[%s1 + $0x8] sm:$0xff]
        %v784 = vld [vmem:[%s713] sm:$0xff]
        %v785 = vld [vmem:[%s713 + $0x8] sm:$0xff]
        %v786 = vld [vmem:[%s713 + $0x10] sm:$0xff]
        %v787 = vld [vmem:[%s713 + $0x18] sm:$0xff]
        %vm788 = vcmask 261120
        %v790 = vsel %vm788, %v780, 0
        %v793 = vsel %vm788, %v781, 0
        %795 = vmatprep.subr.mxu0 0.0
        %796 = vmatpush1.msra.mxu0 0.0
        %797 = vmatprep.subr.mxu0 0.0
        %798 = vmatpush1.msra.mxu0 0.0
        %799 = vmatprep.subr.mxu0 0.0
        %800 = vmatpush1.msra.mxu0 0.0
        %801 = vmatprep.subr.mxu0 0.0
        %802 = vmatpush1.msra.mxu0 0.0
        %803 = vmatprep.subr.mxu0 0.0
        %804 = vmatpush1.msra.mxu0 0.0
        %805 = vmatprep.subr.mxu0 0.0
        %806 = vmatpush1.msra.mxu0 0.0
        %807 = vmatprep.subr.mxu0 0.0
        %808 = vmatpush1.msra.mxu0 0.0
        %809 = vmatprep.subr.mxu0 0.0
        %810 = vmatpush1.msra.mxu0 0.0
        %811 = vmatprep.subr.mxu0 0.0
        %812 = vmatpush1.msra.mxu0 0.0
        %813 = vmatprep.subr.mxu0 0.0
        %814 = vmatpush1.msra.mxu0 0.0
        %815 = vmatprep.subr.mxu0 0.0
        %816 = vmatpush1.msra.mxu0 0.0
        %817 = vmatprep.subr.mxu0 0.0
        %818 = vmatpush1.msra.mxu0 0.0
        %819 = vmatprep.subr.mxu0 0.0
        %820 = vmatpush1.msra.mxu0 %v787
        %821 = vmatprep.subr.mxu0 0.0
        %822 = vmatpush1.msra.mxu0 %v786
        %823 = vmatprep.subr.mxu0 0.0
        %824 = vmatpush1.msra.mxu0 %v785
        %825 = vmatprep.subr.mxu0 0.0
        %826 = vmatpush1.msra.mxu0 %v784
        %827 = vmatprep.subr.mxu0 0.0
        %828 = vmatpush2.msra.mxu0 0.0
        %829 = vmatprep.subr.mxu0 0.0
        %830 = vmatpush2.msra.mxu0 0.0
        %831 = vmatprep.subr.mxu0 0.0
        %832 = vmatpush2.msra.mxu0 0.0
        %833 = vmatprep.subr.mxu0 0.0
        %834 = vmatpush2.msra.mxu0 0.0
        %835 = vmatprep.subr.mxu0 0.0
        %836 = vmatpush2.msra.mxu0 0.0
        %837 = vmatprep.subr.mxu0 0.0
        %838 = vmatpush2.msra.mxu0 0.0
        %839 = vmatprep.subr.mxu0 0.0
        %840 = vmatpush2.msra.mxu0 0.0
        %841 = vmatprep.subr.mxu0 0.0
        %842 = vmatpush2.msra.mxu0 0.0
        %843 = vmatprep.subr.mxu0 0.0
        %844 = vmatpush2.msra.mxu0 0.0
        %845 = vmatprep.subr.mxu0 0.0
        %846 = vmatpush2.msra.mxu0 0.0
        %847 = vmatprep.subr.mxu0 0.0
        %848 = vmatpush2.msra.mxu0 0.0
        %849 = vmatprep.subr.mxu0 0.0
        %850 = vmatpush2.msra.mxu0 0.0
        %851 = vmatprep.subr.mxu0 0.0
        %852 = vmatpush2.msra.mxu0 0.0
        %853 = vmatprep.subr.mxu0 0.0
        %854 = vmatpush2.msra.mxu0 0.0
        %855 = vmatprep.subr.mxu0 0.0
        %856 = vmatpush2.msra.mxu0 0.0
        %857 = vmatprep.subr.mxu0 0.0
        %858 = vmatpush2.msra.mxu0 0.0
        %859 = vmatprep.mubr.f32.mxu0 0.0
        %860 = vmatmul.mubr.f32.gmra.mxu0 %v790
        %v861 = vpop.f32.mrf.mxu0
        %v862 = vadd.f32 0.0, %v861
        %v863 = vpop.f32.mrf.mxu0
        %864 = vmatprep.mubr.f32.mxu0 0.0
        %865 = vmatmul.mubr.f32.gmra.mxu0 %v793
        %v866 = vpop.f32.mrf.mxu0
        %v867 = vadd.f32 0.0, %v866
        %v868 = vpop.f32.mrf.mxu0
        %869 = vdwg.mxu0
        %v870 = vld [vmem:[%s718] sm:$0xff]
        %v871 = vld [vmem:[%s718 + $0x8] sm:$0xff]
        %v872 = vld [vmem:[%s718 + $0x10] sm:$0xff]
        %v873 = vld [vmem:[%s718 + $0x18] sm:$0xff]
        %874 = vmatprep.subr.mxu0 0.0
        %875 = vmatpush1.msra.mxu0 0.0
        %876 = vmatprep.subr.mxu0 0.0
        %877 = vmatpush1.msra.mxu0 0.0
        %878 = vmatprep.subr.mxu0 0.0
        %879 = vmatpush1.msra.mxu0 0.0
        %880 = vmatprep.subr.mxu0 0.0
        %881 = vmatpush1.msra.mxu0 0.0
        %882 = vmatprep.subr.mxu0 0.0
        %883 = vmatpush1.msra.mxu0 0.0
        %884 = vmatprep.subr.mxu0 0.0
        %885 = vmatpush1.msra.mxu0 0.0
        %886 = vmatprep.subr.mxu0 0.0
        %887 = vmatpush1.msra.mxu0 0.0
        %888 = vmatprep.subr.mxu0 0.0
        %889 = vmatpush1.msra.mxu0 0.0
        %890 = vmatprep.subr.mxu0 0.0
        %891 = vmatpush1.msra.mxu0 0.0
        %892 = vmatprep.subr.mxu0 0.0
        %893 = vmatpush1.msra.mxu0 0.0
        %894 = vmatprep.subr.mxu0 0.0
        %895 = vmatpush1.msra.mxu0 0.0
        %896 = vmatprep.subr.mxu0 0.0
        %897 = vmatpush1.msra.mxu0 0.0
        %898 = vmatprep.subr.mxu0 0.0
        %899 = vmatpush1.msra.mxu0 %v873
        %900 = vmatprep.subr.mxu0 0.0
        %901 = vmatpush1.msra.mxu0 %v872
        %902 = vmatprep.subr.mxu0 0.0
        %903 = vmatpush1.msra.mxu0 %v871
        %904 = vmatprep.subr.mxu0 0.0
        %905 = vmatpush1.msra.mxu0 %v870
        %906 = vmatprep.subr.mxu0 0.0
        %907 = vmatpush2.msra.mxu0 0.0
        %908 = vmatprep.subr.mxu0 0.0
        %909 = vmatpush2.msra.mxu0 0.0
        %910 = vmatprep.subr.mxu0 0.0
        %911 = vmatpush2.msra.mxu0 0.0
        %912 = vmatprep.subr.mxu0 0.0
        %913 = vmatpush2.msra.mxu0 0.0
        %914 = vmatprep.subr.mxu0 0.0
        %915 = vmatpush2.msra.mxu0 0.0
        %916 = vmatprep.subr.mxu0 0.0
        %917 = vmatpush2.msra.mxu0 0.0
        %918 = vmatprep.subr.mxu0 0.0
        %919 = vmatpush2.msra.mxu0 0.0
        %920 = vmatprep.subr.mxu0 0.0
        %921 = vmatpush2.msra.mxu0 0.0
        %922 = vmatprep.subr.mxu0 0.0
        %923 = vmatpush2.msra.mxu0 0.0
        %924 = vmatprep.subr.mxu0 0.0
        %925 = vmatpush2.msra.mxu0 0.0
        %926 = vmatprep.subr.mxu0 0.0
        %927 = vmatpush2.msra.mxu0 0.0
        %928 = vmatprep.subr.mxu0 0.0
        %929 = vmatpush2.msra.mxu0 0.0
        %930 = vmatprep.subr.mxu0 0.0
        %931 = vmatpush2.msra.mxu0 0.0
        %932 = vmatprep.subr.mxu0 0.0
        %933 = vmatpush2.msra.mxu0 0.0
        %934 = vmatprep.subr.mxu0 0.0
        %935 = vmatpush2.msra.mxu0 0.0
        %936 = vmatprep.subr.mxu0 0.0
        %937 = vmatpush2.msra.mxu0 0.0
        %938 = vmatprep.mubr.f32.mxu0 0.0
        %939 = vmatmul.mubr.f32.gmra.mxu0 %v790
        %v940 = vpop.f32.mrf.mxu0
        %v941 = vadd.f32 0.0, %v940
        %v942 = vpop.f32.mrf.mxu0
        %943 = vmatprep.mubr.f32.mxu0 0.0
        %944 = vmatmul.mubr.f32.gmra.mxu0 %v793
        %v945 = vpop.f32.mrf.mxu0
        %v946 = vadd.f32 0.0, %v945
        %v947 = vpop.f32.mrf.mxu0
        %948 = vdwg.mxu0
        %v949 = vld [vmem:[%s723] sm:$0xff]
        %v950 = vld [vmem:[%s723 + $0x8] sm:$0xff]
        %v951 = vld [vmem:[%s723 + $0x10] sm:$0xff]
        %v952 = vld [vmem:[%s723 + $0x18] sm:$0xff]
        %953 = vmatprep.subr.mxu0 0.0
        %954 = vmatpush1.msra.mxu0 0.0
        %955 = vmatprep.subr.mxu0 0.0
        %956 = vmatpush1.msra.mxu0 0.0
        %957 = vmatprep.subr.mxu0 0.0
        %958 = vmatpush1.msra.mxu0 0.0
        %959 = vmatprep.subr.mxu0 0.0
        %960 = vmatpush1.msra.mxu0 0.0
        %961 = vmatprep.subr.mxu0 0.0
        %962 = vmatpush1.msra.mxu0 0.0
        %963 = vmatprep.subr.mxu0 0.0
        %964 = vmatpush1.msra.mxu0 0.0
        %965 = vmatprep.subr.mxu0 0.0
        %966 = vmatpush1.msra.mxu0 0.0
        %967 = vmatprep.subr.mxu0 0.0
        %968 = vmatpush1.msra.mxu0 0.0
        %969 = vmatprep.subr.mxu0 0.0
        %970 = vmatpush1.msra.mxu0 0.0
        %971 = vmatprep.subr.mxu0 0.0
        %972 = vmatpush1.msra.mxu0 0.0
        %973 = vmatprep.subr.mxu0 0.0
        %974 = vmatpush1.msra.mxu0 0.0
        %975 = vmatprep.subr.mxu0 0.0
        %976 = vmatpush1.msra.mxu0 0.0
        %977 = vmatprep.subr.mxu0 0.0
        %978 = vmatpush1.msra.mxu0 %v952
        %979 = vmatprep.subr.mxu0 0.0
        %980 = vmatpush1.msra.mxu0 %v951
        %981 = vmatprep.subr.mxu0 0.0
        %982 = vmatpush1.msra.mxu0 %v950
        %983 = vmatprep.subr.mxu0 0.0
        %984 = vmatpush1.msra.mxu0 %v949
        %985 = vmatprep.subr.mxu0 0.0
        %986 = vmatpush2.msra.mxu0 0.0
        %987 = vmatprep.subr.mxu0 0.0
        %988 = vmatpush2.msra.mxu0 0.0
        %989 = vmatprep.subr.mxu0 0.0
        %990 = vmatpush2.msra.mxu0 0.0
        %991 = vmatprep.subr.mxu0 0.0
        %992 = vmatpush2.msra.mxu0 0.0
        %993 = vmatprep.subr.mxu0 0.0
        %994 = vmatpush2.msra.mxu0 0.0
        %995 = vmatprep.subr.mxu0 0.0
        %996 = vmatpush2.msra.mxu0 0.0
        %997 = vmatprep.subr.mxu0 0.0
        %998 = vmatpush2.msra.mxu0 0.0
        %999 = vmatprep.subr.mxu0 0.0
        %1000 = vmatpush2.msra.mxu0 0.0
        %1001 = vmatprep.subr.mxu0 0.0
        %1002 = vmatpush2.msra.mxu0 0.0
        %1003 = vmatprep.subr.mxu0 0.0
        %1004 = vmatpush2.msra.mxu0 0.0
        %1005 = vmatprep.subr.mxu0 0.0
        %1006 = vmatpush2.msra.mxu0 0.0
        %1007 = vmatprep.subr.mxu0 0.0
        %1008 = vmatpush2.msra.mxu0 0.0
        %1009 = vmatprep.subr.mxu0 0.0
        %1010 = vmatpush2.msra.mxu0 0.0
        %1011 = vmatprep.subr.mxu0 0.0
        %1012 = vmatpush2.msra.mxu0 0.0
        %1013 = vmatprep.subr.mxu0 0.0
        %1014 = vmatpush2.msra.mxu0 0.0
        %1015 = vmatprep.subr.mxu0 0.0
        %1016 = vmatpush2.msra.mxu0 0.0
        %1017 = vmatprep.mubr.f32.mxu0 0.0
        %1018 = vmatmul.mubr.f32.gmra.mxu0 %v790
        %v1019 = vpop.f32.mrf.mxu0
        %v1020 = vadd.f32 0.0, %v1019
        %v1021 = vpop.f32.mrf.mxu0
        %1022 = vmatprep.mubr.f32.mxu0 0.0
        %1023 = vmatmul.mubr.f32.gmra.mxu0 %v793
        %v1024 = vpop.f32.mrf.mxu0
        %v1025 = vadd.f32 0.0, %v1024
        %v1026 = vpop.f32.mrf.mxu0
        %1027 = vdwg.mxu0
        %v1028 = vld [vmem:[%s728] sm:$0xff]
        %v1029 = vld [vmem:[%s728 + $0x8] sm:$0xff]
        %v1030 = vld [vmem:[%s728 + $0x10] sm:$0xff]
        %v1031 = vld [vmem:[%s728 + $0x18] sm:$0xff]
        %v1033 = vsel %vm788, %v782, 0
        %v1036 = vsel %vm788, %v783, 0
        %1038 = vmatprep.subr.mxu0 0.0
        %1039 = vmatpush1.msra.mxu0 0.0
        %1040 = vmatprep.subr.mxu0 0.0
        %1041 = vmatpush1.msra.mxu0 0.0
        %1042 = vmatprep.subr.mxu0 0.0
        %1043 = vmatpush1.msra.mxu0 0.0
        %1044 = vmatprep.subr.mxu0 0.0
        %1045 = vmatpush1.msra.mxu0 0.0
        %1046 = vmatprep.subr.mxu0 0.0
        %1047 = vmatpush1.msra.mxu0 0.0
        %1048 = vmatprep.subr.mxu0 0.0
        %1049 = vmatpush1.msra.mxu0 0.0
        %1050 = vmatprep.subr.mxu0 0.0
        %1051 = vmatpush1.msra.mxu0 0.0
        %1052 = vmatprep.subr.mxu0 0.0
        %1053 = vmatpush1.msra.mxu0 0.0
        %1054 = vmatprep.subr.mxu0 0.0
        %1055 = vmatpush1.msra.mxu0 0.0
        %1056 = vmatprep.subr.mxu0 0.0
        %1057 = vmatpush1.msra.mxu0 0.0
        %1058 = vmatprep.subr.mxu0 0.0
        %1059 = vmatpush1.msra.mxu0 0.0
        %1060 = vmatprep.subr.mxu0 0.0
        %1061 = vmatpush1.msra.mxu0 0.0
        %1062 = vmatprep.subr.mxu0 0.0
        %1063 = vmatpush1.msra.mxu0 %v1031
        %1064 = vmatprep.subr.mxu0 0.0
        %1065 = vmatpush1.msra.mxu0 %v1030
        %1066 = vmatprep.subr.mxu0 0.0
        %1067 = vmatpush1.msra.mxu0 %v1029
        %1068 = vmatprep.subr.mxu0 0.0
        %1069 = vmatpush1.msra.mxu0 %v1028
        %1070 = vmatprep.subr.mxu0 0.0
        %1071 = vmatpush2.msra.mxu0 0.0
        %1072 = vmatprep.subr.mxu0 0.0
        %1073 = vmatpush2.msra.mxu0 0.0
        %1074 = vmatprep.subr.mxu0 0.0
        %1075 = vmatpush2.msra.mxu0 0.0
        %1076 = vmatprep.subr.mxu0 0.0
        %1077 = vmatpush2.msra.mxu0 0.0
        %1078 = vmatprep.subr.mxu0 0.0
        %1079 = vmatpush2.msra.mxu0 0.0
        %1080 = vmatprep.subr.mxu0 0.0
        %1081 = vmatpush2.msra.mxu0 0.0
        %1082 = vmatprep.subr.mxu0 0.0
        %1083 = vmatpush2.msra.mxu0 0.0
        %1084 = vmatprep.subr.mxu0 0.0
        %1085 = vmatpush2.msra.mxu0 0.0
        %1086 = vmatprep.subr.mxu0 0.0
        %1087 = vmatpush2.msra.mxu0 0.0
        %1088 = vmatprep.subr.mxu0 0.0
        %1089 = vmatpush2.msra.mxu0 0.0
        %1090 = vmatprep.subr.mxu0 0.0
        %1091 = vmatpush2.msra.mxu0 0.0
        %1092 = vmatprep.subr.mxu0 0.0
        %1093 = vmatpush2.msra.mxu0 0.0
        %1094 = vmatprep.subr.mxu0 0.0
        %1095 = vmatpush2.msra.mxu0 0.0
        %1096 = vmatprep.subr.mxu0 0.0
        %1097 = vmatpush2.msra.mxu0 0.0
        %1098 = vmatprep.subr.mxu0 0.0
        %1099 = vmatpush2.msra.mxu0 0.0
        %1100 = vmatprep.subr.mxu0 0.0
        %1101 = vmatpush2.msra.mxu0 0.0
        %1102 = vmatprep.mubr.f32.mxu0 0.0
        %1103 = vmatmul.mubr.f32.gmra.mxu0 %v1033
        %v1104 = vpop.f32.mrf.mxu0
        %v1105 = vadd.f32 0.0, %v1104
        %v1106 = vpop.f32.mrf.mxu0
        %1107 = vmatprep.mubr.f32.mxu0 0.0
        %1108 = vmatmul.mubr.f32.gmra.mxu0 %v1036
        %v1109 = vpop.f32.mrf.mxu0
        %v1110 = vadd.f32 0.0, %v1109
        %v1111 = vpop.f32.mrf.mxu0
        %1112 = vdwg.mxu0
        %v1113 = vld [vmem:[%s733] sm:$0xff]
        %v1114 = vld [vmem:[%s733 + $0x8] sm:$0xff]
        %v1115 = vld [vmem:[%s733 + $0x10] sm:$0xff]
        %v1116 = vld [vmem:[%s733 + $0x18] sm:$0xff]
        %1117 = vmatprep.subr.mxu0 0.0
        %1118 = vmatpush1.msra.mxu0 0.0
        %1119 = vmatprep.subr.mxu0 0.0
        %1120 = vmatpush1.msra.mxu0 0.0
        %1121 = vmatprep.subr.mxu0 0.0
        %1122 = vmatpush1.msra.mxu0 0.0
        %1123 = vmatprep.subr.mxu0 0.0
        %1124 = vmatpush1.msra.mxu0 0.0
        %1125 = vmatprep.subr.mxu0 0.0
        %1126 = vmatpush1.msra.mxu0 0.0
        %1127 = vmatprep.subr.mxu0 0.0
        %1128 = vmatpush1.msra.mxu0 0.0
        %1129 = vmatprep.subr.mxu0 0.0
        %1130 = vmatpush1.msra.mxu0 0.0
        %1131 = vmatprep.subr.mxu0 0.0
        %1132 = vmatpush1.msra.mxu0 0.0
        %1133 = vmatprep.subr.mxu0 0.0
        %1134 = vmatpush1.msra.mxu0 0.0
        %1135 = vmatprep.subr.mxu0 0.0
        %1136 = vmatpush1.msra.mxu0 0.0
        %1137 = vmatprep.subr.mxu0 0.0
        %1138 = vmatpush1.msra.mxu0 0.0
        %1139 = vmatprep.subr.mxu0 0.0
        %1140 = vmatpush1.msra.mxu0 0.0
        %1141 = vmatprep.subr.mxu0 0.0
        %1142 = vmatpush1.msra.mxu0 %v1116
        %1143 = vmatprep.subr.mxu0 0.0
        %1144 = vmatpush1.msra.mxu0 %v1115
        %1145 = vmatprep.subr.mxu0 0.0
        %1146 = vmatpush1.msra.mxu0 %v1114
        %1147 = vmatprep.subr.mxu0 0.0
        %1148 = vmatpush1.msra.mxu0 %v1113
        %1149 = vmatprep.subr.mxu0 0.0
        %1150 = vmatpush2.msra.mxu0 0.0
        %1151 = vmatprep.subr.mxu0 0.0
        %1152 = vmatpush2.msra.mxu0 0.0
        %1153 = vmatprep.subr.mxu0 0.0
        %1154 = vmatpush2.msra.mxu0 0.0
        %1155 = vmatprep.subr.mxu0 0.0
        %1156 = vmatpush2.msra.mxu0 0.0
        %1157 = vmatprep.subr.mxu0 0.0
        %1158 = vmatpush2.msra.mxu0 0.0
        %1159 = vmatprep.subr.mxu0 0.0
        %1160 = vmatpush2.msra.mxu0 0.0
        %1161 = vmatprep.subr.mxu0 0.0
        %1162 = vmatpush2.msra.mxu0 0.0
        %1163 = vmatprep.subr.mxu0 0.0
        %1164 = vmatpush2.msra.mxu0 0.0
        %1165 = vmatprep.subr.mxu0 0.0
        %1166 = vmatpush2.msra.mxu0 0.0
        %1167 = vmatprep.subr.mxu0 0.0
        %1168 = vmatpush2.msra.mxu0 0.0
        %1169 = vmatprep.subr.mxu0 0.0
        %1170 = vmatpush2.msra.mxu0 0.0
        %1171 = vmatprep.subr.mxu0 0.0
        %1172 = vmatpush2.msra.mxu0 0.0
        %1173 = vmatprep.subr.mxu0 0.0
        %1174 = vmatpush2.msra.mxu0 0.0
        %1175 = vmatprep.subr.mxu0 0.0
        %1176 = vmatpush2.msra.mxu0 0.0
        %1177 = vmatprep.subr.mxu0 0.0
        %1178 = vmatpush2.msra.mxu0 0.0
        %1179 = vmatprep.subr.mxu0 0.0
        %1180 = vmatpush2.msra.mxu0 0.0
        %1181 = vmatprep.mubr.f32.mxu0 0.0
        %1182 = vmatmul.mubr.f32.gmra.mxu0 %v1033
        %v1183 = vpop.f32.mrf.mxu0
        %v1184 = vadd.f32 0.0, %v1183
        %v1185 = vpop.f32.mrf.mxu0
        %1186 = vmatprep.mubr.f32.mxu0 0.0
        %1187 = vmatmul.mubr.f32.gmra.mxu0 %v1036
        %v1188 = vpop.f32.mrf.mxu0
        %v1189 = vadd.f32 0.0, %v1188
        %v1190 = vpop.f32.mrf.mxu0
        %1191 = vdwg.mxu0
        %vm1192 = vcmask 64512
        %v1194 = vsel %vm1192, %v1105, 0
        %v1197 = vsel %vm1192, %v1184, 0
        %1199 = vmatprep.subr.mxu0 0.0
        %1200 = vmatpush1.xpose.msra.mxu0 0.0
        %1201 = vmatprep.subr.mxu0 0.0
        %1202 = vmatpush1.xpose.msra.mxu0 0.0
        %1203 = vmatprep.subr.mxu0 0.0
        %1204 = vmatpush1.xpose.msra.mxu0 0.0
        %1205 = vmatprep.subr.mxu0 0.0
        %1206 = vmatpush1.xpose.msra.mxu0 0.0
        %1207 = vmatprep.subr.mxu0 0.0
        %1208 = vmatpush1.xpose.msra.mxu0 0.0
        %1209 = vmatprep.subr.mxu0 0.0
        %1210 = vmatpush1.xpose.msra.mxu0 0.0
        %1211 = vmatprep.subr.mxu0 0.0
        %1212 = vmatpush1.xpose.msra.mxu0 0.0
        %1213 = vmatprep.subr.mxu0 0.0
        %1214 = vmatpush1.xpose.msra.mxu0 0.0
        %1215 = vmatprep.subr.mxu0 0.0
        %1216 = vmatpush1.xpose.msra.mxu0 0.0
        %1217 = vmatprep.subr.mxu0 0.0
        %1218 = vmatpush1.xpose.msra.mxu0 0.0
        %1219 = vmatprep.subr.mxu0 0.0
        %1220 = vmatpush1.xpose.msra.mxu0 0.0
        %1221 = vmatprep.subr.mxu0 0.0
        %1222 = vmatpush1.xpose.msra.mxu0 0.0
        %1223 = vmatprep.subr.mxu0 0.0
        %1224 = vmatpush1.xpose.msra.mxu0 0.0
        %1225 = vmatprep.subr.mxu0 0.0
        %1226 = vmatpush1.xpose.msra.mxu0 0.0
        %1227 = vmatprep.subr.mxu0 0.0
        %1228 = vmatpush1.xpose.msra.mxu0 0.0
        %1229 = vmatprep.subr.mxu0 0.0
        %1230 = vmatpush1.xpose.msra.mxu0 %v1197
        %1231 = vmatprep.subr.mxu0 0.0
        %1232 = vmatpush2.xpose.msra.mxu0 0.0
        %1233 = vmatprep.subr.mxu0 0.0
        %1234 = vmatpush2.xpose.msra.mxu0 0.0
        %1235 = vmatprep.subr.mxu0 0.0
        %1236 = vmatpush2.xpose.msra.mxu0 0.0
        %1237 = vmatprep.subr.mxu0 0.0
        %1238 = vmatpush2.xpose.msra.mxu0 0.0
        %1239 = vmatprep.subr.mxu0 0.0
        %1240 = vmatpush2.xpose.msra.mxu0 0.0
        %1241 = vmatprep.subr.mxu0 0.0
        %1242 = vmatpush2.xpose.msra.mxu0 0.0
        %1243 = vmatprep.subr.mxu0 0.0
        %1244 = vmatpush2.xpose.msra.mxu0 0.0
        %1245 = vmatprep.subr.mxu0 0.0
        %1246 = vmatpush2.xpose.msra.mxu0 0.0
        %1247 = vmatprep.subr.mxu0 0.0
        %1248 = vmatpush2.xpose.msra.mxu0 0.0
        %1249 = vmatprep.subr.mxu0 0.0
        %1250 = vmatpush2.xpose.msra.mxu0 0.0
        %1251 = vmatprep.subr.mxu0 0.0
        %1252 = vmatpush2.xpose.msra.mxu0 0.0
        %1253 = vmatprep.subr.mxu0 0.0
        %1254 = vmatpush2.xpose.msra.mxu0 0.0
        %1255 = vmatprep.subr.mxu0 0.0
        %1256 = vmatpush2.xpose.msra.mxu0 0.0
        %1257 = vmatprep.subr.mxu0 0.0
        %1258 = vmatpush2.xpose.msra.mxu0 0.0
        %1259 = vmatprep.subr.mxu0 0.0
        %1260 = vmatpush2.xpose.msra.mxu0 0.0
        %1261 = vmatprep.subr.mxu0 0.0
        %1262 = vmatpush2.xpose.msra.mxu0 0.0
        %1263 = vmatprep.mubr.f32.mxu0 0.0
        %1264 = vmatmul.mubr.f32.gmra.mxu0 %v1194
        %v1265 = vpop.f32.mrf.mxu0
        %v1266 = vadd.f32 0.0, %v1265
        %v1267 = vpop.f32.mrf.mxu0
        %1268 = vdwg.mxu0
        %v1270 = vsel %vm1192, %v1110, 0
        %v1273 = vsel %vm1192, %v1189, 0
        %1275 = vmatprep.subr.mxu0 0.0
        %1276 = vmatpush1.xpose.msra.mxu0 0.0
        %1277 = vmatprep.subr.mxu0 0.0
        %1278 = vmatpush1.xpose.msra.mxu0 0.0
        %1279 = vmatprep.subr.mxu0 0.0
        %1280 = vmatpush1.xpose.msra.mxu0 0.0
        %1281 = vmatprep.subr.mxu0 0.0
        %1282 = vmatpush1.xpose.msra.mxu0 0.0
        %1283 = vmatprep.subr.mxu0 0.0
        %1284 = vmatpush1.xpose.msra.mxu0 0.0
        %1285 = vmatprep.subr.mxu0 0.0
        %1286 = vmatpush1.xpose.msra.mxu0 0.0
        %1287 = vmatprep.subr.mxu0 0.0
        %1288 = vmatpush1.xpose.msra.mxu0 0.0
        %1289 = vmatprep.subr.mxu0 0.0
        %1290 = vmatpush1.xpose.msra.mxu0 0.0
        %1291 = vmatprep.subr.mxu0 0.0
        %1292 = vmatpush1.xpose.msra.mxu0 0.0
        %1293 = vmatprep.subr.mxu0 0.0
        %1294 = vmatpush1.xpose.msra.mxu0 0.0
        %1295 = vmatprep.subr.mxu0 0.0
        %1296 = vmatpush1.xpose.msra.mxu0 0.0
        %1297 = vmatprep.subr.mxu0 0.0
        %1298 = vmatpush1.xpose.msra.mxu0 0.0
        %1299 = vmatprep.subr.mxu0 0.0
        %1300 = vmatpush1.xpose.msra.mxu0 0.0
        %1301 = vmatprep.subr.mxu0 0.0
        %1302 = vmatpush1.xpose.msra.mxu0 0.0
        %1303 = vmatprep.subr.mxu0 0.0
        %1304 = vmatpush1.xpose.msra.mxu0 0.0
        %1305 = vmatprep.subr.mxu0 0.0
        %1306 = vmatpush1.xpose.msra.mxu0 %v1273
        %1307 = vmatprep.subr.mxu0 0.0
        %1308 = vmatpush2.xpose.msra.mxu0 0.0
        %1309 = vmatprep.subr.mxu0 0.0
        %1310 = vmatpush2.xpose.msra.mxu0 0.0
        %1311 = vmatprep.subr.mxu0 0.0
        %1312 = vmatpush2.xpose.msra.mxu0 0.0
        %1313 = vmatprep.subr.mxu0 0.0
        %1314 = vmatpush2.xpose.msra.mxu0 0.0
        %1315 = vmatprep.subr.mxu0 0.0
        %1316 = vmatpush2.xpose.msra.mxu0 0.0
        %1317 = vmatprep.subr.mxu0 0.0
        %1318 = vmatpush2.xpose.msra.mxu0 0.0
        %1319 = vmatprep.subr.mxu0 0.0
        %1320 = vmatpush2.xpose.msra.mxu0 0.0
        %1321 = vmatprep.subr.mxu0 0.0
        %1322 = vmatpush2.xpose.msra.mxu0 0.0
        %1323 = vmatprep.subr.mxu0 0.0
        %1324 = vmatpush2.xpose.msra.mxu0 0.0
        %1325 = vmatprep.subr.mxu0 0.0
        %1326 = vmatpush2.xpose.msra.mxu0 0.0
        %1327 = vmatprep.subr.mxu0 0.0
        %1328 = vmatpush2.xpose.msra.mxu0 0.0
        %1329 = vmatprep.subr.mxu0 0.0
        %1330 = vmatpush2.xpose.msra.mxu0 0.0
        %1331 = vmatprep.subr.mxu0 0.0
        %1332 = vmatpush2.xpose.msra.mxu0 0.0
        %1333 = vmatprep.subr.mxu0 0.0
        %1334 = vmatpush2.xpose.msra.mxu0 0.0
        %1335 = vmatprep.subr.mxu0 0.0
        %1336 = vmatpush2.xpose.msra.mxu0 0.0
        %1337 = vmatprep.subr.mxu0 0.0
        %1338 = vmatpush2.xpose.msra.mxu0 0.0
        %1339 = vmatprep.mubr.f32.mxu0 0.0
        %1340 = vmatmul.mubr.f32.gmra.mxu0 %v1270
        %v1341 = vpop.f32.mrf.mxu0
        %v1342 = vadd.f32 0.0, %v1341
        %v1343 = vpop.f32.mrf.mxu0
        %1344 = vdwg.mxu0
        %v1346 = vsel %vm1192, %v862, 0
        %v1349 = vsel %vm1192, %v941, 0
        %1351 = vmatprep.subr.mxu0 0.0
        %1352 = vmatpush1.xpose.msra.mxu0 0.0
        %1353 = vmatprep.subr.mxu0 0.0
        %1354 = vmatpush1.xpose.msra.mxu0 0.0
        %1355 = vmatprep.subr.mxu0 0.0
        %1356 = vmatpush1.xpose.msra.mxu0 0.0
        %1357 = vmatprep.subr.mxu0 0.0
        %1358 = vmatpush1.xpose.msra.mxu0 0.0
        %1359 = vmatprep.subr.mxu0 0.0
        %1360 = vmatpush1.xpose.msra.mxu0 0.0
        %1361 = vmatprep.subr.mxu0 0.0
        %1362 = vmatpush1.xpose.msra.mxu0 0.0
        %1363 = vmatprep.subr.mxu0 0.0
        %1364 = vmatpush1.xpose.msra.mxu0 0.0
        %1365 = vmatprep.subr.mxu0 0.0
        %1366 = vmatpush1.xpose.msra.mxu0 0.0
        %1367 = vmatprep.subr.mxu0 0.0
        %1368 = vmatpush1.xpose.msra.mxu0 0.0
        %1369 = vmatprep.subr.mxu0 0.0
        %1370 = vmatpush1.xpose.msra.mxu0 0.0
        %1371 = vmatprep.subr.mxu0 0.0
        %1372 = vmatpush1.xpose.msra.mxu0 0.0
        %1373 = vmatprep.subr.mxu0 0.0
        %1374 = vmatpush1.xpose.msra.mxu0 0.0
        %1375 = vmatprep.subr.mxu0 0.0
        %1376 = vmatpush1.xpose.msra.mxu0 0.0
        %1377 = vmatprep.subr.mxu0 0.0
        %1378 = vmatpush1.xpose.msra.mxu0 0.0
        %1379 = vmatprep.subr.mxu0 0.0
        %1380 = vmatpush1.xpose.msra.mxu0 0.0
        %1381 = vmatprep.subr.mxu0 0.0
        %1382 = vmatpush1.xpose.msra.mxu0 %v1349
        %1383 = vmatprep.subr.mxu0 0.0
        %1384 = vmatpush2.xpose.msra.mxu0 0.0
        %1385 = vmatprep.subr.mxu0 0.0
        %1386 = vmatpush2.xpose.msra.mxu0 0.0
        %1387 = vmatprep.subr.mxu0 0.0
        %1388 = vmatpush2.xpose.msra.mxu0 0.0
        %1389 = vmatprep.subr.mxu0 0.0
        %1390 = vmatpush2.xpose.msra.mxu0 0.0
        %1391 = vmatprep.subr.mxu0 0.0
        %1392 = vmatpush2.xpose.msra.mxu0 0.0
        %1393 = vmatprep.subr.mxu0 0.0
        %1394 = vmatpush2.xpose.msra.mxu0 0.0
        %1395 = vmatprep.subr.mxu0 0.0
        %1396 = vmatpush2.xpose.msra.mxu0 0.0
        %1397 = vmatprep.subr.mxu0 0.0
        %1398 = vmatpush2.xpose.msra.mxu0 0.0
        %1399 = vmatprep.subr.mxu0 0.0
        %1400 = vmatpush2.xpose.msra.mxu0 0.0
        %1401 = vmatprep.subr.mxu0 0.0
        %1402 = vmatpush2.xpose.msra.mxu0 0.0
        %1403 = vmatprep.subr.mxu0 0.0
        %1404 = vmatpush2.xpose.msra.mxu0 0.0
        %1405 = vmatprep.subr.mxu0 0.0
        %1406 = vmatpush2.xpose.msra.mxu0 0.0
        %1407 = vmatprep.subr.mxu0 0.0
        %1408 = vmatpush2.xpose.msra.mxu0 0.0
        %1409 = vmatprep.subr.mxu0 0.0
        %1410 = vmatpush2.xpose.msra.mxu0 0.0
        %1411 = vmatprep.subr.mxu0 0.0
        %1412 = vmatpush2.xpose.msra.mxu0 0.0
        %1413 = vmatprep.subr.mxu0 0.0
        %1414 = vmatpush2.xpose.msra.mxu0 0.0
        %1415 = vmatprep.mubr.f32.mxu0 0.0
        %1416 = vmatmul.mubr.f32.gmra.mxu0 %v1346
        %v1417 = vpop.f32.mrf.mxu0
        %v1418 = vadd.f32 %v1266, %v1417
        %v1419 = vpop.f32.mrf.mxu0
        %1420 = vdwg.mxu0
        %v1422 = vsel %vm1192, %v867, 0
        %v1425 = vsel %vm1192, %v946, 0
        %1427 = vmatprep.subr.mxu0 0.0
        %1428 = vmatpush1.xpose.msra.mxu0 0.0
        %1429 = vmatprep.subr.mxu0 0.0
        %1430 = vmatpush1.xpose.msra.mxu0 0.0
        %1431 = vmatprep.subr.mxu0 0.0
        %1432 = vmatpush1.xpose.msra.mxu0 0.0
        %1433 = vmatprep.subr.mxu0 0.0
        %1434 = vmatpush1.xpose.msra.mxu0 0.0
        %1435 = vmatprep.subr.mxu0 0.0
        %1436 = vmatpush1.xpose.msra.mxu0 0.0
        %1437 = vmatprep.subr.mxu0 0.0
        %1438 = vmatpush1.xpose.msra.mxu0 0.0
        %1439 = vmatprep.subr.mxu0 0.0
        %1440 = vmatpush1.xpose.msra.mxu0 0.0
        %1441 = vmatprep.subr.mxu0 0.0
        %1442 = vmatpush1.xpose.msra.mxu0 0.0
        %1443 = vmatprep.subr.mxu0 0.0
        %1444 = vmatpush1.xpose.msra.mxu0 0.0
        %1445 = vmatprep.subr.mxu0 0.0
        %1446 = vmatpush1.xpose.msra.mxu0 0.0
        %1447 = vmatprep.subr.mxu0 0.0
        %1448 = vmatpush1.xpose.msra.mxu0 0.0
        %1449 = vmatprep.subr.mxu0 0.0
        %1450 = vmatpush1.xpose.msra.mxu0 0.0
        %1451 = vmatprep.subr.mxu0 0.0
        %1452 = vmatpush1.xpose.msra.mxu0 0.0
        %1453 = vmatprep.subr.mxu0 0.0
        %1454 = vmatpush1.xpose.msra.mxu0 0.0
        %1455 = vmatprep.subr.mxu0 0.0
        %1456 = vmatpush1.xpose.msra.mxu0 0.0
        %1457 = vmatprep.subr.mxu0 0.0
        %1458 = vmatpush1.xpose.msra.mxu0 %v1425
        %1459 = vmatprep.subr.mxu0 0.0
        %1460 = vmatpush2.xpose.msra.mxu0 0.0
        %1461 = vmatprep.subr.mxu0 0.0
        %1462 = vmatpush2.xpose.msra.mxu0 0.0
        %1463 = vmatprep.subr.mxu0 0.0
        %1464 = vmatpush2.xpose.msra.mxu0 0.0
        %1465 = vmatprep.subr.mxu0 0.0
        %1466 = vmatpush2.xpose.msra.mxu0 0.0
        %1467 = vmatprep.subr.mxu0 0.0
        %1468 = vmatpush2.xpose.msra.mxu0 0.0
        %1469 = vmatprep.subr.mxu0 0.0
        %1470 = vmatpush2.xpose.msra.mxu0 0.0
        %1471 = vmatprep.subr.mxu0 0.0
        %1472 = vmatpush2.xpose.msra.mxu0 0.0
        %1473 = vmatprep.subr.mxu0 0.0
        %1474 = vmatpush2.xpose.msra.mxu0 0.0
        %1475 = vmatprep.subr.mxu0 0.0
        %1476 = vmatpush2.xpose.msra.mxu0 0.0
        %1477 = vmatprep.subr.mxu0 0.0
        %1478 = vmatpush2.xpose.msra.mxu0 0.0
        %1479 = vmatprep.subr.mxu0 0.0
        %1480 = vmatpush2.xpose.msra.mxu0 0.0
        %1481 = vmatprep.subr.mxu0 0.0
        %1482 = vmatpush2.xpose.msra.mxu0 0.0
        %1483 = vmatprep.subr.mxu0 0.0
        %1484 = vmatpush2.xpose.msra.mxu0 0.0
        %1485 = vmatprep.subr.mxu0 0.0
        %1486 = vmatpush2.xpose.msra.mxu0 0.0
        %1487 = vmatprep.subr.mxu0 0.0
        %1488 = vmatpush2.xpose.msra.mxu0 0.0
        %1489 = vmatprep.subr.mxu0 0.0
        %1490 = vmatpush2.xpose.msra.mxu0 0.0
        %1491 = vmatprep.mubr.f32.mxu0 0.0
        %1492 = vmatmul.mubr.f32.gmra.mxu0 %v1422
        %v1493 = vpop.f32.mrf.mxu0
        %v1494 = vadd.f32 %v1342, %v1493
        %v1495 = vpop.f32.mrf.mxu0
        %1496 = vdwg.mxu0
        %v1497 = vmul.f32 %v1418, 0.25
        %v1498 = vmul.f32 %v1494, 0.25
        %v1499 = vld [vmem:[%s2] sm:$0xff]
        %v1500 = vadd.f32 %v1497, %v1499
        %v1501 = vadd.f32 %v1498, %v1499
        %v1502 = vsel %vm1192, %v1500, -inf
        %1503 = vmax.xlane.f32.xlu0 %v1502
        %v1504 = vpop.xlane.xlu0 %1503
        %v1505 = vsel %vm1192, %v1501, -inf
        %1506 = vmax.xlane.f32.xlu0 %v1505
        %v1507 = vpop.xlane.xlu0 %1506
        %v1508 = vsub.f32 %v1500, %v1504
        %v1509 = vsub.f32 %v1501, %v1507
        %v1510 = vmul.f32 %v1508, 1.442695
        %v1511 = vpow.pop %v1510
        %v1512 = vmul.f32 %v1509, 1.442695
        %v1513 = vpow.pop %v1512
        %v1514 = vsel %vm1192, %v1511, 0.0
        %1515 = vadd.xlane.f32.xlu0 %v1514
        %v1516 = vpop.xlane.xlu0 %1515
        %v1517 = vsel %vm1192, %v1513, 0.0
        %1518 = vadd.xlane.f32.xlu0 %v1517
        %v1519 = vpop.xlane.xlu0 %1518
        %v1520 = vrcp.pop %v1516
        %v1521 = vrcp.pop %v1519
        %v1522 = vmul.f32 %v1511, %v1520
        %v1523 = vmul.f32 %v1513, %v1521
        %v1525 = vsel %vm1192, %v1522, 0
        %1527 = vmatprep.subr.mxu0 0.0
        %1528 = vmatpush1.msra.mxu0 0.0
        %1529 = vmatprep.subr.mxu0 0.0
        %1530 = vmatpush1.msra.mxu0 0.0
        %1531 = vmatprep.subr.mxu0 0.0
        %1532 = vmatpush1.msra.mxu0 0.0
        %1533 = vmatprep.subr.mxu0 0.0
        %1534 = vmatpush1.msra.mxu0 0.0
        %1535 = vmatprep.subr.mxu0 0.0
        %1536 = vmatpush1.msra.mxu0 0.0
        %1537 = vmatprep.subr.mxu0 0.0
        %1538 = vmatpush1.msra.mxu0 0.0
        %1539 = vmatprep.subr.mxu0 0.0
        %1540 = vmatpush1.msra.mxu0 0.0
        %1541 = vmatprep.subr.mxu0 0.0
        %1542 = vmatpush1.msra.mxu0 0.0
        %1543 = vmatprep.subr.mxu0 0.0
        %1544 = vmatpush1.msra.mxu0 0.0
        %1545 = vmatprep.subr.mxu0 0.0
        %1546 = vmatpush1.msra.mxu0 0.0
        %1547 = vmatprep.subr.mxu0 0.0
        %1548 = vmatpush1.msra.mxu0 0.0
        %1549 = vmatprep.subr.mxu0 0.0
        %1550 = vmatpush1.msra.mxu0 0.0
        %1551 = vmatprep.subr.mxu0 0.0
        %1552 = vmatpush1.msra.mxu0 0.0
        %1553 = vmatprep.subr.mxu0 0.0
        %1554 = vmatpush1.msra.mxu0 0.0
        %1555 = vmatprep.subr.mxu0 0.0
        %1556 = vmatpush1.msra.mxu0 0.0
        %1557 = vmatprep.subr.mxu0 0.0
        %1558 = vmatpush1.msra.mxu0 %v1020
        %1559 = vmatprep.subr.mxu0 0.0
        %1560 = vmatpush2.msra.mxu0 0.0
        %1561 = vmatprep.subr.mxu0 0.0
        %1562 = vmatpush2.msra.mxu0 0.0
        %1563 = vmatprep.subr.mxu0 0.0
        %1564 = vmatpush2.msra.mxu0 0.0
        %1565 = vmatprep.subr.mxu0 0.0
        %1566 = vmatpush2.msra.mxu0 0.0
        %1567 = vmatprep.subr.mxu0 0.0
        %1568 = vmatpush2.msra.mxu0 0.0
        %1569 = vmatprep.subr.mxu0 0.0
        %1570 = vmatpush2.msra.mxu0 0.0
        %1571 = vmatprep.subr.mxu0 0.0
        %1572 = vmatpush2.msra.mxu0 0.0
        %1573 = vmatprep.subr.mxu0 0.0
        %1574 = vmatpush2.msra.mxu0 0.0
        %1575 = vmatprep.subr.mxu0 0.0
        %1576 = vmatpush2.msra.mxu0 0.0
        %1577 = vmatprep.subr.mxu0 0.0
        %1578 = vmatpush2.msra.mxu0 0.0
        %1579 = vmatprep.subr.mxu0 0.0
        %1580 = vmatpush2.msra.mxu0 0.0
        %1581 = vmatprep.subr.mxu0 0.0
        %1582 = vmatpush2.msra.mxu0 0.0
        %1583 = vmatprep.subr.mxu0 0.0
        %1584 = vmatpush2.msra.mxu0 0.0
        %1585 = vmatprep.subr.mxu0 0.0
        %1586 = vmatpush2.msra.mxu0 0.0
        %1587 = vmatprep.subr.mxu0 0.0
        %1588 = vmatpush2.msra.mxu0 0.0
        %1589 = vmatprep.subr.mxu0 0.0
        %1590 = vmatpush2.msra.mxu0 0.0
        %1591 = vmatprep.mubr.f32.mxu0 0.0
        %1592 = vmatmul.mubr.f32.gmra.mxu0 %v1525
        %v1593 = vpop.f32.mrf.mxu0
        %v1594 = vadd.f32 0.0, %v1593
        %v1595 = vpop.f32.mrf.mxu0
        %1596 = vdwg.mxu0
        %v1598 = vsel %vm1192, %v1523, 0
        %1600 = vmatprep.subr.mxu0 0.0
        %1601 = vmatpush1.msra.mxu0 0.0
        %1602 = vmatprep.subr.mxu0 0.0
        %1603 = vmatpush1.msra.mxu0 0.0
        %1604 = vmatprep.subr.mxu0 0.0
        %1605 = vmatpush1.msra.mxu0 0.0
        %1606 = vmatprep.subr.mxu0 0.0
        %1607 = vmatpush1.msra.mxu0 0.0
        %1608 = vmatprep.subr.mxu0 0.0
        %1609 = vmatpush1.msra.mxu0 0.0
        %1610 = vmatprep.subr.mxu0 0.0
        %1611 = vmatpush1.msra.mxu0 0.0
        %1612 = vmatprep.subr.mxu0 0.0
        %1613 = vmatpush1.msra.mxu0 0.0
        %1614 = vmatprep.subr.mxu0 0.0
        %1615 = vmatpush1.msra.mxu0 0.0
        %1616 = vmatprep.subr.mxu0 0.0
        %1617 = vmatpush1.msra.mxu0 0.0
        %1618 = vmatprep.subr.mxu0 0.0
        %1619 = vmatpush1.msra.mxu0 0.0
        %1620 = vmatprep.subr.mxu0 0.0
        %1621 = vmatpush1.msra.mxu0 0.0
        %1622 = vmatprep.subr.mxu0 0.0
        %1623 = vmatpush1.msra.mxu0 0.0
        %1624 = vmatprep.subr.mxu0 0.0
        %1625 = vmatpush1.msra.mxu0 0.0
        %1626 = vmatprep.subr.mxu0 0.0
        %1627 = vmatpush1.msra.mxu0 0.0
        %1628 = vmatprep.subr.mxu0 0.0
        %1629 = vmatpush1.msra.mxu0 0.0
        %1630 = vmatprep.subr.mxu0 0.0
        %1631 = vmatpush1.msra.mxu0 %v1025
        %1632 = vmatprep.subr.mxu0 0.0
        %1633 = vmatpush2.msra.mxu0 0.0
        %1634 = vmatprep.subr.mxu0 0.0
        %1635 = vmatpush2.msra.mxu0 0.0
        %1636 = vmatprep.subr.mxu0 0.0
        %1637 = vmatpush2.msra.mxu0 0.0
        %1638 = vmatprep.subr.mxu0 0.0
        %1639 = vmatpush2.msra.mxu0 0.0
        %1640 = vmatprep.subr.mxu0 0.0
        %1641 = vmatpush2.msra.mxu0 0.0
        %1642 = vmatprep.subr.mxu0 0.0
        %1643 = vmatpush2.msra.mxu0 0.0
        %1644 = vmatprep.subr.mxu0 0.0
        %1645 = vmatpush2.msra.mxu0 0.0
        %1646 = vmatprep.subr.mxu0 0.0
        %1647 = vmatpush2.msra.mxu0 0.0
        %1648 = vmatprep.subr.mxu0 0.0
        %1649 = vmatpush2.msra.mxu0 0.0
        %1650 = vmatprep.subr.mxu0 0.0
        %1651 = vmatpush2.msra.mxu0 0.0
        %1652 = vmatprep.subr.mxu0 0.0
        %1653 = vmatpush2.msra.mxu0 0.0
        %1654 = vmatprep.subr.mxu0 0.0
        %1655 = vmatpush2.msra.mxu0 0.0
        %1656 = vmatprep.subr.mxu0 0.0
        %1657 = vmatpush2.msra.mxu0 0.0
        %1658 = vmatprep.subr.mxu0 0.0
        %1659 = vmatpush2.msra.mxu0 0.0
        %1660 = vmatprep.subr.mxu0 0.0
        %1661 = vmatpush2.msra.mxu0 0.0
        %1662 = vmatprep.subr.mxu0 0.0
        %1663 = vmatpush2.msra.mxu0 0.0
        %1664 = vmatprep.mubr.f32.mxu0 0.0
        %1665 = vmatmul.mubr.f32.gmra.mxu0 %v1598
        %v1666 = vpop.f32.mrf.mxu0
        %v1667 = vadd.f32 0.0, %v1666
        %v1668 = vpop.f32.mrf.mxu0
        %1669 = vdwg.mxu0
        %v1670 = vld [vmem:[%s738] sm:$0xff]
        %s1671 = scalar_lea.vmem %s713, 32
        %v1672 = vld [vmem:[%s1671] sm:$0xff]
        %v1673 = vld [vmem:[%s1671 + $0x8] sm:$0xff]
        %v1674 = vld [vmem:[%s1671 + $0x10] sm:$0xff]
        %v1675 = vld [vmem:[%s1671 + $0x18] sm:$0xff]
        %1676 = vmatprep.subr.mxu0 0.0
        %1677 = vmatpush1.msra.mxu0 0.0
        %1678 = vmatprep.subr.mxu0 0.0
        %1679 = vmatpush1.msra.mxu0 0.0
        %1680 = vmatprep.subr.mxu0 0.0
        %1681 = vmatpush1.msra.mxu0 0.0
        %1682 = vmatprep.subr.mxu0 0.0
        %1683 = vmatpush1.msra.mxu0 0.0
        %1684 = vmatprep.subr.mxu0 0.0
        %1685 = vmatpush1.msra.mxu0 0.0
        %1686 = vmatprep.subr.mxu0 0.0
        %1687 = vmatpush1.msra.mxu0 0.0
        %1688 = vmatprep.subr.mxu0 0.0
        %1689 = vmatpush1.msra.mxu0 0.0
        %1690 = vmatprep.subr.mxu0 0.0
        %1691 = vmatpush1.msra.mxu0 0.0
        %1692 = vmatprep.subr.mxu0 0.0
        %1693 = vmatpush1.msra.mxu0 0.0
        %1694 = vmatprep.subr.mxu0 0.0
        %1695 = vmatpush1.msra.mxu0 0.0
        %1696 = vmatprep.subr.mxu0 0.0
        %1697 = vmatpush1.msra.mxu0 0.0
        %1698 = vmatprep.subr.mxu0 0.0
        %1699 = vmatpush1.msra.mxu0 0.0
        %1700 = vmatprep.subr.mxu0 0.0
        %1701 = vmatpush1.msra.mxu0 %v1675
        %1702 = vmatprep.subr.mxu0 0.0
        %1703 = vmatpush1.msra.mxu0 %v1674
        %1704 = vmatprep.subr.mxu0 0.0
        %1705 = vmatpush1.msra.mxu0 %v1673
        %1706 = vmatprep.subr.mxu0 0.0
        %1707 = vmatpush1.msra.mxu0 %v1672
        %1708 = vmatprep.subr.mxu0 0.0
        %1709 = vmatpush2.msra.mxu0 0.0
        %1710 = vmatprep.subr.mxu0 0.0
        %1711 = vmatpush2.msra.mxu0 0.0
        %1712 = vmatprep.subr.mxu0 0.0
        %1713 = vmatpush2.msra.mxu0 0.0
        %1714 = vmatprep.subr.mxu0 0.0
        %1715 = vmatpush2.msra.mxu0 0.0
        %1716 = vmatprep.subr.mxu0 0.0
        %1717 = vmatpush2.msra.mxu0 0.0
        %1718 = vmatprep.subr.mxu0 0.0
        %1719 = vmatpush2.msra.mxu0 0.0
        %1720 = vmatprep.subr.mxu0 0.0
        %1721 = vmatpush2.msra.mxu0 0.0
        %1722 = vmatprep.subr.mxu0 0.0
        %1723 = vmatpush2.msra.mxu0 0.0
        %1724 = vmatprep.subr.mxu0 0.0
        %1725 = vmatpush2.msra.mxu0 0.0
        %1726 = vmatprep.subr.mxu0 0.0
        %1727 = vmatpush2.msra.mxu0 0.0
        %1728 = vmatprep.subr.mxu0 0.0
        %1729 = vmatpush2.msra.mxu0 0.0
        %1730 = vmatprep.subr.mxu0 0.0
        %1731 = vmatpush2.msra.mxu0 0.0
        %1732 = vmatprep.subr.mxu0 0.0
        %1733 = vmatpush2.msra.mxu0 0.0
        %1734 = vmatprep.subr.mxu0 0.0
        %1735 = vmatpush2.msra.mxu0 0.0
        %1736 = vmatprep.subr.mxu0 0.0
        %1737 = vmatpush2.msra.mxu0 0.0
        %1738 = vmatprep.subr.mxu0 0.0
        %1739 = vmatpush2.msra.mxu0 0.0
        %1740 = vmatprep.mubr.f32.mxu0 0.0
        %1741 = vmatmul.mubr.f32.gmra.mxu0 %v790
        %v1742 = vpop.f32.mrf.mxu0
        %v1743 = vadd.f32 0.0, %v1742
        %v1744 = vpop.f32.mrf.mxu0
        %1745 = vmatprep.mubr.f32.mxu0 0.0
        %1746 = vmatmul.mubr.f32.gmra.mxu0 %v793
        %v1747 = vpop.f32.mrf.mxu0
        %v1748 = vadd.f32 0.0, %v1747
        %v1749 = vpop.f32.mrf.mxu0
        %1750 = vdwg.mxu0
        %s1751 = scalar_lea.vmem %s718, 32
        %v1752 = vld [vmem:[%s1751] sm:$0xff]
        %v1753 = vld [vmem:[%s1751 + $0x8] sm:$0xff]
        %v1754 = vld [vmem:[%s1751 + $0x10] sm:$0xff]
        %v1755 = vld [vmem:[%s1751 + $0x18] sm:$0xff]
        %1756 = vmatprep.subr.mxu0 0.0
        %1757 = vmatpush1.msra.mxu0 0.0
        %1758 = vmatprep.subr.mxu0 0.0
        %1759 = vmatpush1.msra.mxu0 0.0
        %1760 = vmatprep.subr.mxu0 0.0
        %1761 = vmatpush1.msra.mxu0 0.0
        %1762 = vmatprep.subr.mxu0 0.0
        %1763 = vmatpush1.msra.mxu0 0.0
        %1764 = vmatprep.subr.mxu0 0.0
        %1765 = vmatpush1.msra.mxu0 0.0
        %1766 = vmatprep.subr.mxu0 0.0
        %1767 = vmatpush1.msra.mxu0 0.0
        %1768 = vmatprep.subr.mxu0 0.0
        %1769 = vmatpush1.msra.mxu0 0.0
        %1770 = vmatprep.subr.mxu0 0.0
        %1771 = vmatpush1.msra.mxu0 0.0
        %1772 = vmatprep.subr.mxu0 0.0
        %1773 = vmatpush1.msra.mxu0 0.0
        %1774 = vmatprep.subr.mxu0 0.0
        %1775 = vmatpush1.msra.mxu0 0.0
        %1776 = vmatprep.subr.mxu0 0.0
        %1777 = vmatpush1.msra.mxu0 0.0
        %1778 = vmatprep.subr.mxu0 0.0
        %1779 = vmatpush1.msra.mxu0 0.0
        %1780 = vmatprep.subr.mxu0 0.0
        %1781 = vmatpush1.msra.mxu0 %v1755
        %1782 = vmatprep.subr.mxu0 0.0
        %1783 = vmatpush1.msra.mxu0 %v1754
        %1784 = vmatprep.subr.mxu0 0.0
        %1785 = vmatpush1.msra.mxu0 %v1753
        %1786 = vmatprep.subr.mxu0 0.0
        %1787 = vmatpush1.msra.mxu0 %v1752
        %1788 = vmatprep.subr.mxu0 0.0
        %1789 = vmatpush2.msra.mxu0 0.0
        %1790 = vmatprep.subr.mxu0 0.0
        %1791 = vmatpush2.msra.mxu0 0.0
        %1792 = vmatprep.subr.mxu0 0.0
        %1793 = vmatpush2.msra.mxu0 0.0
        %1794 = vmatprep.subr.mxu0 0.0
        %1795 = vmatpush2.msra.mxu0 0.0
        %1796 = vmatprep.subr.mxu0 0.0
        %1797 = vmatpush2.msra.mxu0 0.0
        %1798 = vmatprep.subr.mxu0 0.0
        %1799 = vmatpush2.msra.mxu0 0.0
        %1800 = vmatprep.subr.mxu0 0.0
        %1801 = vmatpush2.msra.mxu0 0.0
        %1802 = vmatprep.subr.mxu0 0.0
        %1803 = vmatpush2.msra.mxu0 0.0
        %1804 = vmatprep.subr.mxu0 0.0
        %1805 = vmatpush2.msra.mxu0 0.0
        %1806 = vmatprep.subr.mxu0 0.0
        %1807 = vmatpush2.msra.mxu0 0.0
        %1808 = vmatprep.subr.mxu0 0.0
        %1809 = vmatpush2.msra.mxu0 0.0
        %1810 = vmatprep.subr.mxu0 0.0
        %1811 = vmatpush2.msra.mxu0 0.0
        %1812 = vmatprep.subr.mxu0 0.0
        %1813 = vmatpush2.msra.mxu0 0.0
        %1814 = vmatprep.subr.mxu0 0.0
        %1815 = vmatpush2.msra.mxu0 0.0
        %1816 = vmatprep.subr.mxu0 0.0
        %1817 = vmatpush2.msra.mxu0 0.0
        %1818 = vmatprep.subr.mxu0 0.0
        %1819 = vmatpush2.msra.mxu0 0.0
        %1820 = vmatprep.mubr.f32.mxu0 0.0
        %1821 = vmatmul.mubr.f32.gmra.mxu0 %v790
        %v1822 = vpop.f32.mrf.mxu0
        %v1823 = vadd.f32 0.0, %v1822
        %v1824 = vpop.f32.mrf.mxu0
        %1825 = vmatprep.mubr.f32.mxu0 0.0
        %1826 = vmatmul.mubr.f32.gmra.mxu0 %v793
        %v1827 = vpop.f32.mrf.mxu0
        %v1828 = vadd.f32 0.0, %v1827
        %v1829 = vpop.f32.mrf.mxu0
        %1830 = vdwg.mxu0
        %s1831 = scalar_lea.vmem %s723, 32
        %v1832 = vld [vmem:[%s1831] sm:$0xff]
        %v1833 = vld [vmem:[%s1831 + $0x8] sm:$0xff]
        %v1834 = vld [vmem:[%s1831 + $0x10] sm:$0xff]
        %v1835 = vld [vmem:[%s1831 + $0x18] sm:$0xff]
        %1836 = vmatprep.subr.mxu0 0.0
        %1837 = vmatpush1.msra.mxu0 0.0
        %1838 = vmatprep.subr.mxu0 0.0
        %1839 = vmatpush1.msra.mxu0 0.0
        %1840 = vmatprep.subr.mxu0 0.0
        %1841 = vmatpush1.msra.mxu0 0.0
        %1842 = vmatprep.subr.mxu0 0.0
        %1843 = vmatpush1.msra.mxu0 0.0
        %1844 = vmatprep.subr.mxu0 0.0
        %1845 = vmatpush1.msra.mxu0 0.0
        %1846 = vmatprep.subr.mxu0 0.0
        %1847 = vmatpush1.msra.mxu0 0.0
        %1848 = vmatprep.subr.mxu0 0.0
        %1849 = vmatpush1.msra.mxu0 0.0
        %1850 = vmatprep.subr.mxu0 0.0
        %1851 = vmatpush1.msra.mxu0 0.0
        %1852 = vmatprep.subr.mxu0 0.0
        %1853 = vmatpush1.msra.mxu0 0.0
        %1854 = vmatprep.subr.mxu0 0.0
        %1855 = vmatpush1.msra.mxu0 0.0
        %1856 = vmatprep.subr.mxu0 0.0
        %1857 = vmatpush1.msra.mxu0 0.0
        %1858 = vmatprep.subr.mxu0 0.0
        %1859 = vmatpush1.msra.mxu0 0.0
        %1860 = vmatprep.subr.mxu0 0.0
        %1861 = vmatpush1.msra.mxu0 %v1835
        %1862 = vmatprep.subr.mxu0 0.0
        %1863 = vmatpush1.msra.mxu0 %v1834
        %1864 = vmatprep.subr.mxu0 0.0
        %1865 = vmatpush1.msra.mxu0 %v1833
        %1866 = vmatprep.subr.mxu0 0.0
        %1867 = vmatpush1.msra.mxu0 %v1832
        %1868 = vmatprep.subr.mxu0 0.0
        %1869 = vmatpush2.msra.mxu0 0.0
        %1870 = vmatprep.subr.mxu0 0.0
        %1871 = vmatpush2.msra.mxu0 0.0
        %1872 = vmatprep.subr.mxu0 0.0
        %1873 = vmatpush2.msra.mxu0 0.0
        %1874 = vmatprep.subr.mxu0 0.0
        %1875 = vmatpush2.msra.mxu0 0.0
        %1876 = vmatprep.subr.mxu0 0.0
        %1877 = vmatpush2.msra.mxu0 0.0
        %1878 = vmatprep.subr.mxu0 0.0
        %1879 = vmatpush2.msra.mxu0 0.0
        %1880 = vmatprep.subr.mxu0 0.0
        %1881 = vmatpush2.msra.mxu0 0.0
        %1882 = vmatprep.subr.mxu0 0.0
        %1883 = vmatpush2.msra.mxu0 0.0
        %1884 = vmatprep.subr.mxu0 0.0
        %1885 = vmatpush2.msra.mxu0 0.0
        %1886 = vmatprep.subr.mxu0 0.0
        %1887 = vmatpush2.msra.mxu0 0.0
        %1888 = vmatprep.subr.mxu0 0.0
        %1889 = vmatpush2.msra.mxu0 0.0
        %1890 = vmatprep.subr.mxu0 0.0
        %1891 = vmatpush2.msra.mxu0 0.0
        %1892 = vmatprep.subr.mxu0 0.0
        %1893 = vmatpush2.msra.mxu0 0.0
        %1894 = vmatprep.subr.mxu0 0.0
        %1895 = vmatpush2.msra.mxu0 0.0
        %1896 = vmatprep.subr.mxu0 0.0
        %1897 = vmatpush2.msra.mxu0 0.0
        %1898 = vmatprep.subr.mxu0 0.0
        %1899 = vmatpush2.msra.mxu0 0.0
        %1900 = vmatprep.mubr.f32.mxu0 0.0
        %1901 = vmatmul.mubr.f32.gmra.mxu0 %v790
        %v1902 = vpop.f32.mrf.mxu0
        %v1903 = vadd.f32 0.0, %v1902
        %v1904 = vpop.f32.mrf.mxu0
        %1905 = vmatprep.mubr.f32.mxu0 0.0
        %1906 = vmatmul.mubr.f32.gmra.mxu0 %v793
        %v1907 = vpop.f32.mrf.mxu0
        %v1908 = vadd.f32 0.0, %v1907
        %v1909 = vpop.f32.mrf.mxu0
        %1910 = vdwg.mxu0
        %s1911 = scalar_lea.vmem %s728, 32
        %v1912 = vld [vmem:[%s1911] sm:$0xff]
        %v1913 = vld [vmem:[%s1911 + $0x8] sm:$0xff]
        %v1914 = vld [vmem:[%s1911 + $0x10] sm:$0xff]
        %v1915 = vld [vmem:[%s1911 + $0x18] sm:$0xff]
        %1916 = vmatprep.subr.mxu0 0.0
        %1917 = vmatpush1.msra.mxu0 0.0
        %1918 = vmatprep.subr.mxu0 0.0
        %1919 = vmatpush1.msra.mxu0 0.0
        %1920 = vmatprep.subr.mxu0 0.0
        %1921 = vmatpush1.msra.mxu0 0.0
        %1922 = vmatprep.subr.mxu0 0.0
        %1923 = vmatpush1.msra.mxu0 0.0
        %1924 = vmatprep.subr.mxu0 0.0
        %1925 = vmatpush1.msra.mxu0 0.0
        %1926 = vmatprep.subr.mxu0 0.0
        %1927 = vmatpush1.msra.mxu0 0.0
        %1928 = vmatprep.subr.mxu0 0.0
        %1929 = vmatpush1.msra.mxu0 0.0
        %1930 = vmatprep.subr.mxu0 0.0
        %1931 = vmatpush1.msra.mxu0 0.0
        %1932 = vmatprep.subr.mxu0 0.0
        %1933 = vmatpush1.msra.mxu0 0.0
        %1934 = vmatprep.subr.mxu0 0.0
        %1935 = vmatpush1.msra.mxu0 0.0
        %1936 = vmatprep.subr.mxu0 0.0
        %1937 = vmatpush1.msra.mxu0 0.0
        %1938 = vmatprep.subr.mxu0 0.0
        %1939 = vmatpush1.msra.mxu0 0.0
        %1940 = vmatprep.subr.mxu0 0.0
        %1941 = vmatpush1.msra.mxu0 %v1915
        %1942 = vmatprep.subr.mxu0 0.0
        %1943 = vmatpush1.msra.mxu0 %v1914
        %1944 = vmatprep.subr.mxu0 0.0
        %1945 = vmatpush1.msra.mxu0 %v1913
        %1946 = vmatprep.subr.mxu0 0.0
        %1947 = vmatpush1.msra.mxu0 %v1912
        %1948 = vmatprep.subr.mxu0 0.0
        %1949 = vmatpush2.msra.mxu0 0.0
        %1950 = vmatprep.subr.mxu0 0.0
        %1951 = vmatpush2.msra.mxu0 0.0
        %1952 = vmatprep.subr.mxu0 0.0
        %1953 = vmatpush2.msra.mxu0 0.0
        %1954 = vmatprep.subr.mxu0 0.0
        %1955 = vmatpush2.msra.mxu0 0.0
        %1956 = vmatprep.subr.mxu0 0.0
        %1957 = vmatpush2.msra.mxu0 0.0
        %1958 = vmatprep.subr.mxu0 0.0
        %1959 = vmatpush2.msra.mxu0 0.0
        %1960 = vmatprep.subr.mxu0 0.0
        %1961 = vmatpush2.msra.mxu0 0.0
        %1962 = vmatprep.subr.mxu0 0.0
        %1963 = vmatpush2.msra.mxu0 0.0
        %1964 = vmatprep.subr.mxu0 0.0
        %1965 = vmatpush2.msra.mxu0 0.0
        %1966 = vmatprep.subr.mxu0 0.0
        %1967 = vmatpush2.msra.mxu0 0.0
        %1968 = vmatprep.subr.mxu0 0.0
        %1969 = vmatpush2.msra.mxu0 0.0
        %1970 = vmatprep.subr.mxu0 0.0
        %1971 = vmatpush2.msra.mxu0 0.0
        %1972 = vmatprep.subr.mxu0 0.0
        %1973 = vmatpush2.msra.mxu0 0.0
        %1974 = vmatprep.subr.mxu0 0.0
        %1975 = vmatpush2.msra.mxu0 0.0
        %1976 = vmatprep.subr.mxu0 0.0
        %1977 = vmatpush2.msra.mxu0 0.0
        %1978 = vmatprep.subr.mxu0 0.0
        %1979 = vmatpush2.msra.mxu0 0.0
        %1980 = vmatprep.mubr.f32.mxu0 0.0
        %1981 = vmatmul.mubr.f32.gmra.mxu0 %v1033
        %v1982 = vpop.f32.mrf.mxu0
        %v1983 = vadd.f32 0.0, %v1982
        %v1984 = vpop.f32.mrf.mxu0
        %1985 = vmatprep.mubr.f32.mxu0 0.0
        %1986 = vmatmul.mubr.f32.gmra.mxu0 %v1036
        %v1987 = vpop.f32.mrf.mxu0
        %v1988 = vadd.f32 0.0, %v1987
        %v1989 = vpop.f32.mrf.mxu0
        %1990 = vdwg.mxu0
        %s1991 = scalar_lea.vmem %s733, 32
        %v1992 = vld [vmem:[%s1991] sm:$0xff]
        %v1993 = vld [vmem:[%s1991 + $0x8] sm:$0xff]
        %v1994 = vld [vmem:[%s1991 + $0x10] sm:$0xff]
        %v1995 = vld [vmem:[%s1991 + $0x18] sm:$0xff]
        %1996 = vmatprep.subr.mxu0 0.0
        %1997 = vmatpush1.msra.mxu0 0.0
        %1998 = vmatprep.subr.mxu0 0.0
        %1999 = vmatpush1.msra.mxu0 0.0
        %2000 = vmatprep.subr.mxu0 0.0
        %2001 = vmatpush1.msra.mxu0 0.0
        %2002 = vmatprep.subr.mxu0 0.0
        %2003 = vmatpush1.msra.mxu0 0.0
        %2004 = vmatprep.subr.mxu0 0.0
        %2005 = vmatpush1.msra.mxu0 0.0
        %2006 = vmatprep.subr.mxu0 0.0
        %2007 = vmatpush1.msra.mxu0 0.0
        %2008 = vmatprep.subr.mxu0 0.0
        %2009 = vmatpush1.msra.mxu0 0.0
        %2010 = vmatprep.subr.mxu0 0.0
        %2011 = vmatpush1.msra.mxu0 0.0
        %2012 = vmatprep.subr.mxu0 0.0
        %2013 = vmatpush1.msra.mxu0 0.0
        %2014 = vmatprep.subr.mxu0 0.0
        %2015 = vmatpush1.msra.mxu0 0.0
        %2016 = vmatprep.subr.mxu0 0.0
        %2017 = vmatpush1.msra.mxu0 0.0
        %2018 = vmatprep.subr.mxu0 0.0
        %2019 = vmatpush1.msra.mxu0 0.0
        %2020 = vmatprep.subr.mxu0 0.0
        %2021 = vmatpush1.msra.mxu0 %v1995
        %2022 = vmatprep.subr.mxu0 0.0
        %2023 = vmatpush1.msra.mxu0 %v1994
        %2024 = vmatprep.subr.mxu0 0.0
        %2025 = vmatpush1.msra.mxu0 %v1993
        %2026 = vmatprep.subr.mxu0 0.0
        %2027 = vmatpush1.msra.mxu0 %v1992
        %2028 = vmatprep.subr.mxu0 0.0
        %2029 = vmatpush2.msra.mxu0 0.0
        %2030 = vmatprep.subr.mxu0 0.0
        %2031 = vmatpush2.msra.mxu0 0.0
        %2032 = vmatprep.subr.mxu0 0.0
        %2033 = vmatpush2.msra.mxu0 0.0
        %2034 = vmatprep.subr.mxu0 0.0
        %2035 = vmatpush2.msra.mxu0 0.0
        %2036 = vmatprep.subr.mxu0 0.0
        %2037 = vmatpush2.msra.mxu0 0.0
        %2038 = vmatprep.subr.mxu0 0.0
        %2039 = vmatpush2.msra.mxu0 0.0
        %2040 = vmatprep.subr.mxu0 0.0
        %2041 = vmatpush2.msra.mxu0 0.0
        %2042 = vmatprep.subr.mxu0 0.0
        %2043 = vmatpush2.msra.mxu0 0.0
        %2044 = vmatprep.subr.mxu0 0.0
        %2045 = vmatpush2.msra.mxu0 0.0
        %2046 = vmatprep.subr.mxu0 0.0
        %2047 = vmatpush2.msra.mxu0 0.0
        %2048 = vmatprep.subr.mxu0 0.0
        %2049 = vmatpush2.msra.mxu0 0.0
        %2050 = vmatprep.subr.mxu0 0.0
        %2051 = vmatpush2.msra.mxu0 0.0
        %2052 = vmatprep.subr.mxu0 0.0
        %2053 = vmatpush2.msra.mxu0 0.0
        %2054 = vmatprep.subr.mxu0 0.0
        %2055 = vmatpush2.msra.mxu0 0.0
        %2056 = vmatprep.subr.mxu0 0.0
        %2057 = vmatpush2.msra.mxu0 0.0
        %2058 = vmatprep.subr.mxu0 0.0
        %2059 = vmatpush2.msra.mxu0 0.0
        %2060 = vmatprep.mubr.f32.mxu0 0.0
        %2061 = vmatmul.mubr.f32.gmra.mxu0 %v1033
        %v2062 = vpop.f32.mrf.mxu0
        %v2063 = vadd.f32 0.0, %v2062
        %v2064 = vpop.f32.mrf.mxu0
        %2065 = vmatprep.mubr.f32.mxu0 0.0
        %2066 = vmatmul.mubr.f32.gmra.mxu0 %v1036
        %v2067 = vpop.f32.mrf.mxu0
        %v2068 = vadd.f32 0.0, %v2067
        %v2069 = vpop.f32.mrf.mxu0
        %2070 = vdwg.mxu0
        %v2072 = vsel %vm1192, %v1983, 0
        %v2075 = vsel %vm1192, %v2063, 0
        %2077 = vmatprep.subr.mxu0 0.0
        %2078 = vmatpush1.xpose.msra.mxu0 0.0
        %2079 = vmatprep.subr.mxu0 0.0
        %2080 = vmatpush1.xpose.msra.mxu0 0.0
        %2081 = vmatprep.subr.mxu0 0.0
        %2082 = vmatpush1.xpose.msra.mxu0 0.0
        %2083 = vmatprep.subr.mxu0 0.0
        %2084 = vmatpush1.xpose.msra.mxu0 0.0
        %2085 = vmatprep.subr.mxu0 0.0
        %2086 = vmatpush1.xpose.msra.mxu0 0.0
        %2087 = vmatprep.subr.mxu0 0.0
        %2088 = vmatpush1.xpose.msra.mxu0 0.0
        %2089 = vmatprep.subr.mxu0 0.0
        %2090 = vmatpush1.xpose.msra.mxu0 0.0
        %2091 = vmatprep.subr.mxu0 0.0
        %2092 = vmatpush1.xpose.msra.mxu0 0.0
        %2093 = vmatprep.subr.mxu0 0.0
        %2094 = vmatpush1.xpose.msra.mxu0 0.0
        %2095 = vmatprep.subr.mxu0 0.0
        %2096 = vmatpush1.xpose.msra.mxu0 0.0
        %2097 = vmatprep.subr.mxu0 0.0
        %2098 = vmatpush1.xpose.msra.mxu0 0.0
        %2099 = vmatprep.subr.mxu0 0.0
        %2100 = vmatpush1.xpose.msra.mxu0 0.0
        %2101 = vmatprep.subr.mxu0 0.0
        %2102 = vmatpush1.xpose.msra.mxu0 0.0
        %2103 = vmatprep.subr.mxu0 0.0
        %2104 = vmatpush1.xpose.msra.mxu0 0.0
        %2105 = vmatprep.subr.mxu0 0.0
        %2106 = vmatpush1.xpose.msra.mxu0 0.0
        %2107 = vmatprep.subr.mxu0 0.0
        %2108 = vmatpush1.xpose.msra.mxu0 %v2075
        %2109 = vmatprep.subr.mxu0 0.0
        %2110 = vmatpush2.xpose.msra.mxu0 0.0
        %2111 = vmatprep.subr.mxu0 0.0
        %2112 = vmatpush2.xpose.msra.mxu0 0.0
        %2113 = vmatprep.subr.mxu0 0.0
        %2114 = vmatpush2.xpose.msra.mxu0 0.0
        %2115 = vmatprep.subr.mxu0 0.0
        %2116 = vmatpush2.xpose.msra.mxu0 0.0
        %2117 = vmatprep.subr.mxu0 0.0
        %2118 = vmatpush2.xpose.msra.mxu0 0.0
        %2119 = vmatprep.subr.mxu0 0.0
        %2120 = vmatpush2.xpose.msra.mxu0 0.0
        %2121 = vmatprep.subr.mxu0 0.0
        %2122 = vmatpush2.xpose.msra.mxu0 0.0
        %2123 = vmatprep.subr.mxu0 0.0
        %2124 = vmatpush2.xpose.msra.mxu0 0.0
        %2125 = vmatprep.subr.mxu0 0.0
        %2126 = vmatpush2.xpose.msra.mxu0 0.0
        %2127 = vmatprep.subr.mxu0 0.0
        %2128 = vmatpush2.xpose.msra.mxu0 0.0
        %2129 = vmatprep.subr.mxu0 0.0
        %2130 = vmatpush2.xpose.msra.mxu0 0.0
        %2131 = vmatprep.subr.mxu0 0.0
        %2132 = vmatpush2.xpose.msra.mxu0 0.0
        %2133 = vmatprep.subr.mxu0 0.0
        %2134 = vmatpush2.xpose.msra.mxu0 0.0
        %2135 = vmatprep.subr.mxu0 0.0
        %2136 = vmatpush2.xpose.msra.mxu0 0.0
        %2137 = vmatprep.subr.mxu0 0.0
        %2138 = vmatpush2.xpose.msra.mxu0 0.0
        %2139 = vmatprep.subr.mxu0 0.0
        %2140 = vmatpush2.xpose.msra.mxu0 0.0
        %2141 = vmatprep.mubr.f32.mxu0 0.0
        %2142 = vmatmul.mubr.f32.gmra.mxu0 %v2072
        %v2143 = vpop.f32.mrf.mxu0
        %v2144 = vadd.f32 0.0, %v2143
        %v2145 = vpop.f32.mrf.mxu0
        %2146 = vdwg.mxu0
        %v2148 = vsel %vm1192, %v1988, 0
        %v2151 = vsel %vm1192, %v2068, 0
        %2153 = vmatprep.subr.mxu0 0.0
        %2154 = vmatpush1.xpose.msra.mxu0 0.0
        %2155 = vmatprep.subr.mxu0 0.0
        %2156 = vmatpush1.xpose.msra.mxu0 0.0
        %2157 = vmatprep.subr.mxu0 0.0
        %2158 = vmatpush1.xpose.msra.mxu0 0.0
        %2159 = vmatprep.subr.mxu0 0.0
        %2160 = vmatpush1.xpose.msra.mxu0 0.0
        %2161 = vmatprep.subr.mxu0 0.0
        %2162 = vmatpush1.xpose.msra.mxu0 0.0
        %2163 = vmatprep.subr.mxu0 0.0
        %2164 = vmatpush1.xpose.msra.mxu0 0.0
        %2165 = vmatprep.subr.mxu0 0.0
        %2166 = vmatpush1.xpose.msra.mxu0 0.0
        %2167 = vmatprep.subr.mxu0 0.0
        %2168 = vmatpush1.xpose.msra.mxu0 0.0
        %2169 = vmatprep.subr.mxu0 0.0
        %2170 = vmatpush1.xpose.msra.mxu0 0.0
        %2171 = vmatprep.subr.mxu0 0.0
        %2172 = vmatpush1.xpose.msra.mxu0 0.0
        %2173 = vmatprep.subr.mxu0 0.0
        %2174 = vmatpush1.xpose.msra.mxu0 0.0
        %2175 = vmatprep.subr.mxu0 0.0
        %2176 = vmatpush1.xpose.msra.mxu0 0.0
        %2177 = vmatprep.subr.mxu0 0.0
        %2178 = vmatpush1.xpose.msra.mxu0 0.0
        %2179 = vmatprep.subr.mxu0 0.0
        %2180 = vmatpush1.xpose.msra.mxu0 0.0
        %2181 = vmatprep.subr.mxu0 0.0
        %2182 = vmatpush1.xpose.msra.mxu0 0.0
        %2183 = vmatprep.subr.mxu0 0.0
        %2184 = vmatpush1.xpose.msra.mxu0 %v2151
        %2185 = vmatprep.subr.mxu0 0.0
        %2186 = vmatpush2.xpose.msra.mxu0 0.0
        %2187 = vmatprep.subr.mxu0 0.0
        %2188 = vmatpush2.xpose.msra.mxu0 0.0
        %2189 = vmatprep.subr.mxu0 0.0
        %2190 = vmatpush2.xpose.msra.mxu0 0.0
        %2191 = vmatprep.subr.mxu0 0.0
        %2192 = vmatpush2.xpose.msra.mxu0 0.0
        %2193 = vmatprep.subr.mxu0 0.0
        %2194 = vmatpush2.xpose.msra.mxu0 0.0
        %2195 = vmatprep.subr.mxu0 0.0
        %2196 = vmatpush2.xpose.msra.mxu0 0.0
        %2197 = vmatprep.subr.mxu0 0.0
        %2198 = vmatpush2.xpose.msra.mxu0 0.0
        %2199 = vmatprep.subr.mxu0 0.0
        %2200 = vmatpush2.xpose.msra.mxu0 0.0
        %2201 = vmatprep.subr.mxu0 0.0
        %2202 = vmatpush2.xpose.msra.mxu0 0.0
        %2203 = vmatprep.subr.mxu0 0.0
        %2204 = vmatpush2.xpose.msra.mxu0 0.0
        %2205 = vmatprep.subr.mxu0 0.0
        %2206 = vmatpush2.xpose.msra.mxu0 0.0
        %2207 = vmatprep.subr.mxu0 0.0
        %2208 = vmatpush2.xpose.msra.mxu0 0.0
        %2209 = vmatprep.subr.mxu0 0.0
        %2210 = vmatpush2.xpose.msra.mxu0 0.0
        %2211 = vmatprep.subr.mxu0 0.0
        %2212 = vmatpush2.xpose.msra.mxu0 0.0
        %2213 = vmatprep.subr.mxu0 0.0
        %2214 = vmatpush2.xpose.msra.mxu0 0.0
        %2215 = vmatprep.subr.mxu0 0.0
        %2216 = vmatpush2.xpose.msra.mxu0 0.0
        %2217 = vmatprep.mubr.f32.mxu0 0.0
        %2218 = vmatmul.mubr.f32.gmra.mxu0 %v2148
        %v2219 = vpop.f32.mrf.mxu0
        %v2220 = vadd.f32 0.0, %v2219
        %v2221 = vpop.f32.mrf.mxu0
        %2222 = vdwg.mxu0
        %v2224 = vsel %vm1192, %v1743, 0
        %v2227 = vsel %vm1192, %v1823, 0
        %2229 = vmatprep.subr.mxu0 0.0
        %2230 = vmatpush1.xpose.msra.mxu0 0.0
        %2231 = vmatprep.subr.mxu0 0.0
        %2232 = vmatpush1.xpose.msra.mxu0 0.0
        %2233 = vmatprep.subr.mxu0 0.0
        %2234 = vmatpush1.xpose.msra.mxu0 0.0
        %2235 = vmatprep.subr.mxu0 0.0
        %2236 = vmatpush1.xpose.msra.mxu0 0.0
        %2237 = vmatprep.subr.mxu0 0.0
        %2238 = vmatpush1.xpose.msra.mxu0 0.0
        %2239 = vmatprep.subr.mxu0 0.0
        %2240 = vmatpush1.xpose.msra.mxu0 0.0
        %2241 = vmatprep.subr.mxu0 0.0
        %2242 = vmatpush1.xpose.msra.mxu0 0.0
        %2243 = vmatprep.subr.mxu0 0.0
        %2244 = vmatpush1.xpose.msra.mxu0 0.0
        %2245 = vmatprep.subr.mxu0 0.0
        %2246 = vmatpush1.xpose.msra.mxu0 0.0
        %2247 = vmatprep.subr.mxu0 0.0
        %2248 = vmatpush1.xpose.msra.mxu0 0.0
        %2249 = vmatprep.subr.mxu0 0.0
        %2250 = vmatpush1.xpose.msra.mxu0 0.0
        %2251 = vmatprep.subr.mxu0 0.0
        %2252 = vmatpush1.xpose.msra.mxu0 0.0
        %2253 = vmatprep.subr.mxu0 0.0
        %2254 = vmatpush1.xpose.msra.mxu0 0.0
        %2255 = vmatprep.subr.mxu0 0.0
        %2256 = vmatpush1.xpose.msra.mxu0 0.0
        %2257 = vmatprep.subr.mxu0 0.0
        %2258 = vmatpush1.xpose.msra.mxu0 0.0
        %2259 = vmatprep.subr.mxu0 0.0
        %2260 = vmatpush1.xpose.msra.mxu0 %v2227
        %2261 = vmatprep.subr.mxu0 0.0
        %2262 = vmatpush2.xpose.msra.mxu0 0.0
        %2263 = vmatprep.subr.mxu0 0.0
        %2264 = vmatpush2.xpose.msra.mxu0 0.0
        %2265 = vmatprep.subr.mxu0 0.0
        %2266 = vmatpush2.xpose.msra.mxu0 0.0
        %2267 = vmatprep.subr.mxu0 0.0
        %2268 = vmatpush2.xpose.msra.mxu0 0.0
        %2269 = vmatprep.subr.mxu0 0.0
        %2270 = vmatpush2.xpose.msra.mxu0 0.0
        %2271 = vmatprep.subr.mxu0 0.0
        %2272 = vmatpush2.xpose.msra.mxu0 0.0
        %2273 = vmatprep.subr.mxu0 0.0
        %2274 = vmatpush2.xpose.msra.mxu0 0.0
        %2275 = vmatprep.subr.mxu0 0.0
        %2276 = vmatpush2.xpose.msra.mxu0 0.0
        %2277 = vmatprep.subr.mxu0 0.0
        %2278 = vmatpush2.xpose.msra.mxu0 0.0
        %2279 = vmatprep.subr.mxu0 0.0
        %2280 = vmatpush2.xpose.msra.mxu0 0.0
        %2281 = vmatprep.subr.mxu0 0.0
        %2282 = vmatpush2.xpose.msra.mxu0 0.0
        %2283 = vmatprep.subr.mxu0 0.0
        %2284 = vmatpush2.xpose.msra.mxu0 0.0
        %2285 = vmatprep.subr.mxu0 0.0
        %2286 = vmatpush2.xpose.msra.mxu0 0.0
        %2287 = vmatprep.subr.mxu0 0.0
        %2288 = vmatpush2.xpose.msra.mxu0 0.0
        %2289 = vmatprep.subr.mxu0 0.0
        %2290 = vmatpush2.xpose.msra.mxu0 0.0
        %2291 = vmatprep.subr.mxu0 0.0
        %2292 = vmatpush2.xpose.msra.mxu0 0.0
        %2293 = vmatprep.mubr.f32.mxu0 0.0
        %2294 = vmatmul.mubr.f32.gmra.mxu0 %v2224
        %v2295 = vpop.f32.mrf.mxu0
        %v2296 = vadd.f32 %v2144, %v2295
        %v2297 = vpop.f32.mrf.mxu0
        %2298 = vdwg.mxu0
        %v2300 = vsel %vm1192, %v1748, 0
        %v2303 = vsel %vm1192, %v1828, 0
        %2305 = vmatprep.subr.mxu0 0.0
        %2306 = vmatpush1.xpose.msra.mxu0 0.0
        %2307 = vmatprep.subr.mxu0 0.0
        %2308 = vmatpush1.xpose.msra.mxu0 0.0
        %2309 = vmatprep.subr.mxu0 0.0
        %2310 = vmatpush1.xpose.msra.mxu0 0.0
        %2311 = vmatprep.subr.mxu0 0.0
        %2312 = vmatpush1.xpose.msra.mxu0 0.0
        %2313 = vmatprep.subr.mxu0 0.0
        %2314 = vmatpush1.xpose.msra.mxu0 0.0
        %2315 = vmatprep.subr.mxu0 0.0
        %2316 = vmatpush1.xpose.msra.mxu0 0.0
        %2317 = vmatprep.subr.mxu0 0.0
        %2318 = vmatpush1.xpose.msra.mxu0 0.0
        %2319 = vmatprep.subr.mxu0 0.0
        %2320 = vmatpush1.xpose.msra.mxu0 0.0
        %2321 = vmatprep.subr.mxu0 0.0
        %2322 = vmatpush1.xpose.msra.mxu0 0.0
        %2323 = vmatprep.subr.mxu0 0.0
        %2324 = vmatpush1.xpose.msra.mxu0 0.0
        %2325 = vmatprep.subr.mxu0 0.0
        %2326 = vmatpush1.xpose.msra.mxu0 0.0
        %2327 = vmatprep.subr.mxu0 0.0
        %2328 = vmatpush1.xpose.msra.mxu0 0.0
        %2329 = vmatprep.subr.mxu0 0.0
        %2330 = vmatpush1.xpose.msra.mxu0 0.0
        %2331 = vmatprep.subr.mxu0 0.0
        %2332 = vmatpush1.xpose.msra.mxu0 0.0
        %2333 = vmatprep.subr.mxu0 0.0
        %2334 = vmatpush1.xpose.msra.mxu0 0.0
        %2335 = vmatprep.subr.mxu0 0.0
        %2336 = vmatpush1.xpose.msra.mxu0 %v2303
        %2337 = vmatprep.subr.mxu0 0.0
        %2338 = vmatpush2.xpose.msra.mxu0 0.0
        %2339 = vmatprep.subr.mxu0 0.0
        %2340 = vmatpush2.xpose.msra.mxu0 0.0
        %2341 = vmatprep.subr.mxu0 0.0
        %2342 = vmatpush2.xpose.msra.mxu0 0.0
        %2343 = vmatprep.subr.mxu0 0.0
        %2344 = vmatpush2.xpose.msra.mxu0 0.0
        %2345 = vmatprep.subr.mxu0 0.0
        %2346 = vmatpush2.xpose.msra.mxu0 0.0
        %2347 = vmatprep.subr.mxu0 0.0
        %2348 = vmatpush2.xpose.msra.mxu0 0.0
        %2349 = vmatprep.subr.mxu0 0.0
        %2350 = vmatpush2.xpose.msra.mxu0 0.0
        %2351 = vmatprep.subr.mxu0 0.0
        %2352 = vmatpush2.xpose.msra.mxu0 0.0
        %2353 = vmatprep.subr.mxu0 0.0
        %2354 = vmatpush2.xpose.msra.mxu0 0.0
        %2355 = vmatprep.subr.mxu0 0.0
        %2356 = vmatpush2.xpose.msra.mxu0 0.0
        %2357 = vmatprep.subr.mxu0 0.0
        %2358 = vmatpush2.xpose.msra.mxu0 0.0
        %2359 = vmatprep.subr.mxu0 0.0
        %2360 = vmatpush2.xpose.msra.mxu0 0.0
        %2361 = vmatprep.subr.mxu0 0.0
        %2362 = vmatpush2.xpose.msra.mxu0 0.0
        %2363 = vmatprep.subr.mxu0 0.0
        %2364 = vmatpush2.xpose.msra.mxu0 0.0
        %2365 = vmatprep.subr.mxu0 0.0
        %2366 = vmatpush2.xpose.msra.mxu0 0.0
        %2367 = vmatprep.subr.mxu0 0.0
        %2368 = vmatpush2.xpose.msra.mxu0 0.0
        %2369 = vmatprep.mubr.f32.mxu0 0.0
        %2370 = vmatmul.mubr.f32.gmra.mxu0 %v2300
        %v2371 = vpop.f32.mrf.mxu0
        %v2372 = vadd.f32 %v2220, %v2371
        %v2373 = vpop.f32.mrf.mxu0
        %2374 = vdwg.mxu0
        %v2375 = vmul.f32 %v2296, 0.25
        %v2376 = vmul.f32 %v2372, 0.25
        %s2377 = scalar_lea.vmem %s2, 8
        %v2378 = vld [vmem:[%s2377] sm:$0xff]
        %v2379 = vadd.f32 %v2375, %v2378
        %v2380 = vadd.f32 %v2376, %v2378
        %v2381 = vsel %vm1192, %v2379, -inf
        %2382 = vmax.xlane.f32.xlu0 %v2381
        %v2383 = vpop.xlane.xlu0 %2382
        %v2384 = vsel %vm1192, %v2380, -inf
        %2385 = vmax.xlane.f32.xlu0 %v2384
        %v2386 = vpop.xlane.xlu0 %2385
        %v2387 = vsub.f32 %v2379, %v2383
        %v2388 = vsub.f32 %v2380, %v2386
        %v2389 = vmul.f32 %v2387, 1.442695
        %v2390 = vpow.pop %v2389
        %v2391 = vmul.f32 %v2388, 1.442695
        %v2392 = vpow.pop %v2391
        %v2393 = vsel %vm1192, %v2390, 0.0
        %2394 = vadd.xlane.f32.xlu0 %v2393
        %v2395 = vpop.xlane.xlu0 %2394
        %v2396 = vsel %vm1192, %v2392, 0.0
        %2397 = vadd.xlane.f32.xlu0 %v2396
        %v2398 = vpop.xlane.xlu0 %2397
        %v2399 = vrcp.pop %v2395
        %v2400 = vrcp.pop %v2398
        %v2401 = vmul.f32 %v2390, %v2399
        %v2402 = vmul.f32 %v2392, %v2400
        %v2404 = vsel %vm1192, %v2401, 0
        %2406 = vmatprep.subr.mxu0 0.0
        %2407 = vmatpush1.msra.mxu0 0.0
        %2408 = vmatprep.subr.mxu0 0.0
        %2409 = vmatpush1.msra.mxu0 0.0
        %2410 = vmatprep.subr.mxu0 0.0
        %2411 = vmatpush1.msra.mxu0 0.0
        %2412 = vmatprep.subr.mxu0 0.0
        %2413 = vmatpush1.msra.mxu0 0.0
        %2414 = vmatprep.subr.mxu0 0.0
        %2415 = vmatpush1.msra.mxu0 0.0
        %2416 = vmatprep.subr.mxu0 0.0
        %2417 = vmatpush1.msra.mxu0 0.0
        %2418 = vmatprep.subr.mxu0 0.0
        %2419 = vmatpush1.msra.mxu0 0.0
        %2420 = vmatprep.subr.mxu0 0.0
        %2421 = vmatpush1.msra.mxu0 0.0
        %2422 = vmatprep.subr.mxu0 0.0
        %2423 = vmatpush1.msra.mxu0 0.0
        %2424 = vmatprep.subr.mxu0 0.0
        %2425 = vmatpush1.msra.mxu0 0.0
        %2426 = vmatprep.subr.mxu0 0.0
        %2427 = vmatpush1.msra.mxu0 0.0
        %2428 = vmatprep.subr.mxu0 0.0
        %2429 = vmatpush1.msra.mxu0 0.0
        %2430 = vmatprep.subr.mxu0 0.0
        %2431 = vmatpush1.msra.mxu0 0.0
        %2432 = vmatprep.subr.mxu0 0.0
        %2433 = vmatpush1.msra.mxu0 0.0
        %2434 = vmatprep.subr.mxu0 0.0
        %2435 = vmatpush1.msra.mxu0 0.0
        %2436 = vmatprep.subr.mxu0 0.0
        %2437 = vmatpush1.msra.mxu0 %v1903
        %2438 = vmatprep.subr.mxu0 0.0
        %2439 = vmatpush2.msra.mxu0 0.0
        %2440 = vmatprep.subr.mxu0 0.0
        %2441 = vmatpush2.msra.mxu0 0.0
        %2442 = vmatprep.subr.mxu0 0.0
        %2443 = vmatpush2.msra.mxu0 0.0
        %2444 = vmatprep.subr.mxu0 0.0
        %2445 = vmatpush2.msra.mxu0 0.0
        %2446 = vmatprep.subr.mxu0 0.0
        %2447 = vmatpush2.msra.mxu0 0.0
        %2448 = vmatprep.subr.mxu0 0.0
        %2449 = vmatpush2.msra.mxu0 0.0
        %2450 = vmatprep.subr.mxu0 0.0
        %2451 = vmatpush2.msra.mxu0 0.0
        %2452 = vmatprep.subr.mxu0 0.0
        %2453 = vmatpush2.msra.mxu0 0.0
        %2454 = vmatprep.subr.mxu0 0.0
        %2455 = vmatpush2.msra.mxu0 0.0
        %2456 = vmatprep.subr.mxu0 0.0
        %2457 = vmatpush2.msra.mxu0 0.0
        %2458 = vmatprep.subr.mxu0 0.0
        %2459 = vmatpush2.msra.mxu0 0.0
        %2460 = vmatprep.subr.mxu0 0.0
        %2461 = vmatpush2.msra.mxu0 0.0
        %2462 = vmatprep.subr.mxu0 0.0
        %2463 = vmatpush2.msra.mxu0 0.0
        %2464 = vmatprep.subr.mxu0 0.0
        %2465 = vmatpush2.msra.mxu0 0.0
        %2466 = vmatprep.subr.mxu0 0.0
        %2467 = vmatpush2.msra.mxu0 0.0
        %2468 = vmatprep.subr.mxu0 0.0
        %2469 = vmatpush2.msra.mxu0 0.0
        %2470 = vmatprep.mubr.f32.mxu0 0.0
        %2471 = vmatmul.mubr.f32.gmra.mxu0 %v2404
        %v2472 = vpop.f32.mrf.mxu0
        %v2473 = vadd.f32 0.0, %v2472
        %v2474 = vpop.f32.mrf.mxu0
        %2475 = vdwg.mxu0
        %v2477 = vsel %vm1192, %v2402, 0
        %2479 = vmatprep.subr.mxu0 0.0
        %2480 = vmatpush1.msra.mxu0 0.0
        %2481 = vmatprep.subr.mxu0 0.0
        %2482 = vmatpush1.msra.mxu0 0.0
        %2483 = vmatprep.subr.mxu0 0.0
        %2484 = vmatpush1.msra.mxu0 0.0
        %2485 = vmatprep.subr.mxu0 0.0
        %2486 = vmatpush1.msra.mxu0 0.0
        %2487 = vmatprep.subr.mxu0 0.0
        %2488 = vmatpush1.msra.mxu0 0.0
        %2489 = vmatprep.subr.mxu0 0.0
        %2490 = vmatpush1.msra.mxu0 0.0
        %2491 = vmatprep.subr.mxu0 0.0
        %2492 = vmatpush1.msra.mxu0 0.0
        %2493 = vmatprep.subr.mxu0 0.0
        %2494 = vmatpush1.msra.mxu0 0.0
        %2495 = vmatprep.subr.mxu0 0.0
        %2496 = vmatpush1.msra.mxu0 0.0
        %2497 = vmatprep.subr.mxu0 0.0
        %2498 = vmatpush1.msra.mxu0 0.0
        %2499 = vmatprep.subr.mxu0 0.0
        %2500 = vmatpush1.msra.mxu0 0.0
        %2501 = vmatprep.subr.mxu0 0.0
        %2502 = vmatpush1.msra.mxu0 0.0
        %2503 = vmatprep.subr.mxu0 0.0
        %2504 = vmatpush1.msra.mxu0 0.0
        %2505 = vmatprep.subr.mxu0 0.0
        %2506 = vmatpush1.msra.mxu0 0.0
        %2507 = vmatprep.subr.mxu0 0.0
        %2508 = vmatpush1.msra.mxu0 0.0
        %2509 = vmatprep.subr.mxu0 0.0
        %2510 = vmatpush1.msra.mxu0 %v1908
        %2511 = vmatprep.subr.mxu0 0.0
        %2512 = vmatpush2.msra.mxu0 0.0
        %2513 = vmatprep.subr.mxu0 0.0
        %2514 = vmatpush2.msra.mxu0 0.0
        %2515 = vmatprep.subr.mxu0 0.0
        %2516 = vmatpush2.msra.mxu0 0.0
        %2517 = vmatprep.subr.mxu0 0.0
        %2518 = vmatpush2.msra.mxu0 0.0
        %2519 = vmatprep.subr.mxu0 0.0
        %2520 = vmatpush2.msra.mxu0 0.0
        %2521 = vmatprep.subr.mxu0 0.0
        %2522 = vmatpush2.msra.mxu0 0.0
        %2523 = vmatprep.subr.mxu0 0.0
        %2524 = vmatpush2.msra.mxu0 0.0
        %2525 = vmatprep.subr.mxu0 0.0
        %2526 = vmatpush2.msra.mxu0 0.0
        %2527 = vmatprep.subr.mxu0 0.0
        %2528 = vmatpush2.msra.mxu0 0.0
        %2529 = vmatprep.subr.mxu0 0.0
        %2530 = vmatpush2.msra.mxu0 0.0
        %2531 = vmatprep.subr.mxu0 0.0
        %2532 = vmatpush2.msra.mxu0 0.0
        %2533 = vmatprep.subr.mxu0 0.0
        %2534 = vmatpush2.msra.mxu0 0.0
        %2535 = vmatprep.subr.mxu0 0.0
        %2536 = vmatpush2.msra.mxu0 0.0
        %2537 = vmatprep.subr.mxu0 0.0
        %2538 = vmatpush2.msra.mxu0 0.0
        %2539 = vmatprep.subr.mxu0 0.0
        %2540 = vmatpush2.msra.mxu0 0.0
        %2541 = vmatprep.subr.mxu0 0.0
        %2542 = vmatpush2.msra.mxu0 0.0
        %2543 = vmatprep.mubr.f32.mxu0 0.0
        %2544 = vmatmul.mubr.f32.gmra.mxu0 %v2477
        %v2545 = vpop.f32.mrf.mxu0
        %v2546 = vadd.f32 0.0, %v2545
        %v2547 = vpop.f32.mrf.mxu0
        %2548 = vdwg.mxu0
        %s2549 = scalar_lea.vmem %s738, 8
        %v2550 = vld [vmem:[%s2549] sm:$0xff]
        %v2552 = vsel %vm1192, %v2473, 0
        %v2555 = vsel %vm1192, %v2546, 0
        %2557 = vmatprep.subr.mxu0 0.0
        %2558 = vmatpush1.msra.mxu0 0.0
        %2559 = vmatprep.subr.mxu0 0.0
        %2560 = vmatpush1.msra.mxu0 0.0
        %2561 = vmatprep.subr.mxu0 0.0
        %2562 = vmatpush1.msra.mxu0 0.0
        %2563 = vmatprep.subr.mxu0 0.0
        %2564 = vmatpush1.msra.mxu0 0.0
        %2565 = vmatprep.subr.mxu0 0.0
        %2566 = vmatpush1.msra.mxu0 0.0
        %2567 = vmatprep.subr.mxu0 0.0
        %2568 = vmatpush1.msra.mxu0 0.0
        %2569 = vmatprep.subr.mxu0 0.0
        %2570 = vmatpush1.msra.mxu0 0.0
        %2571 = vmatprep.subr.mxu0 0.0
        %2572 = vmatpush1.msra.mxu0 0.0
        %2573 = vmatprep.subr.mxu0 0.0
        %2574 = vmatpush1.msra.mxu0 0.0
        %2575 = vmatprep.subr.mxu0 0.0
        %2576 = vmatpush1.msra.mxu0 0.0
        %2577 = vmatprep.subr.mxu0 0.0
        %2578 = vmatpush1.msra.mxu0 0.0
        %2579 = vmatprep.subr.mxu0 0.0
        %2580 = vmatpush1.msra.mxu0 0.0
        %2581 = vmatprep.subr.mxu0 0.0
        %2582 = vmatpush1.msra.mxu0 0.0
        %2583 = vmatprep.subr.mxu0 0.0
        %2584 = vmatpush1.msra.mxu0 0.0
        %2585 = vmatprep.subr.mxu0 0.0
        %2586 = vmatpush1.msra.mxu0 0.0
        %2587 = vmatprep.subr.mxu0 0.0
        %2588 = vmatpush1.msra.mxu0 %v2550
        %2589 = vmatprep.subr.mxu0 0.0
        %2590 = vmatpush2.msra.mxu0 0.0
        %2591 = vmatprep.subr.mxu0 0.0
        %2592 = vmatpush2.msra.mxu0 0.0
        %2593 = vmatprep.subr.mxu0 0.0
        %2594 = vmatpush2.msra.mxu0 0.0
        %2595 = vmatprep.subr.mxu0 0.0
        %2596 = vmatpush2.msra.mxu0 0.0
        %2597 = vmatprep.subr.mxu0 0.0
        %2598 = vmatpush2.msra.mxu0 0.0
        %2599 = vmatprep.subr.mxu0 0.0
        %2600 = vmatpush2.msra.mxu0 0.0
        %2601 = vmatprep.subr.mxu0 0.0
        %2602 = vmatpush2.msra.mxu0 0.0
        %2603 = vmatprep.subr.mxu0 0.0
        %2604 = vmatpush2.msra.mxu0 0.0
        %2605 = vmatprep.subr.mxu0 0.0
        %2606 = vmatpush2.msra.mxu0 0.0
        %2607 = vmatprep.subr.mxu0 0.0
        %2608 = vmatpush2.msra.mxu0 0.0
        %2609 = vmatprep.subr.mxu0 0.0
        %2610 = vmatpush2.msra.mxu0 0.0
        %2611 = vmatprep.subr.mxu0 0.0
        %2612 = vmatpush2.msra.mxu0 0.0
        %2613 = vmatprep.subr.mxu0 0.0
        %2614 = vmatpush2.msra.mxu0 0.0
        %2615 = vmatprep.subr.mxu0 0.0
        %2616 = vmatpush2.msra.mxu0 0.0
        %2617 = vmatprep.subr.mxu0 0.0
        %2618 = vmatpush2.msra.mxu0 0.0
        %2619 = vmatprep.subr.mxu0 0.0
        %2620 = vmatpush2.msra.mxu0 0.0
        %2621 = vmatprep.mubr.f32.mxu0 0.0
        %2622 = vmatmul.mubr.f32.gmra.mxu0 %v2552
        %v2623 = vpop.f32.mrf.mxu0
        %v2624 = vadd.f32 0.0, %v2623
        %v2625 = vpop.f32.mrf.mxu0
        %2626 = vmatprep.mubr.f32.mxu0 0.0
        %2627 = vmatmul.mubr.f32.gmra.mxu0 %v2555
        %v2628 = vpop.f32.mrf.mxu0
        %v2629 = vadd.f32 0.0, %v2628
        %v2630 = vpop.f32.mrf.mxu0
        %2631 = vdwg.mxu0
        %v2633 = vsel %vm1192, %v1594, 0
        %v2636 = vsel %vm1192, %v1667, 0
        %2638 = vmatprep.subr.mxu0 0.0
        %2639 = vmatpush1.msra.mxu0 0.0
        %2640 = vmatprep.subr.mxu0 0.0
        %2641 = vmatpush1.msra.mxu0 0.0
        %2642 = vmatprep.subr.mxu0 0.0
        %2643 = vmatpush1.msra.mxu0 0.0
        %2644 = vmatprep.subr.mxu0 0.0
        %2645 = vmatpush1.msra.mxu0 0.0
        %2646 = vmatprep.subr.mxu0 0.0
        %2647 = vmatpush1.msra.mxu0 0.0
        %2648 = vmatprep.subr.mxu0 0.0
        %2649 = vmatpush1.msra.mxu0 0.0
        %2650 = vmatprep.subr.mxu0 0.0
        %2651 = vmatpush1.msra.mxu0 0.0
        %2652 = vmatprep.subr.mxu0 0.0
        %2653 = vmatpush1.msra.mxu0 0.0
        %2654 = vmatprep.subr.mxu0 0.0
        %2655 = vmatpush1.msra.mxu0 0.0
        %2656 = vmatprep.subr.mxu0 0.0
        %2657 = vmatpush1.msra.mxu0 0.0
        %2658 = vmatprep.subr.mxu0 0.0
        %2659 = vmatpush1.msra.mxu0 0.0
        %2660 = vmatprep.subr.mxu0 0.0
        %2661 = vmatpush1.msra.mxu0 0.0
        %2662 = vmatprep.subr.mxu0 0.0
        %2663 = vmatpush1.msra.mxu0 0.0
        %2664 = vmatprep.subr.mxu0 0.0
        %2665 = vmatpush1.msra.mxu0 0.0
        %2666 = vmatprep.subr.mxu0 0.0
        %2667 = vmatpush1.msra.mxu0 0.0
        %2668 = vmatprep.subr.mxu0 0.0
        %2669 = vmatpush1.msra.mxu0 %v1670
        %2670 = vmatprep.subr.mxu0 0.0
        %2671 = vmatpush2.msra.mxu0 0.0
        %2672 = vmatprep.subr.mxu0 0.0
        %2673 = vmatpush2.msra.mxu0 0.0
        %2674 = vmatprep.subr.mxu0 0.0
        %2675 = vmatpush2.msra.mxu0 0.0
        %2676 = vmatprep.subr.mxu0 0.0
        %2677 = vmatpush2.msra.mxu0 0.0
        %2678 = vmatprep.subr.mxu0 0.0
        %2679 = vmatpush2.msra.mxu0 0.0
        %2680 = vmatprep.subr.mxu0 0.0
        %2681 = vmatpush2.msra.mxu0 0.0
        %2682 = vmatprep.subr.mxu0 0.0
        %2683 = vmatpush2.msra.mxu0 0.0
        %2684 = vmatprep.subr.mxu0 0.0
        %2685 = vmatpush2.msra.mxu0 0.0
        %2686 = vmatprep.subr.mxu0 0.0
        %2687 = vmatpush2.msra.mxu0 0.0
        %2688 = vmatprep.subr.mxu0 0.0
        %2689 = vmatpush2.msra.mxu0 0.0
        %2690 = vmatprep.subr.mxu0 0.0
        %2691 = vmatpush2.msra.mxu0 0.0
        %2692 = vmatprep.subr.mxu0 0.0
        %2693 = vmatpush2.msra.mxu0 0.0
        %2694 = vmatprep.subr.mxu0 0.0
        %2695 = vmatpush2.msra.mxu0 0.0
        %2696 = vmatprep.subr.mxu0 0.0
        %2697 = vmatpush2.msra.mxu0 0.0
        %2698 = vmatprep.subr.mxu0 0.0
        %2699 = vmatpush2.msra.mxu0 0.0
        %2700 = vmatprep.subr.mxu0 0.0
        %2701 = vmatpush2.msra.mxu0 0.0
        %2702 = vmatprep.mubr.f32.mxu0 0.0
        %2703 = vmatmul.mubr.f32.gmra.mxu0 %v2633
        %v2704 = vpop.f32.mrf.mxu0
        %v2705 = vadd.f32 %v2624, %v2704
        %v2706 = vpop.f32.mrf.mxu0
        %2707 = vmatprep.mubr.f32.mxu0 0.0
        %2708 = vmatmul.mubr.f32.gmra.mxu0 %v2636
        %v2709 = vpop.f32.mrf.mxu0
        %v2710 = vadd.f32 %v2629, %v2709
        %v2711 = vpop.f32.mrf.mxu0
        %2712 = vdwg.mxu0
        %s2713 = scalar_lea.vmem %s713, 64
        %v2714 = vld [vmem:[%s2713] sm:$0xff]
        %v2715 = vld [vmem:[%s2713 + $0x8] sm:$0xff]
        %v2716 = vld [vmem:[%s2713 + $0x10] sm:$0xff]
        %v2717 = vld [vmem:[%s2713 + $0x18] sm:$0xff]
        %2718 = vmatprep.subr.mxu0 0.0
        %2719 = vmatpush1.msra.mxu0 0.0
        %2720 = vmatprep.subr.mxu0 0.0
        %2721 = vmatpush1.msra.mxu0 0.0
        %2722 = vmatprep.subr.mxu0 0.0
        %2723 = vmatpush1.msra.mxu0 0.0
        %2724 = vmatprep.subr.mxu0 0.0
        %2725 = vmatpush1.msra.mxu0 0.0
        %2726 = vmatprep.subr.mxu0 0.0
        %2727 = vmatpush1.msra.mxu0 0.0
        %2728 = vmatprep.subr.mxu0 0.0
        %2729 = vmatpush1.msra.mxu0 0.0
        %2730 = vmatprep.subr.mxu0 0.0
        %2731 = vmatpush1.msra.mxu0 0.0
        %2732 = vmatprep.subr.mxu0 0.0
        %2733 = vmatpush1.msra.mxu0 0.0
        %2734 = vmatprep.subr.mxu0 0.0
        %2735 = vmatpush1.msra.mxu0 0.0
        %2736 = vmatprep.subr.mxu0 0.0
        %2737 = vmatpush1.msra.mxu0 0.0
        %2738 = vmatprep.subr.mxu0 0.0
        %2739 = vmatpush1.msra.mxu0 0.0
        %2740 = vmatprep.subr.mxu0 0.0
        %2741 = vmatpush1.msra.mxu0 0.0
        %2742 = vmatprep.subr.mxu0 0.0
        %2743 = vmatpush1.msra.mxu0 %v2717
        %2744 = vmatprep.subr.mxu0 0.0
        %2745 = vmatpush1.msra.mxu0 %v2716
        %2746 = vmatprep.subr.mxu0 0.0
        %2747 = vmatpush1.msra.mxu0 %v2715
        %2748 = vmatprep.subr.mxu0 0.0
        %2749 = vmatpush1.msra.mxu0 %v2714
        %2750 = vmatprep.subr.mxu0 0.0
        %2751 = vmatpush2.msra.mxu0 0.0
        %2752 = vmatprep.subr.mxu0 0.0
        %2753 = vmatpush2.msra.mxu0 0.0
        %2754 = vmatprep.subr.mxu0 0.0
        %2755 = vmatpush2.msra.mxu0 0.0
        %2756 = vmatprep.subr.mxu0 0.0
        %2757 = vmatpush2.msra.mxu0 0.0
        %2758 = vmatprep.subr.mxu0 0.0
        %2759 = vmatpush2.msra.mxu0 0.0
        %2760 = vmatprep.subr.mxu0 0.0
        %2761 = vmatpush2.msra.mxu0 0.0
        %2762 = vmatprep.subr.mxu0 0.0
        %2763 = vmatpush2.msra.mxu0 0.0
        %2764 = vmatprep.subr.mxu0 0.0
        %2765 = vmatpush2.msra.mxu0 0.0
        %2766 = vmatprep.subr.mxu0 0.0
        %2767 = vmatpush2.msra.mxu0 0.0
        %2768 = vmatprep.subr.mxu0 0.0
        %2769 = vmatpush2.msra.mxu0 0.0
        %2770 = vmatprep.subr.mxu0 0.0
        %2771 = vmatpush2.msra.mxu0 0.0
        %2772 = vmatprep.subr.mxu0 0.0
        %2773 = vmatpush2.msra.mxu0 0.0
        %2774 = vmatprep.subr.mxu0 0.0
        %2775 = vmatpush2.msra.mxu0 0.0
        %2776 = vmatprep.subr.mxu0 0.0
        %2777 = vmatpush2.msra.mxu0 0.0
        %2778 = vmatprep.subr.mxu0 0.0
        %2779 = vmatpush2.msra.mxu0 0.0
        %2780 = vmatprep.subr.mxu0 0.0
        %2781 = vmatpush2.msra.mxu0 0.0
        %2782 = vmatprep.mubr.f32.mxu0 0.0
        %2783 = vmatmul.mubr.f32.gmra.mxu0 %v790
        %v2784 = vpop.f32.mrf.mxu0
        %v2785 = vadd.f32 0.0, %v2784
        %v2786 = vpop.f32.mrf.mxu0
        %2787 = vmatprep.mubr.f32.mxu0 0.0
        %2788 = vmatmul.mubr.f32.gmra.mxu0 %v793
        %v2789 = vpop.f32.mrf.mxu0
        %v2790 = vadd.f32 0.0, %v2789
        %v2791 = vpop.f32.mrf.mxu0
        %2792 = vdwg.mxu0
        %s2793 = scalar_lea.vmem %s718, 64
        %v2794 = vld [vmem:[%s2793] sm:$0xff]
        %v2795 = vld [vmem:[%s2793 + $0x8] sm:$0xff]
        %v2796 = vld [vmem:[%s2793 + $0x10] sm:$0xff]
        %v2797 = vld [vmem:[%s2793 + $0x18] sm:$0xff]
        %2798 = vmatprep.subr.mxu0 0.0
        %2799 = vmatpush1.msra.mxu0 0.0
        %2800 = vmatprep.subr.mxu0 0.0
        %2801 = vmatpush1.msra.mxu0 0.0
        %2802 = vmatprep.subr.mxu0 0.0
        %2803 = vmatpush1.msra.mxu0 0.0
        %2804 = vmatprep.subr.mxu0 0.0
        %2805 = vmatpush1.msra.mxu0 0.0
        %2806 = vmatprep.subr.mxu0 0.0
        %2807 = vmatpush1.msra.mxu0 0.0
        %2808 = vmatprep.subr.mxu0 0.0
        %2809 = vmatpush1.msra.mxu0 0.0
        %2810 = vmatprep.subr.mxu0 0.0
        %2811 = vmatpush1.msra.mxu0 0.0
        %2812 = vmatprep.subr.mxu0 0.0
        %2813 = vmatpush1.msra.mxu0 0.0
        %2814 = vmatprep.subr.mxu0 0.0
        %2815 = vmatpush1.msra.mxu0 0.0
        %2816 = vmatprep.subr.mxu0 0.0
        %2817 = vmatpush1.msra.mxu0 0.0
        %2818 = vmatprep.subr.mxu0 0.0
        %2819 = vmatpush1.msra.mxu0 0.0
        %2820 = vmatprep.subr.mxu0 0.0
        %2821 = vmatpush1.msra.mxu0 0.0
        %2822 = vmatprep.subr.mxu0 0.0
        %2823 = vmatpush1.msra.mxu0 %v2797
        %2824 = vmatprep.subr.mxu0 0.0
        %2825 = vmatpush1.msra.mxu0 %v2796
        %2826 = vmatprep.subr.mxu0 0.0
        %2827 = vmatpush1.msra.mxu0 %v2795
        %2828 = vmatprep.subr.mxu0 0.0
        %2829 = vmatpush1.msra.mxu0 %v2794
        %2830 = vmatprep.subr.mxu0 0.0
        %2831 = vmatpush2.msra.mxu0 0.0
        %2832 = vmatprep.subr.mxu0 0.0
        %2833 = vmatpush2.msra.mxu0 0.0
        %2834 = vmatprep.subr.mxu0 0.0
        %2835 = vmatpush2.msra.mxu0 0.0
        %2836 = vmatprep.subr.mxu0 0.0
        %2837 = vmatpush2.msra.mxu0 0.0
        %2838 = vmatprep.subr.mxu0 0.0
        %2839 = vmatpush2.msra.mxu0 0.0
        %2840 = vmatprep.subr.mxu0 0.0
        %2841 = vmatpush2.msra.mxu0 0.0
        %2842 = vmatprep.subr.mxu0 0.0
        %2843 = vmatpush2.msra.mxu0 0.0
        %2844 = vmatprep.subr.mxu0 0.0
        %2845 = vmatpush2.msra.mxu0 0.0
        %2846 = vmatprep.subr.mxu0 0.0
        %2847 = vmatpush2.msra.mxu0 0.0
        %2848 = vmatprep.subr.mxu0 0.0
        %2849 = vmatpush2.msra.mxu0 0.0
        %2850 = vmatprep.subr.mxu0 0.0
        %2851 = vmatpush2.msra.mxu0 0.0
        %2852 = vmatprep.subr.mxu0 0.0
        %2853 = vmatpush2.msra.mxu0 0.0
        %2854 = vmatprep.subr.mxu0 0.0
        %2855 = vmatpush2.msra.mxu0 0.0
        %2856 = vmatprep.subr.mxu0 0.0
        %2857 = vmatpush2.msra.mxu0 0.0
        %2858 = vmatprep.subr.mxu0 0.0
        %2859 = vmatpush2.msra.mxu0 0.0
        %2860 = vmatprep.subr.mxu0 0.0
        %2861 = vmatpush2.msra.mxu0 0.0
        %2862 = vmatprep.mubr.f32.mxu0 0.0
        %2863 = vmatmul.mubr.f32.gmra.mxu0 %v790
        %v2864 = vpop.f32.mrf.mxu0
        %v2865 = vadd.f32 0.0, %v2864
        %v2866 = vpop.f32.mrf.mxu0
        %2867 = vmatprep.mubr.f32.mxu0 0.0
        %2868 = vmatmul.mubr.f32.gmra.mxu0 %v793
        %v2869 = vpop.f32.mrf.mxu0
        %v2870 = vadd.f32 0.0, %v2869
        %v2871 = vpop.f32.mrf.mxu0
        %2872 = vdwg.mxu0
        %s2873 = scalar_lea.vmem %s723, 64
        %v2874 = vld [vmem:[%s2873] sm:$0xff]
        %v2875 = vld [vmem:[%s2873 + $0x8] sm:$0xff]
        %v2876 = vld [vmem:[%s2873 + $0x10] sm:$0xff]
        %v2877 = vld [vmem:[%s2873 + $0x18] sm:$0xff]
        %2878 = vmatprep.subr.mxu0 0.0
        %2879 = vmatpush1.msra.mxu0 0.0
        %2880 = vmatprep.subr.mxu0 0.0
        %2881 = vmatpush1.msra.mxu0 0.0
        %2882 = vmatprep.subr.mxu0 0.0
        %2883 = vmatpush1.msra.mxu0 0.0
        %2884 = vmatprep.subr.mxu0 0.0
        %2885 = vmatpush1.msra.mxu0 0.0
        %2886 = vmatprep.subr.mxu0 0.0
        %2887 = vmatpush1.msra.mxu0 0.0
        %2888 = vmatprep.subr.mxu0 0.0
        %2889 = vmatpush1.msra.mxu0 0.0
        %2890 = vmatprep.subr.mxu0 0.0
        %2891 = vmatpush1.msra.mxu0 0.0
        %2892 = vmatprep.subr.mxu0 0.0
        %2893 = vmatpush1.msra.mxu0 0.0
        %2894 = vmatprep.subr.mxu0 0.0
        %2895 = vmatpush1.msra.mxu0 0.0
        %2896 = vmatprep.subr.mxu0 0.0
        %2897 = vmatpush1.msra.mxu0 0.0
        %2898 = vmatprep.subr.mxu0 0.0
        %2899 = vmatpush1.msra.mxu0 0.0
        %2900 = vmatprep.subr.mxu0 0.0
        %2901 = vmatpush1.msra.mxu0 0.0
        %2902 = vmatprep.subr.mxu0 0.0
        %2903 = vmatpush1.msra.mxu0 %v2877
        %2904 = vmatprep.subr.mxu0 0.0
        %2905 = vmatpush1.msra.mxu0 %v2876
        %2906 = vmatprep.subr.mxu0 0.0
        %2907 = vmatpush1.msra.mxu0 %v2875
        %2908 = vmatprep.subr.mxu0 0.0
        %2909 = vmatpush1.msra.mxu0 %v2874
        %2910 = vmatprep.subr.mxu0 0.0
        %2911 = vmatpush2.msra.mxu0 0.0
        %2912 = vmatprep.subr.mxu0 0.0
        %2913 = vmatpush2.msra.mxu0 0.0
        %2914 = vmatprep.subr.mxu0 0.0
        %2915 = vmatpush2.msra.mxu0 0.0
        %2916 = vmatprep.subr.mxu0 0.0
        %2917 = vmatpush2.msra.mxu0 0.0
        %2918 = vmatprep.subr.mxu0 0.0
        %2919 = vmatpush2.msra.mxu0 0.0
        %2920 = vmatprep.subr.mxu0 0.0
        %2921 = vmatpush2.msra.mxu0 0.0
        %2922 = vmatprep.subr.mxu0 0.0
        %2923 = vmatpush2.msra.mxu0 0.0
        %2924 = vmatprep.subr.mxu0 0.0
        %2925 = vmatpush2.msra.mxu0 0.0
        %2926 = vmatprep.subr.mxu0 0.0
        %2927 = vmatpush2.msra.mxu0 0.0
        %2928 = vmatprep.subr.mxu0 0.0
        %2929 = vmatpush2.msra.mxu0 0.0
        %2930 = vmatprep.subr.mxu0 0.0
        %2931 = vmatpush2.msra.mxu0 0.0
        %2932 = vmatprep.subr.mxu0 0.0
        %2933 = vmatpush2.msra.mxu0 0.0
        %2934 = vmatprep.subr.mxu0 0.0
        %2935 = vmatpush2.msra.mxu0 0.0
        %2936 = vmatprep.subr.mxu0 0.0
        %2937 = vmatpush2.msra.mxu0 0.0
        %2938 = vmatprep.subr.mxu0 0.0
        %2939 = vmatpush2.msra.mxu0 0.0
        %2940 = vmatprep.subr.mxu0 0.0
        %2941 = vmatpush2.msra.mxu0 0.0
        %2942 = vmatprep.mubr.f32.mxu0 0.0
        %2943 = vmatmul.mubr.f32.gmra.mxu0 %v790
        %v2944 = vpop.f32.mrf.mxu0
        %v2945 = vadd.f32 0.0, %v2944
        %v2946 = vpop.f32.mrf.mxu0
        %2947 = vmatprep.mubr.f32.mxu0 0.0
        %2948 = vmatmul.mubr.f32.gmra.mxu0 %v793
        %v2949 = vpop.f32.mrf.mxu0
        %v2950 = vadd.f32 0.0, %v2949
        %v2951 = vpop.f32.mrf.mxu0
        %2952 = vdwg.mxu0
        %s2953 = scalar_lea.vmem %s728, 64
        %v2954 = vld [vmem:[%s2953] sm:$0xff]
        %v2955 = vld [vmem:[%s2953 + $0x8] sm:$0xff]
        %v2956 = vld [vmem:[%s2953 + $0x10] sm:$0xff]
        %v2957 = vld [vmem:[%s2953 + $0x18] sm:$0xff]
        %2958 = vmatprep.subr.mxu0 0.0
        %2959 = vmatpush1.msra.mxu0 0.0
        %2960 = vmatprep.subr.mxu0 0.0
        %2961 = vmatpush1.msra.mxu0 0.0
        %2962 = vmatprep.subr.mxu0 0.0
        %2963 = vmatpush1.msra.mxu0 0.0
        %2964 = vmatprep.subr.mxu0 0.0
        %2965 = vmatpush1.msra.mxu0 0.0
        %2966 = vmatprep.subr.mxu0 0.0
        %2967 = vmatpush1.msra.mxu0 0.0
        %2968 = vmatprep.subr.mxu0 0.0
        %2969 = vmatpush1.msra.mxu0 0.0
        %2970 = vmatprep.subr.mxu0 0.0
        %2971 = vmatpush1.msra.mxu0 0.0
        %2972 = vmatprep.subr.mxu0 0.0
        %2973 = vmatpush1.msra.mxu0 0.0
        %2974 = vmatprep.subr.mxu0 0.0
        %2975 = vmatpush1.msra.mxu0 0.0
        %2976 = vmatprep.subr.mxu0 0.0
        %2977 = vmatpush1.msra.mxu0 0.0
        %2978 = vmatprep.subr.mxu0 0.0
        %2979 = vmatpush1.msra.mxu0 0.0
        %2980 = vmatprep.subr.mxu0 0.0
        %2981 = vmatpush1.msra.mxu0 0.0
        %2982 = vmatprep.subr.mxu0 0.0
        %2983 = vmatpush1.msra.mxu0 %v2957
        %2984 = vmatprep.subr.mxu0 0.0
        %2985 = vmatpush1.msra.mxu0 %v2956
        %2986 = vmatprep.subr.mxu0 0.0
        %2987 = vmatpush1.msra.mxu0 %v2955
        %2988 = vmatprep.subr.mxu0 0.0
        %2989 = vmatpush1.msra.mxu0 %v2954
        %2990 = vmatprep.subr.mxu0 0.0
        %2991 = vmatpush2.msra.mxu0 0.0
        %2992 = vmatprep.subr.mxu0 0.0
        %2993 = vmatpush2.msra.mxu0 0.0
        %2994 = vmatprep.subr.mxu0 0.0
        %2995 = vmatpush2.msra.mxu0 0.0
        %2996 = vmatprep.subr.mxu0 0.0
        %2997 = vmatpush2.msra.mxu0 0.0
        %2998 = vmatprep.subr.mxu0 0.0
        %2999 = vmatpush2.msra.mxu0 0.0
        %3000 = vmatprep.subr.mxu0 0.0
        %3001 = vmatpush2.msra.mxu0 0.0
        %3002 = vmatprep.subr.mxu0 0.0
        %3003 = vmatpush2.msra.mxu0 0.0
        %3004 = vmatprep.subr.mxu0 0.0
        %3005 = vmatpush2.msra.mxu0 0.0
        %3006 = vmatprep.subr.mxu0 0.0
        %3007 = vmatpush2.msra.mxu0 0.0
        %3008 = vmatprep.subr.mxu0 0.0
        %3009 = vmatpush2.msra.mxu0 0.0
        %3010 = vmatprep.subr.mxu0 0.0
        %3011 = vmatpush2.msra.mxu0 0.0
        %3012 = vmatprep.subr.mxu0 0.0
        %3013 = vmatpush2.msra.mxu0 0.0
        %3014 = vmatprep.subr.mxu0 0.0
        %3015 = vmatpush2.msra.mxu0 0.0
        %3016 = vmatprep.subr.mxu0 0.0
        %3017 = vmatpush2.msra.mxu0 0.0
        %3018 = vmatprep.subr.mxu0 0.0
        %3019 = vmatpush2.msra.mxu0 0.0
        %3020 = vmatprep.subr.mxu0 0.0
        %3021 = vmatpush2.msra.mxu0 0.0
        %3022 = vmatprep.mubr.f32.mxu0 0.0
        %3023 = vmatmul.mubr.f32.gmra.mxu0 %v1033
        %v3024 = vpop.f32.mrf.mxu0
        %v3025 = vadd.f32 0.0, %v3024
        %v3026 = vpop.f32.mrf.mxu0
        %3027 = vmatprep.mubr.f32.mxu0 0.0
        %3028 = vmatmul.mubr.f32.gmra.mxu0 %v1036
        %v3029 = vpop.f32.mrf.mxu0
        %v3030 = vadd.f32 0.0, %v3029
        %v3031 = vpop.f32.mrf.mxu0
        %3032 = vdwg.mxu0
        %s3033 = scalar_lea.vmem %s733, 64
        %v3034 = vld [vmem:[%s3033] sm:$0xff]
        %v3035 = vld [vmem:[%s3033 + $0x8] sm:$0xff]
        %v3036 = vld [vmem:[%s3033 + $0x10] sm:$0xff]
        %v3037 = vld [vmem:[%s3033 + $0x18] sm:$0xff]
        %3038 = vmatprep.subr.mxu0 0.0
        %3039 = vmatpush1.msra.mxu0 0.0
        %3040 = vmatprep.subr.mxu0 0.0
        %3041 = vmatpush1.msra.mxu0 0.0
        %3042 = vmatprep.subr.mxu0 0.0
        %3043 = vmatpush1.msra.mxu0 0.0
        %3044 = vmatprep.subr.mxu0 0.0
        %3045 = vmatpush1.msra.mxu0 0.0
        %3046 = vmatprep.subr.mxu0 0.0
        %3047 = vmatpush1.msra.mxu0 0.0
        %3048 = vmatprep.subr.mxu0 0.0
        %3049 = vmatpush1.msra.mxu0 0.0
        %3050 = vmatprep.subr.mxu0 0.0
        %3051 = vmatpush1.msra.mxu0 0.0
        %3052 = vmatprep.subr.mxu0 0.0
        %3053 = vmatpush1.msra.mxu0 0.0
        %3054 = vmatprep.subr.mxu0 0.0
        %3055 = vmatpush1.msra.mxu0 0.0
        %3056 = vmatprep.subr.mxu0 0.0
        %3057 = vmatpush1.msra.mxu0 0.0
        %3058 = vmatprep.subr.mxu0 0.0
        %3059 = vmatpush1.msra.mxu0 0.0
        %3060 = vmatprep.subr.mxu0 0.0
        %3061 = vmatpush1.msra.mxu0 0.0
        %3062 = vmatprep.subr.mxu0 0.0
        %3063 = vmatpush1.msra.mxu0 %v3037
        %3064 = vmatprep.subr.mxu0 0.0
        %3065 = vmatpush1.msra.mxu0 %v3036
        %3066 = vmatprep.subr.mxu0 0.0
        %3067 = vmatpush1.msra.mxu0 %v3035
        %3068 = vmatprep.subr.mxu0 0.0
        %3069 = vmatpush1.msra.mxu0 %v3034
        %3070 = vmatprep.subr.mxu0 0.0
        %3071 = vmatpush2.msra.mxu0 0.0
        %3072 = vmatprep.subr.mxu0 0.0
        %3073 = vmatpush2.msra.mxu0 0.0
        %3074 = vmatprep.subr.mxu0 0.0
        %3075 = vmatpush2.msra.mxu0 0.0
        %3076 = vmatprep.subr.mxu0 0.0
        %3077 = vmatpush2.msra.mxu0 0.0
        %3078 = vmatprep.subr.mxu0 0.0
        %3079 = vmatpush2.msra.mxu0 0.0
        %3080 = vmatprep.subr.mxu0 0.0
        %3081 = vmatpush2.msra.mxu0 0.0
        %3082 = vmatprep.subr.mxu0 0.0
        %3083 = vmatpush2.msra.mxu0 0.0
        %3084 = vmatprep.subr.mxu0 0.0
        %3085 = vmatpush2.msra.mxu0 0.0
        %3086 = vmatprep.subr.mxu0 0.0
        %3087 = vmatpush2.msra.mxu0 0.0
        %3088 = vmatprep.subr.mxu0 0.0
        %3089 = vmatpush2.msra.mxu0 0.0
        %3090 = vmatprep.subr.mxu0 0.0
        %3091 = vmatpush2.msra.mxu0 0.0
        %3092 = vmatprep.subr.mxu0 0.0
        %3093 = vmatpush2.msra.mxu0 0.0
        %3094 = vmatprep.subr.mxu0 0.0
        %3095 = vmatpush2.msra.mxu0 0.0
        %3096 = vmatprep.subr.mxu0 0.0
        %3097 = vmatpush2.msra.mxu0 0.0
        %3098 = vmatprep.subr.mxu0 0.0
        %3099 = vmatpush2.msra.mxu0 0.0
        %3100 = vmatprep.subr.mxu0 0.0
        %3101 = vmatpush2.msra.mxu0 0.0
        %3102 = vmatprep.mubr.f32.mxu0 0.0
        %3103 = vmatmul.mubr.f32.gmra.mxu0 %v1033
        %v3104 = vpop.f32.mrf.mxu0
        %v3105 = vadd.f32 0.0, %v3104
        %v3106 = vpop.f32.mrf.mxu0
        %3107 = vmatprep.mubr.f32.mxu0 0.0
        %3108 = vmatmul.mubr.f32.gmra.mxu0 %v1036
        %v3109 = vpop.f32.mrf.mxu0
        %v3110 = vadd.f32 0.0, %v3109
        %v3111 = vpop.f32.mrf.mxu0
        %3112 = vdwg.mxu0
        %v3114 = vsel %vm1192, %v3025, 0
        %v3117 = vsel %vm1192, %v3105, 0
        %3119 = vmatprep.subr.mxu0 0.0
        %3120 = vmatpush1.xpose.msra.mxu0 0.0
        %3121 = vmatprep.subr.mxu0 0.0
        %3122 = vmatpush1.xpose.msra.mxu0 0.0
        %3123 = vmatprep.subr.mxu0 0.0
        %3124 = vmatpush1.xpose.msra.mxu0 0.0
        %3125 = vmatprep.subr.mxu0 0.0
        %3126 = vmatpush1.xpose.msra.mxu0 0.0
        %3127 = vmatprep.subr.mxu0 0.0
        %3128 = vmatpush1.xpose.msra.mxu0 0.0
        %3129 = vmatprep.subr.mxu0 0.0
        %3130 = vmatpush1.xpose.msra.mxu0 0.0
        %3131 = vmatprep.subr.mxu0 0.0
        %3132 = vmatpush1.xpose.msra.mxu0 0.0
        %3133 = vmatprep.subr.mxu0 0.0
        %3134 = vmatpush1.xpose.msra.mxu0 0.0
        %3135 = vmatprep.subr.mxu0 0.0
        %3136 = vmatpush1.xpose.msra.mxu0 0.0
        %3137 = vmatprep.subr.mxu0 0.0
        %3138 = vmatpush1.xpose.msra.mxu0 0.0
        %3139 = vmatprep.subr.mxu0 0.0
        %3140 = vmatpush1.xpose.msra.mxu0 0.0
        %3141 = vmatprep.subr.mxu0 0.0
        %3142 = vmatpush1.xpose.msra.mxu0 0.0
        %3143 = vmatprep.subr.mxu0 0.0
        %3144 = vmatpush1.xpose.msra.mxu0 0.0
        %3145 = vmatprep.subr.mxu0 0.0
        %3146 = vmatpush1.xpose.msra.mxu0 0.0
        %3147 = vmatprep.subr.mxu0 0.0
        %3148 = vmatpush1.xpose.msra.mxu0 0.0
        %3149 = vmatprep.subr.mxu0 0.0
        %3150 = vmatpush1.xpose.msra.mxu0 %v3117
        %3151 = vmatprep.subr.mxu0 0.0
        %3152 = vmatpush2.xpose.msra.mxu0 0.0
        %3153 = vmatprep.subr.mxu0 0.0
        %3154 = vmatpush2.xpose.msra.mxu0 0.0
        %3155 = vmatprep.subr.mxu0 0.0
        %3156 = vmatpush2.xpose.msra.mxu0 0.0
        %3157 = vmatprep.subr.mxu0 0.0
        %3158 = vmatpush2.xpose.msra.mxu0 0.0
        %3159 = vmatprep.subr.mxu0 0.0
        %3160 = vmatpush2.xpose.msra.mxu0 0.0
        %3161 = vmatprep.subr.mxu0 0.0
        %3162 = vmatpush2.xpose.msra.mxu0 0.0
        %3163 = vmatprep.subr.mxu0 0.0
        %3164 = vmatpush2.xpose.msra.mxu0 0.0
        %3165 = vmatprep.subr.mxu0 0.0
        %3166 = vmatpush2.xpose.msra.mxu0 0.0
        %3167 = vmatprep.subr.mxu0 0.0
        %3168 = vmatpush2.xpose.msra.mxu0 0.0
        %3169 = vmatprep.subr.mxu0 0.0
        %3170 = vmatpush2.xpose.msra.mxu0 0.0
        %3171 = vmatprep.subr.mxu0 0.0
        %3172 = vmatpush2.xpose.msra.mxu0 0.0
        %3173 = vmatprep.subr.mxu0 0.0
        %3174 = vmatpush2.xpose.msra.mxu0 0.0
        %3175 = vmatprep.subr.mxu0 0.0
        %3176 = vmatpush2.xpose.msra.mxu0 0.0
        %3177 = vmatprep.subr.mxu0 0.0
        %3178 = vmatpush2.xpose.msra.mxu0 0.0
        %3179 = vmatprep.subr.mxu0 0.0
        %3180 = vmatpush2.xpose.msra.mxu0 0.0
        %3181 = vmatprep.subr.mxu0 0.0
        %3182 = vmatpush2.xpose.msra.mxu0 0.0
        %3183 = vmatprep.mubr.f32.mxu0 0.0
        %3184 = vmatmul.mubr.f32.gmra.mxu0 %v3114
        %v3185 = vpop.f32.mrf.mxu0
        %v3186 = vadd.f32 0.0, %v3185
        %v3187 = vpop.f32.mrf.mxu0
        %3188 = vdwg.mxu0
        %v3190 = vsel %vm1192, %v3030, 0
        %v3193 = vsel %vm1192, %v3110, 0
        %3195 = vmatprep.subr.mxu0 0.0
        %3196 = vmatpush1.xpose.msra.mxu0 0.0
        %3197 = vmatprep.subr.mxu0 0.0
        %3198 = vmatpush1.xpose.msra.mxu0 0.0
        %3199 = vmatprep.subr.mxu0 0.0
        %3200 = vmatpush1.xpose.msra.mxu0 0.0
        %3201 = vmatprep.subr.mxu0 0.0
        %3202 = vmatpush1.xpose.msra.mxu0 0.0
        %3203 = vmatprep.subr.mxu0 0.0
        %3204 = vmatpush1.xpose.msra.mxu0 0.0
        %3205 = vmatprep.subr.mxu0 0.0
        %3206 = vmatpush1.xpose.msra.mxu0 0.0
        %3207 = vmatprep.subr.mxu0 0.0
        %3208 = vmatpush1.xpose.msra.mxu0 0.0
        %3209 = vmatprep.subr.mxu0 0.0
        %3210 = vmatpush1.xpose.msra.mxu0 0.0
        %3211 = vmatprep.subr.mxu0 0.0
        %3212 = vmatpush1.xpose.msra.mxu0 0.0
        %3213 = vmatprep.subr.mxu0 0.0
        %3214 = vmatpush1.xpose.msra.mxu0 0.0
        %3215 = vmatprep.subr.mxu0 0.0
        %3216 = vmatpush1.xpose.msra.mxu0 0.0
        %3217 = vmatprep.subr.mxu0 0.0
        %3218 = vmatpush1.xpose.msra.mxu0 0.0
        %3219 = vmatprep.subr.mxu0 0.0
        %3220 = vmatpush1.xpose.msra.mxu0 0.0
        %3221 = vmatprep.subr.mxu0 0.0
        %3222 = vmatpush1.xpose.msra.mxu0 0.0
        %3223 = vmatprep.subr.mxu0 0.0
        %3224 = vmatpush1.xpose.msra.mxu0 0.0
        %3225 = vmatprep.subr.mxu0 0.0
        %3226 = vmatpush1.xpose.msra.mxu0 %v3193
        %3227 = vmatprep.subr.mxu0 0.0
        %3228 = vmatpush2.xpose.msra.mxu0 0.0
        %3229 = vmatprep.subr.mxu0 0.0
        %3230 = vmatpush2.xpose.msra.mxu0 0.0
        %3231 = vmatprep.subr.mxu0 0.0
        %3232 = vmatpush2.xpose.msra.mxu0 0.0
        %3233 = vmatprep.subr.mxu0 0.0
        %3234 = vmatpush2.xpose.msra.mxu0 0.0
        %3235 = vmatprep.subr.mxu0 0.0
        %3236 = vmatpush2.xpose.msra.mxu0 0.0
        %3237 = vmatprep.subr.mxu0 0.0
        %3238 = vmatpush2.xpose.msra.mxu0 0.0
        %3239 = vmatprep.subr.mxu0 0.0
        %3240 = vmatpush2.xpose.msra.mxu0 0.0
        %3241 = vmatprep.subr.mxu0 0.0
        %3242 = vmatpush2.xpose.msra.mxu0 0.0
        %3243 = vmatprep.subr.mxu0 0.0
        %3244 = vmatpush2.xpose.msra.mxu0 0.0
        %3245 = vmatprep.subr.mxu0 0.0
        %3246 = vmatpush2.xpose.msra.mxu0 0.0
        %3247 = vmatprep.subr.mxu0 0.0
        %3248 = vmatpush2.xpose.msra.mxu0 0.0
        %3249 = vmatprep.subr.mxu0 0.0
        %3250 = vmatpush2.xpose.msra.mxu0 0.0
        %3251 = vmatprep.subr.mxu0 0.0
        %3252 = vmatpush2.xpose.msra.mxu0 0.0
        %3253 = vmatprep.subr.mxu0 0.0
        %3254 = vmatpush2.xpose.msra.mxu0 0.0
        %3255 = vmatprep.subr.mxu0 0.0
        %3256 = vmatpush2.xpose.msra.mxu0 0.0
        %3257 = vmatprep.subr.mxu0 0.0
        %3258 = vmatpush2.xpose.msra.mxu0 0.0
        %3259 = vmatprep.mubr.f32.mxu0 0.0
        %3260 = vmatmul.mubr.f32.gmra.mxu0 %v3190
        %v3261 = vpop.f32.mrf.mxu0
        %v3262 = vadd.f32 0.0, %v3261
        %v3263 = vpop.f32.mrf.mxu0
        %3264 = vdwg.mxu0
        %v3266 = vsel %vm1192, %v2785, 0
        %v3269 = vsel %vm1192, %v2865, 0
        %3271 = vmatprep.subr.mxu0 0.0
        %3272 = vmatpush1.xpose.msra.mxu0 0.0
        %3273 = vmatprep.subr.mxu0 0.0
        %3274 = vmatpush1.xpose.msra.mxu0 0.0
        %3275 = vmatprep.subr.mxu0 0.0
        %3276 = vmatpush1.xpose.msra.mxu0 0.0
        %3277 = vmatprep.subr.mxu0 0.0
        %3278 = vmatpush1.xpose.msra.mxu0 0.0
        %3279 = vmatprep.subr.mxu0 0.0
        %3280 = vmatpush1.xpose.msra.mxu0 0.0
        %3281 = vmatprep.subr.mxu0 0.0
        %3282 = vmatpush1.xpose.msra.mxu0 0.0
        %3283 = vmatprep.subr.mxu0 0.0
        %3284 = vmatpush1.xpose.msra.mxu0 0.0
        %3285 = vmatprep.subr.mxu0 0.0
        %3286 = vmatpush1.xpose.msra.mxu0 0.0
        %3287 = vmatprep.subr.mxu0 0.0
        %3288 = vmatpush1.xpose.msra.mxu0 0.0
        %3289 = vmatprep.subr.mxu0 0.0
        %3290 = vmatpush1.xpose.msra.mxu0 0.0
        %3291 = vmatprep.subr.mxu0 0.0
        %3292 = vmatpush1.xpose.msra.mxu0 0.0
        %3293 = vmatprep.subr.mxu0 0.0
        %3294 = vmatpush1.xpose.msra.mxu0 0.0
        %3295 = vmatprep.subr.mxu0 0.0
        %3296 = vmatpush1.xpose.msra.mxu0 0.0
        %3297 = vmatprep.subr.mxu0 0.0
        %3298 = vmatpush1.xpose.msra.mxu0 0.0
        %3299 = vmatprep.subr.mxu0 0.0
        %3300 = vmatpush1.xpose.msra.mxu0 0.0
        %3301 = vmatprep.subr.mxu0 0.0
        %3302 = vmatpush1.xpose.msra.mxu0 %v3269
        %3303 = vmatprep.subr.mxu0 0.0
        %3304 = vmatpush2.xpose.msra.mxu0 0.0
        %3305 = vmatprep.subr.mxu0 0.0
        %3306 = vmatpush2.xpose.msra.mxu0 0.0
        %3307 = vmatprep.subr.mxu0 0.0
        %3308 = vmatpush2.xpose.msra.mxu0 0.0
        %3309 = vmatprep.subr.mxu0 0.0
        %3310 = vmatpush2.xpose.msra.mxu0 0.0
        %3311 = vmatprep.subr.mxu0 0.0
        %3312 = vmatpush2.xpose.msra.mxu0 0.0
        %3313 = vmatprep.subr.mxu0 0.0
        %3314 = vmatpush2.xpose.msra.mxu0 0.0
        %3315 = vmatprep.subr.mxu0 0.0
        %3316 = vmatpush2.xpose.msra.mxu0 0.0
        %3317 = vmatprep.subr.mxu0 0.0
        %3318 = vmatpush2.xpose.msra.mxu0 0.0
        %3319 = vmatprep.subr.mxu0 0.0
        %3320 = vmatpush2.xpose.msra.mxu0 0.0
        %3321 = vmatprep.subr.mxu0 0.0
        %3322 = vmatpush2.xpose.msra.mxu0 0.0
        %3323 = vmatprep.subr.mxu0 0.0
        %3324 = vmatpush2.xpose.msra.mxu0 0.0
        %3325 = vmatprep.subr.mxu0 0.0
        %3326 = vmatpush2.xpose.msra.mxu0 0.0
        %3327 = vmatprep.subr.mxu0 0.0
        %3328 = vmatpush2.xpose.msra.mxu0 0.0
        %3329 = vmatprep.subr.mxu0 0.0
        %3330 = vmatpush2.xpose.msra.mxu0 0.0
        %3331 = vmatprep.subr.mxu0 0.0
        %3332 = vmatpush2.xpose.msra.mxu0 0.0
        %3333 = vmatprep.subr.mxu0 0.0
        %3334 = vmatpush2.xpose.msra.mxu0 0.0
        %3335 = vmatprep.mubr.f32.mxu0 0.0
        %3336 = vmatmul.mubr.f32.gmra.mxu0 %v3266
        %v3337 = vpop.f32.mrf.mxu0
        %v3338 = vadd.f32 %v3186, %v3337
        %v3339 = vpop.f32.mrf.mxu0
        %3340 = vdwg.mxu0
        %v3342 = vsel %vm1192, %v2790, 0
        %v3345 = vsel %vm1192, %v2870, 0
        %3347 = vmatprep.subr.mxu0 0.0
        %3348 = vmatpush1.xpose.msra.mxu0 0.0
        %3349 = vmatprep.subr.mxu0 0.0
        %3350 = vmatpush1.xpose.msra.mxu0 0.0
        %3351 = vmatprep.subr.mxu0 0.0
        %3352 = vmatpush1.xpose.msra.mxu0 0.0
        %3353 = vmatprep.subr.mxu0 0.0
        %3354 = vmatpush1.xpose.msra.mxu0 0.0
        %3355 = vmatprep.subr.mxu0 0.0
        %3356 = vmatpush1.xpose.msra.mxu0 0.0
        %3357 = vmatprep.subr.mxu0 0.0
        %3358 = vmatpush1.xpose.msra.mxu0 0.0
        %3359 = vmatprep.subr.mxu0 0.0
        %3360 = vmatpush1.xpose.msra.mxu0 0.0
        %3361 = vmatprep.subr.mxu0 0.0
        %3362 = vmatpush1.xpose.msra.mxu0 0.0
        %3363 = vmatprep.subr.mxu0 0.0
        %3364 = vmatpush1.xpose.msra.mxu0 0.0
        %3365 = vmatprep.subr.mxu0 0.0
        %3366 = vmatpush1.xpose.msra.mxu0 0.0
        %3367 = vmatprep.subr.mxu0 0.0
        %3368 = vmatpush1.xpose.msra.mxu0 0.0
        %3369 = vmatprep.subr.mxu0 0.0
        %3370 = vmatpush1.xpose.msra.mxu0 0.0
        %3371 = vmatprep.subr.mxu0 0.0
        %3372 = vmatpush1.xpose.msra.mxu0 0.0
        %3373 = vmatprep.subr.mxu0 0.0
        %3374 = vmatpush1.xpose.msra.mxu0 0.0
        %3375 = vmatprep.subr.mxu0 0.0
        %3376 = vmatpush1.xpose.msra.mxu0 0.0
        %3377 = vmatprep.subr.mxu0 0.0
        %3378 = vmatpush1.xpose.msra.mxu0 %v3345
        %3379 = vmatprep.subr.mxu0 0.0
        %3380 = vmatpush2.xpose.msra.mxu0 0.0
        %3381 = vmatprep.subr.mxu0 0.0
        %3382 = vmatpush2.xpose.msra.mxu0 0.0
        %3383 = vmatprep.subr.mxu0 0.0
        %3384 = vmatpush2.xpose.msra.mxu0 0.0
        %3385 = vmatprep.subr.mxu0 0.0
        %3386 = vmatpush2.xpose.msra.mxu0 0.0
        %3387 = vmatprep.subr.mxu0 0.0
        %3388 = vmatpush2.xpose.msra.mxu0 0.0
        %3389 = vmatprep.subr.mxu0 0.0
        %3390 = vmatpush2.xpose.msra.mxu0 0.0
        %3391 = vmatprep.subr.mxu0 0.0
        %3392 = vmatpush2.xpose.msra.mxu0 0.0
        %3393 = vmatprep.subr.mxu0 0.0
        %3394 = vmatpush2.xpose.msra.mxu0 0.0
        %3395 = vmatprep.subr.mxu0 0.0
        %3396 = vmatpush2.xpose.msra.mxu0 0.0
        %3397 = vmatprep.subr.mxu0 0.0
        %3398 = vmatpush2.xpose.msra.mxu0 0.0
        %3399 = vmatprep.subr.mxu0 0.0
        %3400 = vmatpush2.xpose.msra.mxu0 0.0
        %3401 = vmatprep.subr.mxu0 0.0
        %3402 = vmatpush2.xpose.msra.mxu0 0.0
        %3403 = vmatprep.subr.mxu0 0.0
        %3404 = vmatpush2.xpose.msra.mxu0 0.0
        %3405 = vmatprep.subr.mxu0 0.0
        %3406 = vmatpush2.xpose.msra.mxu0 0.0
        %3407 = vmatprep.subr.mxu0 0.0
        %3408 = vmatpush2.xpose.msra.mxu0 0.0
        %3409 = vmatprep.subr.mxu0 0.0
        %3410 = vmatpush2.xpose.msra.mxu0 0.0
        %3411 = vmatprep.mubr.f32.mxu0 0.0
        %3412 = vmatmul.mubr.f32.gmra.mxu0 %v3342
        %v3413 = vpop.f32.mrf.mxu0
        %v3414 = vadd.f32 %v3262, %v3413
        %v3415 = vpop.f32.mrf.mxu0
        %3416 = vdwg.mxu0
        %v3417 = vmul.f32 %v3338, 0.25
        %v3418 = vmul.f32 %v3414, 0.25
        %s3419 = scalar_lea.vmem %s2, 16
        %v3420 = vld [vmem:[%s3419] sm:$0xff]
        %v3421 = vadd.f32 %v3417, %v3420
        %v3422 = vadd.f32 %v3418, %v3420
        %v3423 = vsel %vm1192, %v3421, -inf
        %3424 = vmax.xlane.f32.xlu0 %v3423
        %v3425 = vpop.xlane.xlu0 %3424
        %v3426 = vsel %vm1192, %v3422, -inf
        %3427 = vmax.xlane.f32.xlu0 %v3426
        %v3428 = vpop.xlane.xlu0 %3427
        %v3429 = vsub.f32 %v3421, %v3425
        %v3430 = vsub.f32 %v3422, %v3428
        %v3431 = vmul.f32 %v3429, 1.442695
        %v3432 = vpow.pop %v3431
        %v3433 = vmul.f32 %v3430, 1.442695
        %v3434 = vpow.pop %v3433
        %v3435 = vsel %vm1192, %v3432, 0.0
        %3436 = vadd.xlane.f32.xlu0 %v3435
        %v3437 = vpop.xlane.xlu0 %3436
        %v3438 = vsel %vm1192, %v3434, 0.0
        %3439 = vadd.xlane.f32.xlu0 %v3438
        %v3440 = vpop.xlane.xlu0 %3439
        %v3441 = vrcp.pop %v3437
        %v3442 = vrcp.pop %v3440
        %v3443 = vmul.f32 %v3432, %v3441
        %v3444 = vmul.f32 %v3434, %v3442
        %v3446 = vsel %vm1192, %v3443, 0
        %3448 = vmatprep.subr.mxu0 0.0
        %3449 = vmatpush1.msra.mxu0 0.0
        %3450 = vmatprep.subr.mxu0 0.0
        %3451 = vmatpush1.msra.mxu0 0.0
        %3452 = vmatprep.subr.mxu0 0.0
        %3453 = vmatpush1.msra.mxu0 0.0
        %3454 = vmatprep.subr.mxu0 0.0
        %3455 = vmatpush1.msra.mxu0 0.0
        %3456 = vmatprep.subr.mxu0 0.0
        %3457 = vmatpush1.msra.mxu0 0.0
        %3458 = vmatprep.subr.mxu0 0.0
        %3459 = vmatpush1.msra.mxu0 0.0
        %3460 = vmatprep.subr.mxu0 0.0
        %3461 = vmatpush1.msra.mxu0 0.0
        %3462 = vmatprep.subr.mxu0 0.0
        %3463 = vmatpush1.msra.mxu0 0.0
        %3464 = vmatprep.subr.mxu0 0.0
        %3465 = vmatpush1.msra.mxu0 0.0
        %3466 = vmatprep.subr.mxu0 0.0
        %3467 = vmatpush1.msra.mxu0 0.0
        %3468 = vmatprep.subr.mxu0 0.0
        %3469 = vmatpush1.msra.mxu0 0.0
        %3470 = vmatprep.subr.mxu0 0.0
        %3471 = vmatpush1.msra.mxu0 0.0
        %3472 = vmatprep.subr.mxu0 0.0
        %3473 = vmatpush1.msra.mxu0 0.0
        %3474 = vmatprep.subr.mxu0 0.0
        %3475 = vmatpush1.msra.mxu0 0.0
        %3476 = vmatprep.subr.mxu0 0.0
        %3477 = vmatpush1.msra.mxu0 0.0
        %3478 = vmatprep.subr.mxu0 0.0
        %3479 = vmatpush1.msra.mxu0 %v2945
        %3480 = vmatprep.subr.mxu0 0.0
        %3481 = vmatpush2.msra.mxu0 0.0
        %3482 = vmatprep.subr.mxu0 0.0
        %3483 = vmatpush2.msra.mxu0 0.0
        %3484 = vmatprep.subr.mxu0 0.0
        %3485 = vmatpush2.msra.mxu0 0.0
        %3486 = vmatprep.subr.mxu0 0.0
        %3487 = vmatpush2.msra.mxu0 0.0
        %3488 = vmatprep.subr.mxu0 0.0
        %3489 = vmatpush2.msra.mxu0 0.0
        %3490 = vmatprep.subr.mxu0 0.0
        %3491 = vmatpush2.msra.mxu0 0.0
        %3492 = vmatprep.subr.mxu0 0.0
        %3493 = vmatpush2.msra.mxu0 0.0
        %3494 = vmatprep.subr.mxu0 0.0
        %3495 = vmatpush2.msra.mxu0 0.0
        %3496 = vmatprep.subr.mxu0 0.0
        %3497 = vmatpush2.msra.mxu0 0.0
        %3498 = vmatprep.subr.mxu0 0.0
        %3499 = vmatpush2.msra.mxu0 0.0
        %3500 = vmatprep.subr.mxu0 0.0
        %3501 = vmatpush2.msra.mxu0 0.0
        %3502 = vmatprep.subr.mxu0 0.0
        %3503 = vmatpush2.msra.mxu0 0.0
        %3504 = vmatprep.subr.mxu0 0.0
        %3505 = vmatpush2.msra.mxu0 0.0
        %3506 = vmatprep.subr.mxu0 0.0
        %3507 = vmatpush2.msra.mxu0 0.0
        %3508 = vmatprep.subr.mxu0 0.0
        %3509 = vmatpush2.msra.mxu0 0.0
        %3510 = vmatprep.subr.mxu0 0.0
        %3511 = vmatpush2.msra.mxu0 0.0
        %3512 = vmatprep.mubr.f32.mxu0 0.0
        %3513 = vmatmul.mubr.f32.gmra.mxu0 %v3446
        %v3514 = vpop.f32.mrf.mxu0
        %v3515 = vadd.f32 0.0, %v3514
        %v3516 = vpop.f32.mrf.mxu0
        %3517 = vdwg.mxu0
        %v3519 = vsel %vm1192, %v3444, 0
        %3521 = vmatprep.subr.mxu0 0.0
        %3522 = vmatpush1.msra.mxu0 0.0
        %3523 = vmatprep.subr.mxu0 0.0
        %3524 = vmatpush1.msra.mxu0 0.0
        %3525 = vmatprep.subr.mxu0 0.0
        %3526 = vmatpush1.msra.mxu0 0.0
        %3527 = vmatprep.subr.mxu0 0.0
        %3528 = vmatpush1.msra.mxu0 0.0
        %3529 = vmatprep.subr.mxu0 0.0
        %3530 = vmatpush1.msra.mxu0 0.0
        %3531 = vmatprep.subr.mxu0 0.0
        %3532 = vmatpush1.msra.mxu0 0.0
        %3533 = vmatprep.subr.mxu0 0.0
        %3534 = vmatpush1.msra.mxu0 0.0
        %3535 = vmatprep.subr.mxu0 0.0
        %3536 = vmatpush1.msra.mxu0 0.0
        %3537 = vmatprep.subr.mxu0 0.0
        %3538 = vmatpush1.msra.mxu0 0.0
        %3539 = vmatprep.subr.mxu0 0.0
        %3540 = vmatpush1.msra.mxu0 0.0
        %3541 = vmatprep.subr.mxu0 0.0
        %3542 = vmatpush1.msra.mxu0 0.0
        %3543 = vmatprep.subr.mxu0 0.0
        %3544 = vmatpush1.msra.mxu0 0.0
        %3545 = vmatprep.subr.mxu0 0.0
        %3546 = vmatpush1.msra.mxu0 0.0
        %3547 = vmatprep.subr.mxu0 0.0
        %3548 = vmatpush1.msra.mxu0 0.0
        %3549 = vmatprep.subr.mxu0 0.0
        %3550 = vmatpush1.msra.mxu0 0.0
        %3551 = vmatprep.subr.mxu0 0.0
        %3552 = vmatpush1.msra.mxu0 %v2950
        %3553 = vmatprep.subr.mxu0 0.0
        %3554 = vmatpush2.msra.mxu0 0.0
        %3555 = vmatprep.subr.mxu0 0.0
        %3556 = vmatpush2.msra.mxu0 0.0
        %3557 = vmatprep.subr.mxu0 0.0
        %3558 = vmatpush2.msra.mxu0 0.0
        %3559 = vmatprep.subr.mxu0 0.0
        %3560 = vmatpush2.msra.mxu0 0.0
        %3561 = vmatprep.subr.mxu0 0.0
        %3562 = vmatpush2.msra.mxu0 0.0
        %3563 = vmatprep.subr.mxu0 0.0
        %3564 = vmatpush2.msra.mxu0 0.0
        %3565 = vmatprep.subr.mxu0 0.0
        %3566 = vmatpush2.msra.mxu0 0.0
        %3567 = vmatprep.subr.mxu0 0.0
        %3568 = vmatpush2.msra.mxu0 0.0
        %3569 = vmatprep.subr.mxu0 0.0
        %3570 = vmatpush2.msra.mxu0 0.0
        %3571 = vmatprep.subr.mxu0 0.0
        %3572 = vmatpush2.msra.mxu0 0.0
        %3573 = vmatprep.subr.mxu0 0.0
        %3574 = vmatpush2.msra.mxu0 0.0
        %3575 = vmatprep.subr.mxu0 0.0
        %3576 = vmatpush2.msra.mxu0 0.0
        %3577 = vmatprep.subr.mxu0 0.0
        %3578 = vmatpush2.msra.mxu0 0.0
        %3579 = vmatprep.subr.mxu0 0.0
        %3580 = vmatpush2.msra.mxu0 0.0
        %3581 = vmatprep.subr.mxu0 0.0
        %3582 = vmatpush2.msra.mxu0 0.0
        %3583 = vmatprep.subr.mxu0 0.0
        %3584 = vmatpush2.msra.mxu0 0.0
        %3585 = vmatprep.mubr.f32.mxu0 0.0
        %3586 = vmatmul.mubr.f32.gmra.mxu0 %v3519
        %v3587 = vpop.f32.mrf.mxu0
        %v3588 = vadd.f32 0.0, %v3587
        %v3589 = vpop.f32.mrf.mxu0
        %3590 = vdwg.mxu0
        %s3591 = scalar_lea.vmem %s738, 16
        %v3592 = vld [vmem:[%s3591] sm:$0xff]
        %v3594 = vsel %vm1192, %v3515, 0
        %v3597 = vsel %vm1192, %v3588, 0
        %3599 = vmatprep.subr.mxu0 0.0
        %3600 = vmatpush1.msra.mxu0 0.0
        %3601 = vmatprep.subr.mxu0 0.0
        %3602 = vmatpush1.msra.mxu0 0.0
        %3603 = vmatprep.subr.mxu0 0.0
        %3604 = vmatpush1.msra.mxu0 0.0
        %3605 = vmatprep.subr.mxu0 0.0
        %3606 = vmatpush1.msra.mxu0 0.0
        %3607 = vmatprep.subr.mxu0 0.0
        %3608 = vmatpush1.msra.mxu0 0.0
        %3609 = vmatprep.subr.mxu0 0.0
        %3610 = vmatpush1.msra.mxu0 0.0
        %3611 = vmatprep.subr.mxu0 0.0
        %3612 = vmatpush1.msra.mxu0 0.0
        %3613 = vmatprep.subr.mxu0 0.0
        %3614 = vmatpush1.msra.mxu0 0.0
        %3615 = vmatprep.subr.mxu0 0.0
        %3616 = vmatpush1.msra.mxu0 0.0
        %3617 = vmatprep.subr.mxu0 0.0
        %3618 = vmatpush1.msra.mxu0 0.0
        %3619 = vmatprep.subr.mxu0 0.0
        %3620 = vmatpush1.msra.mxu0 0.0
        %3621 = vmatprep.subr.mxu0 0.0
        %3622 = vmatpush1.msra.mxu0 0.0
        %3623 = vmatprep.subr.mxu0 0.0
        %3624 = vmatpush1.msra.mxu0 0.0
        %3625 = vmatprep.subr.mxu0 0.0
        %3626 = vmatpush1.msra.mxu0 0.0
        %3627 = vmatprep.subr.mxu0 0.0
        %3628 = vmatpush1.msra.mxu0 0.0
        %3629 = vmatprep.subr.mxu0 0.0
        %3630 = vmatpush1.msra.mxu0 %v3592
        %3631 = vmatprep.subr.mxu0 0.0
        %3632 = vmatpush2.msra.mxu0 0.0
        %3633 = vmatprep.subr.mxu0 0.0
        %3634 = vmatpush2.msra.mxu0 0.0
        %3635 = vmatprep.subr.mxu0 0.0
        %3636 = vmatpush2.msra.mxu0 0.0
        %3637 = vmatprep.subr.mxu0 0.0
        %3638 = vmatpush2.msra.mxu0 0.0
        %3639 = vmatprep.subr.mxu0 0.0
        %3640 = vmatpush2.msra.mxu0 0.0
        %3641 = vmatprep.subr.mxu0 0.0
        %3642 = vmatpush2.msra.mxu0 0.0
        %3643 = vmatprep.subr.mxu0 0.0
        %3644 = vmatpush2.msra.mxu0 0.0
        %3645 = vmatprep.subr.mxu0 0.0
        %3646 = vmatpush2.msra.mxu0 0.0
        %3647 = vmatprep.subr.mxu0 0.0
        %3648 = vmatpush2.msra.mxu0 0.0
        %3649 = vmatprep.subr.mxu0 0.0
        %3650 = vmatpush2.msra.mxu0 0.0
        %3651 = vmatprep.subr.mxu0 0.0
        %3652 = vmatpush2.msra.mxu0 0.0
        %3653 = vmatprep.subr.mxu0 0.0
        %3654 = vmatpush2.msra.mxu0 0.0
        %3655 = vmatprep.subr.mxu0 0.0
        %3656 = vmatpush2.msra.mxu0 0.0
        %3657 = vmatprep.subr.mxu0 0.0
        %3658 = vmatpush2.msra.mxu0 0.0
        %3659 = vmatprep.subr.mxu0 0.0
        %3660 = vmatpush2.msra.mxu0 0.0
        %3661 = vmatprep.subr.mxu0 0.0
        %3662 = vmatpush2.msra.mxu0 0.0
        %3663 = vmatprep.mubr.f32.mxu0 0.0
        %3664 = vmatmul.mubr.f32.gmra.mxu0 %v3594
        %v3665 = vpop.f32.mrf.mxu0
        %v3666 = vadd.f32 0.0, %v3665
        %v3667 = vpop.f32.mrf.mxu0
        %3668 = vmatprep.mubr.f32.mxu0 0.0
        %3669 = vmatmul.mubr.f32.gmra.mxu0 %v3597
        %v3670 = vpop.f32.mrf.mxu0
        %v3671 = vadd.f32 0.0, %v3670
        %v3672 = vpop.f32.mrf.mxu0
        %3673 = vdwg.mxu0
        %v3674 = vadd.f32 %v2705, %v3666
        %v3675 = vadd.f32 %v2710, %v3671
        %s3676 = scalar_lea.vmem %s713, 96
        %v3677 = vld [vmem:[%s3676] sm:$0xff]
        %v3678 = vld [vmem:[%s3676 + $0x8] sm:$0xff]
        %v3679 = vld [vmem:[%s3676 + $0x10] sm:$0xff]
        %v3680 = vld [vmem:[%s3676 + $0x18] sm:$0xff]
        %3681 = vmatprep.subr.mxu0 0.0
        %3682 = vmatpush1.msra.mxu0 0.0
        %3683 = vmatprep.subr.mxu0 0.0
        %3684 = vmatpush1.msra.mxu0 0.0
        %3685 = vmatprep.subr.mxu0 0.0
        %3686 = vmatpush1.msra.mxu0 0.0
        %3687 = vmatprep.subr.mxu0 0.0
        %3688 = vmatpush1.msra.mxu0 0.0
        %3689 = vmatprep.subr.mxu0 0.0
        %3690 = vmatpush1.msra.mxu0 0.0
        %3691 = vmatprep.subr.mxu0 0.0
        %3692 = vmatpush1.msra.mxu0 0.0
        %3693 = vmatprep.subr.mxu0 0.0
        %3694 = vmatpush1.msra.mxu0 0.0
        %3695 = vmatprep.subr.mxu0 0.0
        %3696 = vmatpush1.msra.mxu0 0.0
        %3697 = vmatprep.subr.mxu0 0.0
        %3698 = vmatpush1.msra.mxu0 0.0
        %3699 = vmatprep.subr.mxu0 0.0
        %3700 = vmatpush1.msra.mxu0 0.0
        %3701 = vmatprep.subr.mxu0 0.0
        %3702 = vmatpush1.msra.mxu0 0.0
        %3703 = vmatprep.subr.mxu0 0.0
        %3704 = vmatpush1.msra.mxu0 0.0
        %3705 = vmatprep.subr.mxu0 0.0
        %3706 = vmatpush1.msra.mxu0 %v3680
        %3707 = vmatprep.subr.mxu0 0.0
        %3708 = vmatpush1.msra.mxu0 %v3679
        %3709 = vmatprep.subr.mxu0 0.0
        %3710 = vmatpush1.msra.mxu0 %v3678
        %3711 = vmatprep.subr.mxu0 0.0
        %3712 = vmatpush1.msra.mxu0 %v3677
        %3713 = vmatprep.subr.mxu0 0.0
        %3714 = vmatpush2.msra.mxu0 0.0
        %3715 = vmatprep.subr.mxu0 0.0
        %3716 = vmatpush2.msra.mxu0 0.0
        %3717 = vmatprep.subr.mxu0 0.0
        %3718 = vmatpush2.msra.mxu0 0.0
        %3719 = vmatprep.subr.mxu0 0.0
        %3720 = vmatpush2.msra.mxu0 0.0
        %3721 = vmatprep.subr.mxu0 0.0
        %3722 = vmatpush2.msra.mxu0 0.0
        %3723 = vmatprep.subr.mxu0 0.0
        %3724 = vmatpush2.msra.mxu0 0.0
        %3725 = vmatprep.subr.mxu0 0.0
        %3726 = vmatpush2.msra.mxu0 0.0
        %3727 = vmatprep.subr.mxu0 0.0
        %3728 = vmatpush2.msra.mxu0 0.0
        %3729 = vmatprep.subr.mxu0 0.0
        %3730 = vmatpush2.msra.mxu0 0.0
        %3731 = vmatprep.subr.mxu0 0.0
        %3732 = vmatpush2.msra.mxu0 0.0
        %3733 = vmatprep.subr.mxu0 0.0
        %3734 = vmatpush2.msra.mxu0 0.0
        %3735 = vmatprep.subr.mxu0 0.0
        %3736 = vmatpush2.msra.mxu0 0.0
        %3737 = vmatprep.subr.mxu0 0.0
        %3738 = vmatpush2.msra.mxu0 0.0
        %3739 = vmatprep.subr.mxu0 0.0
        %3740 = vmatpush2.msra.mxu0 0.0
        %3741 = vmatprep.subr.mxu0 0.0
        %3742 = vmatpush2.msra.mxu0 0.0
        %3743 = vmatprep.subr.mxu0 0.0
        %3744 = vmatpush2.msra.mxu0 0.0
        %3745 = vmatprep.mubr.f32.mxu0 0.0
        %3746 = vmatmul.mubr.f32.gmra.mxu0 %v790
        %v3747 = vpop.f32.mrf.mxu0
        %v3748 = vadd.f32 0.0, %v3747
        %v3749 = vpop.f32.mrf.mxu0
        %3750 = vmatprep.mubr.f32.mxu0 0.0
        %3751 = vmatmul.mubr.f32.gmra.mxu0 %v793
        %v3752 = vpop.f32.mrf.mxu0
        %v3753 = vadd.f32 0.0, %v3752
        %v3754 = vpop.f32.mrf.mxu0
        %3755 = vdwg.mxu0
        %s3756 = scalar_lea.vmem %s718, 96
        %v3757 = vld [vmem:[%s3756] sm:$0xff]
        %v3758 = vld [vmem:[%s3756 + $0x8] sm:$0xff]
        %v3759 = vld [vmem:[%s3756 + $0x10] sm:$0xff]
        %v3760 = vld [vmem:[%s3756 + $0x18] sm:$0xff]
        %3761 = vmatprep.subr.mxu0 0.0
        %3762 = vmatpush1.msra.mxu0 0.0
        %3763 = vmatprep.subr.mxu0 0.0
        %3764 = vmatpush1.msra.mxu0 0.0
        %3765 = vmatprep.subr.mxu0 0.0
        %3766 = vmatpush1.msra.mxu0 0.0
        %3767 = vmatprep.subr.mxu0 0.0
        %3768 = vmatpush1.msra.mxu0 0.0
        %3769 = vmatprep.subr.mxu0 0.0
        %3770 = vmatpush1.msra.mxu0 0.0
        %3771 = vmatprep.subr.mxu0 0.0
        %3772 = vmatpush1.msra.mxu0 0.0
        %3773 = vmatprep.subr.mxu0 0.0
        %3774 = vmatpush1.msra.mxu0 0.0
        %3775 = vmatprep.subr.mxu0 0.0
        %3776 = vmatpush1.msra.mxu0 0.0
        %3777 = vmatprep.subr.mxu0 0.0
        %3778 = vmatpush1.msra.mxu0 0.0
        %3779 = vmatprep.subr.mxu0 0.0
        %3780 = vmatpush1.msra.mxu0 0.0
        %3781 = vmatprep.subr.mxu0 0.0
        %3782 = vmatpush1.msra.mxu0 0.0
        %3783 = vmatprep.subr.mxu0 0.0
        %3784 = vmatpush1.msra.mxu0 0.0
        %3785 = vmatprep.subr.mxu0 0.0
        %3786 = vmatpush1.msra.mxu0 %v3760
        %3787 = vmatprep.subr.mxu0 0.0
        %3788 = vmatpush1.msra.mxu0 %v3759
        %3789 = vmatprep.subr.mxu0 0.0
        %3790 = vmatpush1.msra.mxu0 %v3758
        %3791 = vmatprep.subr.mxu0 0.0
        %3792 = vmatpush1.msra.mxu0 %v3757
        %3793 = vmatprep.subr.mxu0 0.0
        %3794 = vmatpush2.msra.mxu0 0.0
        %3795 = vmatprep.subr.mxu0 0.0
        %3796 = vmatpush2.msra.mxu0 0.0
        %3797 = vmatprep.subr.mxu0 0.0
        %3798 = vmatpush2.msra.mxu0 0.0
        %3799 = vmatprep.subr.mxu0 0.0
        %3800 = vmatpush2.msra.mxu0 0.0
        %3801 = vmatprep.subr.mxu0 0.0
        %3802 = vmatpush2.msra.mxu0 0.0
        %3803 = vmatprep.subr.mxu0 0.0
        %3804 = vmatpush2.msra.mxu0 0.0
        %3805 = vmatprep.subr.mxu0 0.0
        %3806 = vmatpush2.msra.mxu0 0.0
        %3807 = vmatprep.subr.mxu0 0.0
        %3808 = vmatpush2.msra.mxu0 0.0
        %3809 = vmatprep.subr.mxu0 0.0
        %3810 = vmatpush2.msra.mxu0 0.0
        %3811 = vmatprep.subr.mxu0 0.0
        %3812 = vmatpush2.msra.mxu0 0.0
        %3813 = vmatprep.subr.mxu0 0.0
        %3814 = vmatpush2.msra.mxu0 0.0
        %3815 = vmatprep.subr.mxu0 0.0
        %3816 = vmatpush2.msra.mxu0 0.0
        %3817 = vmatprep.subr.mxu0 0.0
        %3818 = vmatpush2.msra.mxu0 0.0
        %3819 = vmatprep.subr.mxu0 0.0
        %3820 = vmatpush2.msra.mxu0 0.0
        %3821 = vmatprep.subr.mxu0 0.0
        %3822 = vmatpush2.msra.mxu0 0.0
        %3823 = vmatprep.subr.mxu0 0.0
        %3824 = vmatpush2.msra.mxu0 0.0
        %3825 = vmatprep.mubr.f32.mxu0 0.0
        %3826 = vmatmul.mubr.f32.gmra.mxu0 %v790
        %v3827 = vpop.f32.mrf.mxu0
        %v3828 = vadd.f32 0.0, %v3827
        %v3829 = vpop.f32.mrf.mxu0
        %3830 = vmatprep.mubr.f32.mxu0 0.0
        %3831 = vmatmul.mubr.f32.gmra.mxu0 %v793
        %v3832 = vpop.f32.mrf.mxu0
        %v3833 = vadd.f32 0.0, %v3832
        %v3834 = vpop.f32.mrf.mxu0
        %3835 = vdwg.mxu0
        %s3836 = scalar_lea.vmem %s723, 96
        %v3837 = vld [vmem:[%s3836] sm:$0xff]
        %v3838 = vld [vmem:[%s3836 + $0x8] sm:$0xff]
        %v3839 = vld [vmem:[%s3836 + $0x10] sm:$0xff]
        %v3840 = vld [vmem:[%s3836 + $0x18] sm:$0xff]
        %3841 = vmatprep.subr.mxu0 0.0
        %3842 = vmatpush1.msra.mxu0 0.0
        %3843 = vmatprep.subr.mxu0 0.0
        %3844 = vmatpush1.msra.mxu0 0.0
        %3845 = vmatprep.subr.mxu0 0.0
        %3846 = vmatpush1.msra.mxu0 0.0
        %3847 = vmatprep.subr.mxu0 0.0
        %3848 = vmatpush1.msra.mxu0 0.0
        %3849 = vmatprep.subr.mxu0 0.0
        %3850 = vmatpush1.msra.mxu0 0.0
        %3851 = vmatprep.subr.mxu0 0.0
        %3852 = vmatpush1.msra.mxu0 0.0
        %3853 = vmatprep.subr.mxu0 0.0
        %3854 = vmatpush1.msra.mxu0 0.0
        %3855 = vmatprep.subr.mxu0 0.0
        %3856 = vmatpush1.msra.mxu0 0.0
        %3857 = vmatprep.subr.mxu0 0.0
        %3858 = vmatpush1.msra.mxu0 0.0
        %3859 = vmatprep.subr.mxu0 0.0
        %3860 = vmatpush1.msra.mxu0 0.0
        %3861 = vmatprep.subr.mxu0 0.0
        %3862 = vmatpush1.msra.mxu0 0.0
        %3863 = vmatprep.subr.mxu0 0.0
        %3864 = vmatpush1.msra.mxu0 0.0
        %3865 = vmatprep.subr.mxu0 0.0
        %3866 = vmatpush1.msra.mxu0 %v3840
        %3867 = vmatprep.subr.mxu0 0.0
        %3868 = vmatpush1.msra.mxu0 %v3839
        %3869 = vmatprep.subr.mxu0 0.0
        %3870 = vmatpush1.msra.mxu0 %v3838
        %3871 = vmatprep.subr.mxu0 0.0
        %3872 = vmatpush1.msra.mxu0 %v3837
        %3873 = vmatprep.subr.mxu0 0.0
        %3874 = vmatpush2.msra.mxu0 0.0
        %3875 = vmatprep.subr.mxu0 0.0
        %3876 = vmatpush2.msra.mxu0 0.0
        %3877 = vmatprep.subr.mxu0 0.0
        %3878 = vmatpush2.msra.mxu0 0.0
        %3879 = vmatprep.subr.mxu0 0.0
        %3880 = vmatpush2.msra.mxu0 0.0
        %3881 = vmatprep.subr.mxu0 0.0
        %3882 = vmatpush2.msra.mxu0 0.0
        %3883 = vmatprep.subr.mxu0 0.0
        %3884 = vmatpush2.msra.mxu0 0.0
        %3885 = vmatprep.subr.mxu0 0.0
        %3886 = vmatpush2.msra.mxu0 0.0
        %3887 = vmatprep.subr.mxu0 0.0
        %3888 = vmatpush2.msra.mxu0 0.0
        %3889 = vmatprep.subr.mxu0 0.0
        %3890 = vmatpush2.msra.mxu0 0.0
        %3891 = vmatprep.subr.mxu0 0.0
        %3892 = vmatpush2.msra.mxu0 0.0
        %3893 = vmatprep.subr.mxu0 0.0
        %3894 = vmatpush2.msra.mxu0 0.0
        %3895 = vmatprep.subr.mxu0 0.0
        %3896 = vmatpush2.msra.mxu0 0.0
        %3897 = vmatprep.subr.mxu0 0.0
        %3898 = vmatpush2.msra.mxu0 0.0
        %3899 = vmatprep.subr.mxu0 0.0
        %3900 = vmatpush2.msra.mxu0 0.0
        %3901 = vmatprep.subr.mxu0 0.0
        %3902 = vmatpush2.msra.mxu0 0.0
        %3903 = vmatprep.subr.mxu0 0.0
        %3904 = vmatpush2.msra.mxu0 0.0
        %3905 = vmatprep.mubr.f32.mxu0 0.0
        %3906 = vmatmul.mubr.f32.gmra.mxu0 %v790
        %v3907 = vpop.f32.mrf.mxu0
        %v3908 = vadd.f32 0.0, %v3907
        %v3909 = vpop.f32.mrf.mxu0
        %3910 = vmatprep.mubr.f32.mxu0 0.0
        %3911 = vmatmul.mubr.f32.gmra.mxu0 %v793
        %v3912 = vpop.f32.mrf.mxu0
        %v3913 = vadd.f32 0.0, %v3912
        %v3914 = vpop.f32.mrf.mxu0
        %3915 = vdwg.mxu0
        %s3916 = scalar_lea.vmem %s728, 96
        %v3917 = vld [vmem:[%s3916] sm:$0xff]
        %v3918 = vld [vmem:[%s3916 + $0x8] sm:$0xff]
        %v3919 = vld [vmem:[%s3916 + $0x10] sm:$0xff]
        %v3920 = vld [vmem:[%s3916 + $0x18] sm:$0xff]
        %3921 = vmatprep.subr.mxu0 0.0
        %3922 = vmatpush1.msra.mxu0 0.0
        %3923 = vmatprep.subr.mxu0 0.0
        %3924 = vmatpush1.msra.mxu0 0.0
        %3925 = vmatprep.subr.mxu0 0.0
        %3926 = vmatpush1.msra.mxu0 0.0
        %3927 = vmatprep.subr.mxu0 0.0
        %3928 = vmatpush1.msra.mxu0 0.0
        %3929 = vmatprep.subr.mxu0 0.0
        %3930 = vmatpush1.msra.mxu0 0.0
        %3931 = vmatprep.subr.mxu0 0.0
        %3932 = vmatpush1.msra.mxu0 0.0
        %3933 = vmatprep.subr.mxu0 0.0
        %3934 = vmatpush1.msra.mxu0 0.0
        %3935 = vmatprep.subr.mxu0 0.0
        %3936 = vmatpush1.msra.mxu0 0.0
        %3937 = vmatprep.subr.mxu0 0.0
        %3938 = vmatpush1.msra.mxu0 0.0
        %3939 = vmatprep.subr.mxu0 0.0
        %3940 = vmatpush1.msra.mxu0 0.0
        %3941 = vmatprep.subr.mxu0 0.0
        %3942 = vmatpush1.msra.mxu0 0.0
        %3943 = vmatprep.subr.mxu0 0.0
        %3944 = vmatpush1.msra.mxu0 0.0
        %3945 = vmatprep.subr.mxu0 0.0
        %3946 = vmatpush1.msra.mxu0 %v3920
        %3947 = vmatprep.subr.mxu0 0.0
        %3948 = vmatpush1.msra.mxu0 %v3919
        %3949 = vmatprep.subr.mxu0 0.0
        %3950 = vmatpush1.msra.mxu0 %v3918
        %3951 = vmatprep.subr.mxu0 0.0
        %3952 = vmatpush1.msra.mxu0 %v3917
        %3953 = vmatprep.subr.mxu0 0.0
        %3954 = vmatpush2.msra.mxu0 0.0
        %3955 = vmatprep.subr.mxu0 0.0
        %3956 = vmatpush2.msra.mxu0 0.0
        %3957 = vmatprep.subr.mxu0 0.0
        %3958 = vmatpush2.msra.mxu0 0.0
        %3959 = vmatprep.subr.mxu0 0.0
        %3960 = vmatpush2.msra.mxu0 0.0
        %3961 = vmatprep.subr.mxu0 0.0
        %3962 = vmatpush2.msra.mxu0 0.0
        %3963 = vmatprep.subr.mxu0 0.0
        %3964 = vmatpush2.msra.mxu0 0.0
        %3965 = vmatprep.subr.mxu0 0.0
        %3966 = vmatpush2.msra.mxu0 0.0
        %3967 = vmatprep.subr.mxu0 0.0
        %3968 = vmatpush2.msra.mxu0 0.0
        %3969 = vmatprep.subr.mxu0 0.0
        %3970 = vmatpush2.msra.mxu0 0.0
        %3971 = vmatprep.subr.mxu0 0.0
        %3972 = vmatpush2.msra.mxu0 0.0
        %3973 = vmatprep.subr.mxu0 0.0
        %3974 = vmatpush2.msra.mxu0 0.0
        %3975 = vmatprep.subr.mxu0 0.0
        %3976 = vmatpush2.msra.mxu0 0.0
        %3977 = vmatprep.subr.mxu0 0.0
        %3978 = vmatpush2.msra.mxu0 0.0
        %3979 = vmatprep.subr.mxu0 0.0
        %3980 = vmatpush2.msra.mxu0 0.0
        %3981 = vmatprep.subr.mxu0 0.0
        %3982 = vmatpush2.msra.mxu0 0.0
        %3983 = vmatprep.subr.mxu0 0.0
        %3984 = vmatpush2.msra.mxu0 0.0
        %3985 = vmatprep.mubr.f32.mxu0 0.0
        %3986 = vmatmul.mubr.f32.gmra.mxu0 %v1033
        %v3987 = vpop.f32.mrf.mxu0
        %v3988 = vadd.f32 0.0, %v3987
        %v3989 = vpop.f32.mrf.mxu0
        %3990 = vmatprep.mubr.f32.mxu0 0.0
        %3991 = vmatmul.mubr.f32.gmra.mxu0 %v1036
        %v3992 = vpop.f32.mrf.mxu0
        %v3993 = vadd.f32 0.0, %v3992
        %v3994 = vpop.f32.mrf.mxu0
        %3995 = vdwg.mxu0
        %s3996 = scalar_lea.vmem %s733, 96
        %v3997 = vld [vmem:[%s3996] sm:$0xff]
        %v3998 = vld [vmem:[%s3996 + $0x8] sm:$0xff]
        %v3999 = vld [vmem:[%s3996 + $0x10] sm:$0xff]
        %v4000 = vld [vmem:[%s3996 + $0x18] sm:$0xff]
        %4001 = vmatprep.subr.mxu0 0.0
        %4002 = vmatpush1.msra.mxu0 0.0
        %4003 = vmatprep.subr.mxu0 0.0
        %4004 = vmatpush1.msra.mxu0 0.0
        %4005 = vmatprep.subr.mxu0 0.0
        %4006 = vmatpush1.msra.mxu0 0.0
        %4007 = vmatprep.subr.mxu0 0.0
        %4008 = vmatpush1.msra.mxu0 0.0
        %4009 = vmatprep.subr.mxu0 0.0
        %4010 = vmatpush1.msra.mxu0 0.0
        %4011 = vmatprep.subr.mxu0 0.0
        %4012 = vmatpush1.msra.mxu0 0.0
        %4013 = vmatprep.subr.mxu0 0.0
        %4014 = vmatpush1.msra.mxu0 0.0
        %4015 = vmatprep.subr.mxu0 0.0
        %4016 = vmatpush1.msra.mxu0 0.0
        %4017 = vmatprep.subr.mxu0 0.0
        %4018 = vmatpush1.msra.mxu0 0.0
        %4019 = vmatprep.subr.mxu0 0.0
        %4020 = vmatpush1.msra.mxu0 0.0
        %4021 = vmatprep.subr.mxu0 0.0
        %4022 = vmatpush1.msra.mxu0 0.0
        %4023 = vmatprep.subr.mxu0 0.0
        %4024 = vmatpush1.msra.mxu0 0.0
        %4025 = vmatprep.subr.mxu0 0.0
        %4026 = vmatpush1.msra.mxu0 %v4000
        %4027 = vmatprep.subr.mxu0 0.0
        %4028 = vmatpush1.msra.mxu0 %v3999
        %4029 = vmatprep.subr.mxu0 0.0
        %4030 = vmatpush1.msra.mxu0 %v3998
        %4031 = vmatprep.subr.mxu0 0.0
        %4032 = vmatpush1.msra.mxu0 %v3997
        %4033 = vmatprep.subr.mxu0 0.0
        %4034 = vmatpush2.msra.mxu0 0.0
        %4035 = vmatprep.subr.mxu0 0.0
        %4036 = vmatpush2.msra.mxu0 0.0
        %4037 = vmatprep.subr.mxu0 0.0
        %4038 = vmatpush2.msra.mxu0 0.0
        %4039 = vmatprep.subr.mxu0 0.0
        %4040 = vmatpush2.msra.mxu0 0.0
        %4041 = vmatprep.subr.mxu0 0.0
        %4042 = vmatpush2.msra.mxu0 0.0
        %4043 = vmatprep.subr.mxu0 0.0
        %4044 = vmatpush2.msra.mxu0 0.0
        %4045 = vmatprep.subr.mxu0 0.0
        %4046 = vmatpush2.msra.mxu0 0.0
        %4047 = vmatprep.subr.mxu0 0.0
        %4048 = vmatpush2.msra.mxu0 0.0
        %4049 = vmatprep.subr.mxu0 0.0
        %4050 = vmatpush2.msra.mxu0 0.0
        %4051 = vmatprep.subr.mxu0 0.0
        %4052 = vmatpush2.msra.mxu0 0.0
        %4053 = vmatprep.subr.mxu0 0.0
        %4054 = vmatpush2.msra.mxu0 0.0
        %4055 = vmatprep.subr.mxu0 0.0
        %4056 = vmatpush2.msra.mxu0 0.0
        %4057 = vmatprep.subr.mxu0 0.0
        %4058 = vmatpush2.msra.mxu0 0.0
        %4059 = vmatprep.subr.mxu0 0.0
        %4060 = vmatpush2.msra.mxu0 0.0
        %4061 = vmatprep.subr.mxu0 0.0
        %4062 = vmatpush2.msra.mxu0 0.0
        %4063 = vmatprep.subr.mxu0 0.0
        %4064 = vmatpush2.msra.mxu0 0.0
        %4065 = vmatprep.mubr.f32.mxu0 0.0
        %4066 = vmatmul.mubr.f32.gmra.mxu0 %v1033
        %v4067 = vpop.f32.mrf.mxu0
        %v4068 = vadd.f32 0.0, %v4067
        %v4069 = vpop.f32.mrf.mxu0
        %4070 = vmatprep.mubr.f32.mxu0 0.0
        %4071 = vmatmul.mubr.f32.gmra.mxu0 %v1036
        %v4072 = vpop.f32.mrf.mxu0
        %v4073 = vadd.f32 0.0, %v4072
        %v4074 = vpop.f32.mrf.mxu0
        %4075 = vdwg.mxu0
        %v4077 = vsel %vm1192, %v3988, 0
        %v4080 = vsel %vm1192, %v4068, 0
        %4082 = vmatprep.subr.mxu0 0.0
        %4083 = vmatpush1.xpose.msra.mxu0 0.0
        %4084 = vmatprep.subr.mxu0 0.0
        %4085 = vmatpush1.xpose.msra.mxu0 0.0
        %4086 = vmatprep.subr.mxu0 0.0
        %4087 = vmatpush1.xpose.msra.mxu0 0.0
        %4088 = vmatprep.subr.mxu0 0.0
        %4089 = vmatpush1.xpose.msra.mxu0 0.0
        %4090 = vmatprep.subr.mxu0 0.0
        %4091 = vmatpush1.xpose.msra.mxu0 0.0
        %4092 = vmatprep.subr.mxu0 0.0
        %4093 = vmatpush1.xpose.msra.mxu0 0.0
        %4094 = vmatprep.subr.mxu0 0.0
        %4095 = vmatpush1.xpose.msra.mxu0 0.0
        %4096 = vmatprep.subr.mxu0 0.0
        %4097 = vmatpush1.xpose.msra.mxu0 0.0
        %4098 = vmatprep.subr.mxu0 0.0
        %4099 = vmatpush1.xpose.msra.mxu0 0.0
        %4100 = vmatprep.subr.mxu0 0.0
        %4101 = vmatpush1.xpose.msra.mxu0 0.0
        %4102 = vmatprep.subr.mxu0 0.0
        %4103 = vmatpush1.xpose.msra.mxu0 0.0
        %4104 = vmatprep.subr.mxu0 0.0
        %4105 = vmatpush1.xpose.msra.mxu0 0.0
        %4106 = vmatprep.subr.mxu0 0.0
        %4107 = vmatpush1.xpose.msra.mxu0 0.0
        %4108 = vmatprep.subr.mxu0 0.0
        %4109 = vmatpush1.xpose.msra.mxu0 0.0
        %4110 = vmatprep.subr.mxu0 0.0
        %4111 = vmatpush1.xpose.msra.mxu0 0.0
        %4112 = vmatprep.subr.mxu0 0.0
        %4113 = vmatpush1.xpose.msra.mxu0 %v4080
        %4114 = vmatprep.subr.mxu0 0.0
        %4115 = vmatpush2.xpose.msra.mxu0 0.0
        %4116 = vmatprep.subr.mxu0 0.0
        %4117 = vmatpush2.xpose.msra.mxu0 0.0
        %4118 = vmatprep.subr.mxu0 0.0
        %4119 = vmatpush2.xpose.msra.mxu0 0.0
        %4120 = vmatprep.subr.mxu0 0.0
        %4121 = vmatpush2.xpose.msra.mxu0 0.0
        %4122 = vmatprep.subr.mxu0 0.0
        %4123 = vmatpush2.xpose.msra.mxu0 0.0
        %4124 = vmatprep.subr.mxu0 0.0
        %4125 = vmatpush2.xpose.msra.mxu0 0.0
        %4126 = vmatprep.subr.mxu0 0.0
        %4127 = vmatpush2.xpose.msra.mxu0 0.0
        %4128 = vmatprep.subr.mxu0 0.0
        %4129 = vmatpush2.xpose.msra.mxu0 0.0
        %4130 = vmatprep.subr.mxu0 0.0
        %4131 = vmatpush2.xpose.msra.mxu0 0.0
        %4132 = vmatprep.subr.mxu0 0.0
        %4133 = vmatpush2.xpose.msra.mxu0 0.0
        %4134 = vmatprep.subr.mxu0 0.0
        %4135 = vmatpush2.xpose.msra.mxu0 0.0
        %4136 = vmatprep.subr.mxu0 0.0
        %4137 = vmatpush2.xpose.msra.mxu0 0.0
        %4138 = vmatprep.subr.mxu0 0.0
        %4139 = vmatpush2.xpose.msra.mxu0 0.0
        %4140 = vmatprep.subr.mxu0 0.0
        %4141 = vmatpush2.xpose.msra.mxu0 0.0
        %4142 = vmatprep.subr.mxu0 0.0
        %4143 = vmatpush2.xpose.msra.mxu0 0.0
        %4144 = vmatprep.subr.mxu0 0.0
        %4145 = vmatpush2.xpose.msra.mxu0 0.0
        %4146 = vmatprep.mubr.f32.mxu0 0.0
        %4147 = vmatmul.mubr.f32.gmra.mxu0 %v4077
        %v4148 = vpop.f32.mrf.mxu0
        %v4149 = vadd.f32 0.0, %v4148
        %v4150 = vpop.f32.mrf.mxu0
        %4151 = vdwg.mxu0
        %v4153 = vsel %vm1192, %v3993, 0
        %v4156 = vsel %vm1192, %v4073, 0
        %4158 = vmatprep.subr.mxu0 0.0
        %4159 = vmatpush1.xpose.msra.mxu0 0.0
        %4160 = vmatprep.subr.mxu0 0.0
        %4161 = vmatpush1.xpose.msra.mxu0 0.0
        %4162 = vmatprep.subr.mxu0 0.0
        %4163 = vmatpush1.xpose.msra.mxu0 0.0
        %4164 = vmatprep.subr.mxu0 0.0
        %4165 = vmatpush1.xpose.msra.mxu0 0.0
        %4166 = vmatprep.subr.mxu0 0.0
        %4167 = vmatpush1.xpose.msra.mxu0 0.0
        %4168 = vmatprep.subr.mxu0 0.0
        %4169 = vmatpush1.xpose.msra.mxu0 0.0
        %4170 = vmatprep.subr.mxu0 0.0
        %4171 = vmatpush1.xpose.msra.mxu0 0.0
        %4172 = vmatprep.subr.mxu0 0.0
        %4173 = vmatpush1.xpose.msra.mxu0 0.0
        %4174 = vmatprep.subr.mxu0 0.0
        %4175 = vmatpush1.xpose.msra.mxu0 0.0
        %4176 = vmatprep.subr.mxu0 0.0
        %4177 = vmatpush1.xpose.msra.mxu0 0.0
        %4178 = vmatprep.subr.mxu0 0.0
        %4179 = vmatpush1.xpose.msra.mxu0 0.0
        %4180 = vmatprep.subr.mxu0 0.0
        %4181 = vmatpush1.xpose.msra.mxu0 0.0
        %4182 = vmatprep.subr.mxu0 0.0
        %4183 = vmatpush1.xpose.msra.mxu0 0.0
        %4184 = vmatprep.subr.mxu0 0.0
        %4185 = vmatpush1.xpose.msra.mxu0 0.0
        %4186 = vmatprep.subr.mxu0 0.0
        %4187 = vmatpush1.xpose.msra.mxu0 0.0
        %4188 = vmatprep.subr.mxu0 0.0
        %4189 = vmatpush1.xpose.msra.mxu0 %v4156
        %4190 = vmatprep.subr.mxu0 0.0
        %4191 = vmatpush2.xpose.msra.mxu0 0.0
        %4192 = vmatprep.subr.mxu0 0.0
        %4193 = vmatpush2.xpose.msra.mxu0 0.0
        %4194 = vmatprep.subr.mxu0 0.0
        %4195 = vmatpush2.xpose.msra.mxu0 0.0
        %4196 = vmatprep.subr.mxu0 0.0
        %4197 = vmatpush2.xpose.msra.mxu0 0.0
        %4198 = vmatprep.subr.mxu0 0.0
        %4199 = vmatpush2.xpose.msra.mxu0 0.0
        %4200 = vmatprep.subr.mxu0 0.0
        %4201 = vmatpush2.xpose.msra.mxu0 0.0
        %4202 = vmatprep.subr.mxu0 0.0
        %4203 = vmatpush2.xpose.msra.mxu0 0.0
        %4204 = vmatprep.subr.mxu0 0.0
        %4205 = vmatpush2.xpose.msra.mxu0 0.0
        %4206 = vmatprep.subr.mxu0 0.0
        %4207 = vmatpush2.xpose.msra.mxu0 0.0
        %4208 = vmatprep.subr.mxu0 0.0
        %4209 = vmatpush2.xpose.msra.mxu0 0.0
        %4210 = vmatprep.subr.mxu0 0.0
        %4211 = vmatpush2.xpose.msra.mxu0 0.0
        %4212 = vmatprep.subr.mxu0 0.0
        %4213 = vmatpush2.xpose.msra.mxu0 0.0
        %4214 = vmatprep.subr.mxu0 0.0
        %4215 = vmatpush2.xpose.msra.mxu0 0.0
        %4216 = vmatprep.subr.mxu0 0.0
        %4217 = vmatpush2.xpose.msra.mxu0 0.0
        %4218 = vmatprep.subr.mxu0 0.0
        %4219 = vmatpush2.xpose.msra.mxu0 0.0
        %4220 = vmatprep.subr.mxu0 0.0
        %4221 = vmatpush2.xpose.msra.mxu0 0.0
        %4222 = vmatprep.mubr.f32.mxu0 0.0
        %4223 = vmatmul.mubr.f32.gmra.mxu0 %v4153
        %v4224 = vpop.f32.mrf.mxu0
        %v4225 = vadd.f32 0.0, %v4224
        %v4226 = vpop.f32.mrf.mxu0
        %4227 = vdwg.mxu0
        %v4229 = vsel %vm1192, %v3748, 0
        %v4232 = vsel %vm1192, %v3828, 0
        %4234 = vmatprep.subr.mxu0 0.0
        %4235 = vmatpush1.xpose.msra.mxu0 0.0
        %4236 = vmatprep.subr.mxu0 0.0
        %4237 = vmatpush1.xpose.msra.mxu0 0.0
        %4238 = vmatprep.subr.mxu0 0.0
        %4239 = vmatpush1.xpose.msra.mxu0 0.0
        %4240 = vmatprep.subr.mxu0 0.0
        %4241 = vmatpush1.xpose.msra.mxu0 0.0
        %4242 = vmatprep.subr.mxu0 0.0
        %4243 = vmatpush1.xpose.msra.mxu0 0.0
        %4244 = vmatprep.subr.mxu0 0.0
        %4245 = vmatpush1.xpose.msra.mxu0 0.0
        %4246 = vmatprep.subr.mxu0 0.0
        %4247 = vmatpush1.xpose.msra.mxu0 0.0
        %4248 = vmatprep.subr.mxu0 0.0
        %4249 = vmatpush1.xpose.msra.mxu0 0.0
        %4250 = vmatprep.subr.mxu0 0.0
        %4251 = vmatpush1.xpose.msra.mxu0 0.0
        %4252 = vmatprep.subr.mxu0 0.0
        %4253 = vmatpush1.xpose.msra.mxu0 0.0
        %4254 = vmatprep.subr.mxu0 0.0
        %4255 = vmatpush1.xpose.msra.mxu0 0.0
        %4256 = vmatprep.subr.mxu0 0.0
        %4257 = vmatpush1.xpose.msra.mxu0 0.0
        %4258 = vmatprep.subr.mxu0 0.0
        %4259 = vmatpush1.xpose.msra.mxu0 0.0
        %4260 = vmatprep.subr.mxu0 0.0
        %4261 = vmatpush1.xpose.msra.mxu0 0.0
        %4262 = vmatprep.subr.mxu0 0.0
        %4263 = vmatpush1.xpose.msra.mxu0 0.0
        %4264 = vmatprep.subr.mxu0 0.0
        %4265 = vmatpush1.xpose.msra.mxu0 %v4232
        %4266 = vmatprep.subr.mxu0 0.0
        %4267 = vmatpush2.xpose.msra.mxu0 0.0
        %4268 = vmatprep.subr.mxu0 0.0
        %4269 = vmatpush2.xpose.msra.mxu0 0.0
        %4270 = vmatprep.subr.mxu0 0.0
        %4271 = vmatpush2.xpose.msra.mxu0 0.0
        %4272 = vmatprep.subr.mxu0 0.0
        %4273 = vmatpush2.xpose.msra.mxu0 0.0
        %4274 = vmatprep.subr.mxu0 0.0
        %4275 = vmatpush2.xpose.msra.mxu0 0.0
        %4276 = vmatprep.subr.mxu0 0.0
        %4277 = vmatpush2.xpose.msra.mxu0 0.0
        %4278 = vmatprep.subr.mxu0 0.0
        %4279 = vmatpush2.xpose.msra.mxu0 0.0
        %4280 = vmatprep.subr.mxu0 0.0
        %4281 = vmatpush2.xpose.msra.mxu0 0.0
        %4282 = vmatprep.subr.mxu0 0.0
        %4283 = vmatpush2.xpose.msra.mxu0 0.0
        %4284 = vmatprep.subr.mxu0 0.0
        %4285 = vmatpush2.xpose.msra.mxu0 0.0
        %4286 = vmatprep.subr.mxu0 0.0
        %4287 = vmatpush2.xpose.msra.mxu0 0.0
        %4288 = vmatprep.subr.mxu0 0.0
        %4289 = vmatpush2.xpose.msra.mxu0 0.0
        %4290 = vmatprep.subr.mxu0 0.0
        %4291 = vmatpush2.xpose.msra.mxu0 0.0
        %4292 = vmatprep.subr.mxu0 0.0
        %4293 = vmatpush2.xpose.msra.mxu0 0.0
        %4294 = vmatprep.subr.mxu0 0.0
        %4295 = vmatpush2.xpose.msra.mxu0 0.0
        %4296 = vmatprep.subr.mxu0 0.0
        %4297 = vmatpush2.xpose.msra.mxu0 0.0
        %4298 = vmatprep.mubr.f32.mxu0 0.0
        %4299 = vmatmul.mubr.f32.gmra.mxu0 %v4229
        %v4300 = vpop.f32.mrf.mxu0
        %v4301 = vadd.f32 %v4149, %v4300
        %v4302 = vpop.f32.mrf.mxu0
        %4303 = vdwg.mxu0
        %v4305 = vsel %vm1192, %v3753, 0
        %v4308 = vsel %vm1192, %v3833, 0
        %4310 = vmatprep.subr.mxu0 0.0
        %4311 = vmatpush1.xpose.msra.mxu0 0.0
        %4312 = vmatprep.subr.mxu0 0.0
        %4313 = vmatpush1.xpose.msra.mxu0 0.0
        %4314 = vmatprep.subr.mxu0 0.0
        %4315 = vmatpush1.xpose.msra.mxu0 0.0
        %4316 = vmatprep.subr.mxu0 0.0
        %4317 = vmatpush1.xpose.msra.mxu0 0.0
        %4318 = vmatprep.subr.mxu0 0.0
        %4319 = vmatpush1.xpose.msra.mxu0 0.0
        %4320 = vmatprep.subr.mxu0 0.0
        %4321 = vmatpush1.xpose.msra.mxu0 0.0
        %4322 = vmatprep.subr.mxu0 0.0
        %4323 = vmatpush1.xpose.msra.mxu0 0.0
        %4324 = vmatprep.subr.mxu0 0.0
        %4325 = vmatpush1.xpose.msra.mxu0 0.0
        %4326 = vmatprep.subr.mxu0 0.0
        %4327 = vmatpush1.xpose.msra.mxu0 0.0
        %4328 = vmatprep.subr.mxu0 0.0
        %4329 = vmatpush1.xpose.msra.mxu0 0.0
        %4330 = vmatprep.subr.mxu0 0.0
        %4331 = vmatpush1.xpose.msra.mxu0 0.0
        %4332 = vmatprep.subr.mxu0 0.0
        %4333 = vmatpush1.xpose.msra.mxu0 0.0
        %4334 = vmatprep.subr.mxu0 0.0
        %4335 = vmatpush1.xpose.msra.mxu0 0.0
        %4336 = vmatprep.subr.mxu0 0.0
        %4337 = vmatpush1.xpose.msra.mxu0 0.0
        %4338 = vmatprep.subr.mxu0 0.0
        %4339 = vmatpush1.xpose.msra.mxu0 0.0
        %4340 = vmatprep.subr.mxu0 0.0
        %4341 = vmatpush1.xpose.msra.mxu0 %v4308
        %4342 = vmatprep.subr.mxu0 0.0
        %4343 = vmatpush2.xpose.msra.mxu0 0.0
        %4344 = vmatprep.subr.mxu0 0.0
        %4345 = vmatpush2.xpose.msra.mxu0 0.0
        %4346 = vmatprep.subr.mxu0 0.0
        %4347 = vmatpush2.xpose.msra.mxu0 0.0
        %4348 = vmatprep.subr.mxu0 0.0
        %4349 = vmatpush2.xpose.msra.mxu0 0.0
        %4350 = vmatprep.subr.mxu0 0.0
        %4351 = vmatpush2.xpose.msra.mxu0 0.0
        %4352 = vmatprep.subr.mxu0 0.0
        %4353 = vmatpush2.xpose.msra.mxu0 0.0
        %4354 = vmatprep.subr.mxu0 0.0
        %4355 = vmatpush2.xpose.msra.mxu0 0.0
        %4356 = vmatprep.subr.mxu0 0.0
        %4357 = vmatpush2.xpose.msra.mxu0 0.0
        %4358 = vmatprep.subr.mxu0 0.0
        %4359 = vmatpush2.xpose.msra.mxu0 0.0
        %4360 = vmatprep.subr.mxu0 0.0
        %4361 = vmatpush2.xpose.msra.mxu0 0.0
        %4362 = vmatprep.subr.mxu0 0.0
        %4363 = vmatpush2.xpose.msra.mxu0 0.0
        %4364 = vmatprep.subr.mxu0 0.0
        %4365 = vmatpush2.xpose.msra.mxu0 0.0
        %4366 = vmatprep.subr.mxu0 0.0
        %4367 = vmatpush2.xpose.msra.mxu0 0.0
        %4368 = vmatprep.subr.mxu0 0.0
        %4369 = vmatpush2.xpose.msra.mxu0 0.0
        %4370 = vmatprep.subr.mxu0 0.0
        %4371 = vmatpush2.xpose.msra.mxu0 0.0
        %4372 = vmatprep.subr.mxu0 0.0
        %4373 = vmatpush2.xpose.msra.mxu0 0.0
        %4374 = vmatprep.mubr.f32.mxu0 0.0
        %4375 = vmatmul.mubr.f32.gmra.mxu0 %v4305
        %v4376 = vpop.f32.mrf.mxu0
        %v4377 = vadd.f32 %v4225, %v4376
        %v4378 = vpop.f32.mrf.mxu0
        %4379 = vdwg.mxu0
        %v4380 = vmul.f32 %v4301, 0.25
        %v4381 = vmul.f32 %v4377, 0.25
        %s4382 = scalar_lea.vmem %s2, 24
        %v4383 = vld [vmem:[%s4382] sm:$0xff]
        %v4384 = vadd.f32 %v4380, %v4383
        %v4385 = vadd.f32 %v4381, %v4383
        %v4386 = vsel %vm1192, %v4384, -inf
        %4387 = vmax.xlane.f32.xlu0 %v4386
        %v4388 = vpop.xlane.xlu0 %4387
        %v4389 = vsel %vm1192, %v4385, -inf
        %4390 = vmax.xlane.f32.xlu0 %v4389
        %v4391 = vpop.xlane.xlu0 %4390
        %v4392 = vsub.f32 %v4384, %v4388
        %v4393 = vsub.f32 %v4385, %v4391
        %v4394 = vmul.f32 %v4392, 1.442695
        %v4395 = vpow.pop %v4394
        %v4396 = vmul.f32 %v4393, 1.442695
        %v4397 = vpow.pop %v4396
        %v4398 = vsel %vm1192, %v4395, 0.0
        %4399 = vadd.xlane.f32.xlu0 %v4398
        %v4400 = vpop.xlane.xlu0 %4399
        %v4401 = vsel %vm1192, %v4397, 0.0
        %4402 = vadd.xlane.f32.xlu0 %v4401
        %v4403 = vpop.xlane.xlu0 %4402
        %v4404 = vrcp.pop %v4400
        %v4405 = vrcp.pop %v4403
        %v4406 = vmul.f32 %v4395, %v4404
        %v4407 = vmul.f32 %v4397, %v4405
        %v4409 = vsel %vm1192, %v4406, 0
        %4411 = vmatprep.subr.mxu0 0.0
        %4412 = vmatpush1.msra.mxu0 0.0
        %4413 = vmatprep.subr.mxu0 0.0
        %4414 = vmatpush1.msra.mxu0 0.0
        %4415 = vmatprep.subr.mxu0 0.0
        %4416 = vmatpush1.msra.mxu0 0.0
        %4417 = vmatprep.subr.mxu0 0.0
        %4418 = vmatpush1.msra.mxu0 0.0
        %4419 = vmatprep.subr.mxu0 0.0
        %4420 = vmatpush1.msra.mxu0 0.0
        %4421 = vmatprep.subr.mxu0 0.0
        %4422 = vmatpush1.msra.mxu0 0.0
        %4423 = vmatprep.subr.mxu0 0.0
        %4424 = vmatpush1.msra.mxu0 0.0
        %4425 = vmatprep.subr.mxu0 0.0
        %4426 = vmatpush1.msra.mxu0 0.0
        %4427 = vmatprep.subr.mxu0 0.0
        %4428 = vmatpush1.msra.mxu0 0.0
        %4429 = vmatprep.subr.mxu0 0.0
        %4430 = vmatpush1.msra.mxu0 0.0
        %4431 = vmatprep.subr.mxu0 0.0
        %4432 = vmatpush1.msra.mxu0 0.0
        %4433 = vmatprep.subr.mxu0 0.0
        %4434 = vmatpush1.msra.mxu0 0.0
        %4435 = vmatprep.subr.mxu0 0.0
        %4436 = vmatpush1.msra.mxu0 0.0
        %4437 = vmatprep.subr.mxu0 0.0
        %4438 = vmatpush1.msra.mxu0 0.0
        %4439 = vmatprep.subr.mxu0 0.0
        %4440 = vmatpush1.msra.mxu0 0.0
        %4441 = vmatprep.subr.mxu0 0.0
        %4442 = vmatpush1.msra.mxu0 %v3908
        %4443 = vmatprep.subr.mxu0 0.0
        %4444 = vmatpush2.msra.mxu0 0.0
        %4445 = vmatprep.subr.mxu0 0.0
        %4446 = vmatpush2.msra.mxu0 0.0
        %4447 = vmatprep.subr.mxu0 0.0
        %4448 = vmatpush2.msra.mxu0 0.0
        %4449 = vmatprep.subr.mxu0 0.0
        %4450 = vmatpush2.msra.mxu0 0.0
        %4451 = vmatprep.subr.mxu0 0.0
        %4452 = vmatpush2.msra.mxu0 0.0
        %4453 = vmatprep.subr.mxu0 0.0
        %4454 = vmatpush2.msra.mxu0 0.0
        %4455 = vmatprep.subr.mxu0 0.0
        %4456 = vmatpush2.msra.mxu0 0.0
        %4457 = vmatprep.subr.mxu0 0.0
        %4458 = vmatpush2.msra.mxu0 0.0
        %4459 = vmatprep.subr.mxu0 0.0
        %4460 = vmatpush2.msra.mxu0 0.0
        %4461 = vmatprep.subr.mxu0 0.0
        %4462 = vmatpush2.msra.mxu0 0.0
        %4463 = vmatprep.subr.mxu0 0.0
        %4464 = vmatpush2.msra.mxu0 0.0
        %4465 = vmatprep.subr.mxu0 0.0
        %4466 = vmatpush2.msra.mxu0 0.0
        %4467 = vmatprep.subr.mxu0 0.0
        %4468 = vmatpush2.msra.mxu0 0.0
        %4469 = vmatprep.subr.mxu0 0.0
        %4470 = vmatpush2.msra.mxu0 0.0
        %4471 = vmatprep.subr.mxu0 0.0
        %4472 = vmatpush2.msra.mxu0 0.0
        %4473 = vmatprep.subr.mxu0 0.0
        %4474 = vmatpush2.msra.mxu0 0.0
        %4475 = vmatprep.mubr.f32.mxu0 0.0
        %4476 = vmatmul.mubr.f32.gmra.mxu0 %v4409
        %v4477 = vpop.f32.mrf.mxu0
        %v4478 = vadd.f32 0.0, %v4477
        %v4479 = vpop.f32.mrf.mxu0
        %4480 = vdwg.mxu0
        %v4482 = vsel %vm1192, %v4407, 0
        %4484 = vmatprep.subr.mxu0 0.0
        %4485 = vmatpush1.msra.mxu0 0.0
        %4486 = vmatprep.subr.mxu0 0.0
        %4487 = vmatpush1.msra.mxu0 0.0
        %4488 = vmatprep.subr.mxu0 0.0
        %4489 = vmatpush1.msra.mxu0 0.0
        %4490 = vmatprep.subr.mxu0 0.0
        %4491 = vmatpush1.msra.mxu0 0.0
        %4492 = vmatprep.subr.mxu0 0.0
        %4493 = vmatpush1.msra.mxu0 0.0
        %4494 = vmatprep.subr.mxu0 0.0
        %4495 = vmatpush1.msra.mxu0 0.0
        %4496 = vmatprep.subr.mxu0 0.0
        %4497 = vmatpush1.msra.mxu0 0.0
        %4498 = vmatprep.subr.mxu0 0.0
        %4499 = vmatpush1.msra.mxu0 0.0
        %4500 = vmatprep.subr.mxu0 0.0
        %4501 = vmatpush1.msra.mxu0 0.0
        %4502 = vmatprep.subr.mxu0 0.0
        %4503 = vmatpush1.msra.mxu0 0.0
        %4504 = vmatprep.subr.mxu0 0.0
        %4505 = vmatpush1.msra.mxu0 0.0
        %4506 = vmatprep.subr.mxu0 0.0
        %4507 = vmatpush1.msra.mxu0 0.0
        %4508 = vmatprep.subr.mxu0 0.0
        %4509 = vmatpush1.msra.mxu0 0.0
        %4510 = vmatprep.subr.mxu0 0.0
        %4511 = vmatpush1.msra.mxu0 0.0
        %4512 = vmatprep.subr.mxu0 0.0
        %4513 = vmatpush1.msra.mxu0 0.0
        %4514 = vmatprep.subr.mxu0 0.0
        %4515 = vmatpush1.msra.mxu0 %v3913
        %4516 = vmatprep.subr.mxu0 0.0
        %4517 = vmatpush2.msra.mxu0 0.0
        %4518 = vmatprep.subr.mxu0 0.0
        %4519 = vmatpush2.msra.mxu0 0.0
        %4520 = vmatprep.subr.mxu0 0.0
        %4521 = vmatpush2.msra.mxu0 0.0
        %4522 = vmatprep.subr.mxu0 0.0
        %4523 = vmatpush2.msra.mxu0 0.0
        %4524 = vmatprep.subr.mxu0 0.0
        %4525 = vmatpush2.msra.mxu0 0.0
        %4526 = vmatprep.subr.mxu0 0.0
        %4527 = vmatpush2.msra.mxu0 0.0
        %4528 = vmatprep.subr.mxu0 0.0
        %4529 = vmatpush2.msra.mxu0 0.0
        %4530 = vmatprep.subr.mxu0 0.0
        %4531 = vmatpush2.msra.mxu0 0.0
        %4532 = vmatprep.subr.mxu0 0.0
        %4533 = vmatpush2.msra.mxu0 0.0
        %4534 = vmatprep.subr.mxu0 0.0
        %4535 = vmatpush2.msra.mxu0 0.0
        %4536 = vmatprep.subr.mxu0 0.0
        %4537 = vmatpush2.msra.mxu0 0.0
        %4538 = vmatprep.subr.mxu0 0.0
        %4539 = vmatpush2.msra.mxu0 0.0
        %4540 = vmatprep.subr.mxu0 0.0
        %4541 = vmatpush2.msra.mxu0 0.0
        %4542 = vmatprep.subr.mxu0 0.0
        %4543 = vmatpush2.msra.mxu0 0.0
        %4544 = vmatprep.subr.mxu0 0.0
        %4545 = vmatpush2.msra.mxu0 0.0
        %4546 = vmatprep.subr.mxu0 0.0
        %4547 = vmatpush2.msra.mxu0 0.0
        %4548 = vmatprep.mubr.f32.mxu0 0.0
        %4549 = vmatmul.mubr.f32.gmra.mxu0 %v4482
        %v4550 = vpop.f32.mrf.mxu0
        %v4551 = vadd.f32 0.0, %v4550
        %v4552 = vpop.f32.mrf.mxu0
        %4553 = vdwg.mxu0
        %s4554 = scalar_lea.vmem %s738, 24
        %v4555 = vld [vmem:[%s4554] sm:$0xff]
        %v4557 = vsel %vm1192, %v4478, 0
        %v4560 = vsel %vm1192, %v4551, 0
        %4562 = vmatprep.subr.mxu0 0.0
        %4563 = vmatpush1.msra.mxu0 0.0
        %4564 = vmatprep.subr.mxu0 0.0
        %4565 = vmatpush1.msra.mxu0 0.0
        %4566 = vmatprep.subr.mxu0 0.0
        %4567 = vmatpush1.msra.mxu0 0.0
        %4568 = vmatprep.subr.mxu0 0.0
        %4569 = vmatpush1.msra.mxu0 0.0
        %4570 = vmatprep.subr.mxu0 0.0
        %4571 = vmatpush1.msra.mxu0 0.0
        %4572 = vmatprep.subr.mxu0 0.0
        %4573 = vmatpush1.msra.mxu0 0.0
        %4574 = vmatprep.subr.mxu0 0.0
        %4575 = vmatpush1.msra.mxu0 0.0
        %4576 = vmatprep.subr.mxu0 0.0
        %4577 = vmatpush1.msra.mxu0 0.0
        %4578 = vmatprep.subr.mxu0 0.0
        %4579 = vmatpush1.msra.mxu0 0.0
        %4580 = vmatprep.subr.mxu0 0.0
        %4581 = vmatpush1.msra.mxu0 0.0
        %4582 = vmatprep.subr.mxu0 0.0
        %4583 = vmatpush1.msra.mxu0 0.0
        %4584 = vmatprep.subr.mxu0 0.0
        %4585 = vmatpush1.msra.mxu0 0.0
        %4586 = vmatprep.subr.mxu0 0.0
        %4587 = vmatpush1.msra.mxu0 0.0
        %4588 = vmatprep.subr.mxu0 0.0
        %4589 = vmatpush1.msra.mxu0 0.0
        %4590 = vmatprep.subr.mxu0 0.0
        %4591 = vmatpush1.msra.mxu0 0.0
        %4592 = vmatprep.subr.mxu0 0.0
        %4593 = vmatpush1.msra.mxu0 %v4555
        %4594 = vmatprep.subr.mxu0 0.0
        %4595 = vmatpush2.msra.mxu0 0.0
        %4596 = vmatprep.subr.mxu0 0.0
        %4597 = vmatpush2.msra.mxu0 0.0
        %4598 = vmatprep.subr.mxu0 0.0
        %4599 = vmatpush2.msra.mxu0 0.0
        %4600 = vmatprep.subr.mxu0 0.0
        %4601 = vmatpush2.msra.mxu0 0.0
        %4602 = vmatprep.subr.mxu0 0.0
        %4603 = vmatpush2.msra.mxu0 0.0
        %4604 = vmatprep.subr.mxu0 0.0
        %4605 = vmatpush2.msra.mxu0 0.0
        %4606 = vmatprep.subr.mxu0 0.0
        %4607 = vmatpush2.msra.mxu0 0.0
        %4608 = vmatprep.subr.mxu0 0.0
        %4609 = vmatpush2.msra.mxu0 0.0
        %4610 = vmatprep.subr.mxu0 0.0
        %4611 = vmatpush2.msra.mxu0 0.0
        %4612 = vmatprep.subr.mxu0 0.0
        %4613 = vmatpush2.msra.mxu0 0.0
        %4614 = vmatprep.subr.mxu0 0.0
        %4615 = vmatpush2.msra.mxu0 0.0
        %4616 = vmatprep.subr.mxu0 0.0
        %4617 = vmatpush2.msra.mxu0 0.0
        %4618 = vmatprep.subr.mxu0 0.0
        %4619 = vmatpush2.msra.mxu0 0.0
        %4620 = vmatprep.subr.mxu0 0.0
        %4621 = vmatpush2.msra.mxu0 0.0
        %4622 = vmatprep.subr.mxu0 0.0
        %4623 = vmatpush2.msra.mxu0 0.0
        %4624 = vmatprep.subr.mxu0 0.0
        %4625 = vmatpush2.msra.mxu0 0.0
        %4626 = vmatprep.mubr.f32.mxu0 0.0
        %4627 = vmatmul.mubr.f32.gmra.mxu0 %v4557
        %v4628 = vpop.f32.mrf.mxu0
        %v4629 = vadd.f32 0.0, %v4628
        %v4630 = vpop.f32.mrf.mxu0
        %4631 = vmatprep.mubr.f32.mxu0 0.0
        %4632 = vmatmul.mubr.f32.gmra.mxu0 %v4560
        %v4633 = vpop.f32.mrf.mxu0
        %v4634 = vadd.f32 0.0, %v4633
        %v4635 = vpop.f32.mrf.mxu0
        %4636 = vdwg.mxu0
        %v4637 = vadd.f32 %v3674, %v4629
        %v4638 = vadd.f32 %v3675, %v4634
        %v4639 = vadd.f32 %v780, %v4637
        %v4640 = vadd.f32 %v781, %v4638
        %v4641 = vld [vmem:[%s758] sm:$0xff]
        %v4642 = vld [vmem:[%s762] sm:$0xff]
        %v4643 = vsel %vm788, %v4639, 0.0
        %4644 = vadd.xlane.f32.xlu0 %v4643
        %v4645 = vpop.xlane.xlu0 %4644
        %v4646 = vsel %vm788, %v4640, 0.0
        %4647 = vadd.xlane.f32.xlu0 %v4646
        %v4648 = vpop.xlane.xlu0 %4647
        %v4649 = vmul.f32 %v4639, %v4639
        %v4650 = vmul.f32 %v4640, %v4640
        %v4651 = vsel %vm788, %v4649, 0.0
        %4652 = vadd.xlane.f32.xlu0 %v4651
        %v4653 = vpop.xlane.xlu0 %4652
        %v4654 = vsel %vm788, %v4650, 0.0
        %4655 = vadd.xlane.f32.xlu0 %v4654
        %v4656 = vpop.xlane.xlu0 %4655
        %v4657 = vadd.f32 %v4645, %v4648
        %v4658 = vadd.f32 %v4653, %v4656
        %v4659 = vmul.f32 %v4657, 0.015625
        %v4660 = vmul.f32 %v4658, 0.015625
        %v4661 = vmul.f32 %v4659, %v4659
        %v4662 = vsub.f32 %v4660, %v4661
        %v4663 = vadd.f32 %v4662, 1e-05
        %v4664 = vrsqrt.pop %v4663
        %v4665 = vsub.f32 %v4639, %v4659
        %v4666 = vsub.f32 %v4640, %v4659
        %v4667 = vmul.f32 %v4664, %v4641
        %4669 = vset.pattern.permute.xlu0 0
        %4670 = vperm.xlu0 %4669, %v4667
        %v4671 = vpop.permute.xlu0 %4670
        %v4673 = vmul.f32 %v4665, %v4671
        %v4674 = vmul.f32 %v4666, %v4671
        %4676 = vset.pattern.permute.xlu0 0
        %4677 = vperm.xlu0 %4676, %v4642
        %v4678 = vpop.permute.xlu0 %4677
        %v4680 = vadd.f32 %v4673, %v4678
        %v4681 = vadd.f32 %v4674, %v4678
        %v4682 = vld [vmem:[%s743] sm:$0xff]
        %v4683 = vld [vmem:[%s743 + $0x8] sm:$0xff]
        %v4684 = vld [vmem:[%s743 + $0x10] sm:$0xff]
        %v4685 = vld [vmem:[%s743 + $0x18] sm:$0xff]
        %v4686 = vld [vmem:[%s746] sm:$0x1]
        %v4688 = vlaneseq
        %v4689 = vshrl.u32 %v4688, 7
        %v4690 = vsub.s32 0, %v4689
        %v4691 = vrot.slane %v4686, %v4690
        %v4694 = vsel %vm788, %v4680, 0
        %v4697 = vsel %vm788, %v4681, 0
        %4699 = vmatprep.subr.mxu0 0.0
        %4700 = vmatpush1.msra.mxu0 0.0
        %4701 = vmatprep.subr.mxu0 0.0
        %4702 = vmatpush1.msra.mxu0 0.0
        %4703 = vmatprep.subr.mxu0 0.0
        %4704 = vmatpush1.msra.mxu0 0.0
        %4705 = vmatprep.subr.mxu0 0.0
        %4706 = vmatpush1.msra.mxu0 0.0
        %4707 = vmatprep.subr.mxu0 0.0
        %4708 = vmatpush1.msra.mxu0 0.0
        %4709 = vmatprep.subr.mxu0 0.0
        %4710 = vmatpush1.msra.mxu0 0.0
        %4711 = vmatprep.subr.mxu0 0.0
        %4712 = vmatpush1.msra.mxu0 0.0
        %4713 = vmatprep.subr.mxu0 0.0
        %4714 = vmatpush1.msra.mxu0 0.0
        %4715 = vmatprep.subr.mxu0 0.0
        %4716 = vmatpush1.msra.mxu0 0.0
        %4717 = vmatprep.subr.mxu0 0.0
        %4718 = vmatpush1.msra.mxu0 0.0
        %4719 = vmatprep.subr.mxu0 0.0
        %4720 = vmatpush1.msra.mxu0 0.0
        %4721 = vmatprep.subr.mxu0 0.0
        %4722 = vmatpush1.msra.mxu0 0.0
        %4723 = vmatprep.subr.mxu0 0.0
        %4724 = vmatpush1.msra.mxu0 %v4685
        %4725 = vmatprep.subr.mxu0 0.0
        %4726 = vmatpush1.msra.mxu0 %v4684
        %4727 = vmatprep.subr.mxu0 0.0
        %4728 = vmatpush1.msra.mxu0 %v4683
        %4729 = vmatprep.subr.mxu0 0.0
        %4730 = vmatpush1.msra.mxu0 %v4682
        %4731 = vmatprep.subr.mxu0 0.0
        %4732 = vmatpush2.msra.mxu0 0.0
        %4733 = vmatprep.subr.mxu0 0.0
        %4734 = vmatpush2.msra.mxu0 0.0
        %4735 = vmatprep.subr.mxu0 0.0
        %4736 = vmatpush2.msra.mxu0 0.0
        %4737 = vmatprep.subr.mxu0 0.0
        %4738 = vmatpush2.msra.mxu0 0.0
        %4739 = vmatprep.subr.mxu0 0.0
        %4740 = vmatpush2.msra.mxu0 0.0
        %4741 = vmatprep.subr.mxu0 0.0
        %4742 = vmatpush2.msra.mxu0 0.0
        %4743 = vmatprep.subr.mxu0 0.0
        %4744 = vmatpush2.msra.mxu0 0.0
        %4745 = vmatprep.subr.mxu0 0.0
        %4746 = vmatpush2.msra.mxu0 0.0
        %4747 = vmatprep.subr.mxu0 0.0
        %4748 = vmatpush2.msra.mxu0 0.0
        %4749 = vmatprep.subr.mxu0 0.0
        %4750 = vmatpush2.msra.mxu0 0.0
        %4751 = vmatprep.subr.mxu0 0.0
        %4752 = vmatpush2.msra.mxu0 0.0
        %4753 = vmatprep.subr.mxu0 0.0
        %4754 = vmatpush2.msra.mxu0 0.0
        %4755 = vmatprep.subr.mxu0 0.0
        %4756 = vmatpush2.msra.mxu0 0.0
        %4757 = vmatprep.subr.mxu0 0.0
        %4758 = vmatpush2.msra.mxu0 0.0
        %4759 = vmatprep.subr.mxu0 0.0
        %4760 = vmatpush2.msra.mxu0 0.0
        %4761 = vmatprep.subr.mxu0 0.0
        %4762 = vmatpush2.msra.mxu0 0.0
        %4763 = vmatprep.mubr.f32.mxu0 0.0
        %4764 = vmatmul.mubr.f32.gmra.mxu0 %v4694
        %v4765 = vpop.f32.mrf.mxu0
        %v4766 = vadd.f32 %v4691, %v4765
        %v4767 = vpop.f32.mrf.mxu0
        %4768 = vmatprep.mubr.f32.mxu0 0.0
        %4769 = vmatmul.mubr.f32.gmra.mxu0 %v4697
        %v4770 = vpop.f32.mrf.mxu0
        %v4771 = vadd.f32 %v4691, %v4770
        %v4772 = vpop.f32.mrf.mxu0
        %4773 = vdwg.mxu0
        %v4774 = vmax.f32 %v4766, 0.0
        %v4775 = vmax.f32 %v4771, 0.0
        %v4776 = vld [vmem:[%s751] sm:$0xff]
        %v4777 = vld [vmem:[%s751 + $0x8] sm:$0xff]
        %v4778 = vld [vmem:[%s751 + $0x10] sm:$0xff]
        %v4779 = vld [vmem:[%s751 + $0x18] sm:$0xff]
        %v4780 = vld [vmem:[%s751 + $0x20] sm:$0xff]
        %v4781 = vld [vmem:[%s751 + $0x28] sm:$0xff]
        %v4782 = vld [vmem:[%s751 + $0x30] sm:$0xff]
        %v4783 = vld [vmem:[%s751 + $0x38] sm:$0xff]
        %v4784 = vld [vmem:[%s754] sm:$0x1]
        %v4786 = vlaneseq
        %v4787 = vshrl.u32 %v4786, 7
        %v4788 = vsub.s32 0, %v4787
        %v4789 = vrot.slane %v4784, %v4788
        %vm4791 = vcmask 523264
        %v4793 = vsel %vm4791, %v4774, 0
        %v4796 = vsel %vm4791, %v4775, 0
        %4798 = vmatprep.subr.mxu0 0.0
        %4799 = vmatpush1.msra.mxu0 0.0
        %4800 = vmatprep.subr.mxu0 0.0
        %4801 = vmatpush1.msra.mxu0 0.0
        %4802 = vmatprep.subr.mxu0 0.0
        %4803 = vmatpush1.msra.mxu0 0.0
        %4804 = vmatprep.subr.mxu0 0.0
        %4805 = vmatpush1.msra.mxu0 0.0
        %4806 = vmatprep.subr.mxu0 0.0
        %4807 = vmatpush1.msra.mxu0 0.0
        %4808 = vmatprep.subr.mxu0 0.0
        %4809 = vmatpush1.msra.mxu0 0.0
        %4810 = vmatprep.subr.mxu0 0.0
        %4811 = vmatpush1.msra.mxu0 0.0
        %4812 = vmatprep.subr.mxu0 0.0
        %4813 = vmatpush1.msra.mxu0 0.0
        %4814 = vmatprep.subr.mxu0 0.0
        %4815 = vmatpush1.msra.mxu0 %v4783
        %4816 = vmatprep.subr.mxu0 0.0
        %4817 = vmatpush1.msra.mxu0 %v4782
        %4818 = vmatprep.subr.mxu0 0.0
        %4819 = vmatpush1.msra.mxu0 %v4781
        %4820 = vmatprep.subr.mxu0 0.0
        %4821 = vmatpush1.msra.mxu0 %v4780
        %4822 = vmatprep.subr.mxu0 0.0
        %4823 = vmatpush1.msra.mxu0 %v4779
        %4824 = vmatprep.subr.mxu0 0.0
        %4825 = vmatpush1.msra.mxu0 %v4778
        %4826 = vmatprep.subr.mxu0 0.0
        %4827 = vmatpush1.msra.mxu0 %v4777
        %4828 = vmatprep.subr.mxu0 0.0
        %4829 = vmatpush1.msra.mxu0 %v4776
        %4830 = vmatprep.subr.mxu0 0.0
        %4831 = vmatpush2.msra.mxu0 0.0
        %4832 = vmatprep.subr.mxu0 0.0
        %4833 = vmatpush2.msra.mxu0 0.0
        %4834 = vmatprep.subr.mxu0 0.0
        %4835 = vmatpush2.msra.mxu0 0.0
        %4836 = vmatprep.subr.mxu0 0.0
        %4837 = vmatpush2.msra.mxu0 0.0
        %4838 = vmatprep.subr.mxu0 0.0
        %4839 = vmatpush2.msra.mxu0 0.0
        %4840 = vmatprep.subr.mxu0 0.0
        %4841 = vmatpush2.msra.mxu0 0.0
        %4842 = vmatprep.subr.mxu0 0.0
        %4843 = vmatpush2.msra.mxu0 0.0
        %4844 = vmatprep.subr.mxu0 0.0
        %4845 = vmatpush2.msra.mxu0 0.0
        %4846 = vmatprep.subr.mxu0 0.0
        %4847 = vmatpush2.msra.mxu0 0.0
        %4848 = vmatprep.subr.mxu0 0.0
        %4849 = vmatpush2.msra.mxu0 0.0
        %4850 = vmatprep.subr.mxu0 0.0
        %4851 = vmatpush2.msra.mxu0 0.0
        %4852 = vmatprep.subr.mxu0 0.0
        %4853 = vmatpush2.msra.mxu0 0.0
        %4854 = vmatprep.subr.mxu0 0.0
        %4855 = vmatpush2.msra.mxu0 0.0
        %4856 = vmatprep.subr.mxu0 0.0
        %4857 = vmatpush2.msra.mxu0 0.0
        %4858 = vmatprep.subr.mxu0 0.0
        %4859 = vmatpush2.msra.mxu0 0.0
        %4860 = vmatprep.subr.mxu0 0.0
        %4861 = vmatpush2.msra.mxu0 0.0
        %4862 = vmatprep.mubr.f32.mxu0 0.0
        %4863 = vmatmul.mubr.f32.gmra.mxu0 %v4793
        %v4864 = vpop.f32.mrf.mxu0
        %v4865 = vadd.f32 %v4789, %v4864
        %v4866 = vpop.f32.mrf.mxu0
        %4867 = vmatprep.mubr.f32.mxu0 0.0
        %4868 = vmatmul.mubr.f32.gmra.mxu0 %v4796
        %v4869 = vpop.f32.mrf.mxu0
        %v4870 = vadd.f32 %v4789, %v4869
        %v4871 = vpop.f32.mrf.mxu0
        %4872 = vdwg.mxu0
        %v4873 = vadd.f32 %v4680, %v4865
        %v4874 = vadd.f32 %v4681, %v4870
        %v4875 = vld [vmem:[%s766] sm:$0xff]
        %v4876 = vld [vmem:[%s770] sm:$0xff]
        %v4877 = vsel %vm788, %v4873, 0.0
        %4878 = vadd.xlane.f32.xlu0 %v4877
        %v4879 = vpop.xlane.xlu0 %4878
        %v4880 = vsel %vm788, %v4874, 0.0
        %4881 = vadd.xlane.f32.xlu0 %v4880
        %v4882 = vpop.xlane.xlu0 %4881
        %v4883 = vmul.f32 %v4873, %v4873
        %v4884 = vmul.f32 %v4874, %v4874
        %v4885 = vsel %vm788, %v4883, 0.0
        %4886 = vadd.xlane.f32.xlu0 %v4885
        %v4887 = vpop.xlane.xlu0 %4886
        %v4888 = vsel %vm788, %v4884, 0.0
        %4889 = vadd.xlane.f32.xlu0 %v4888
        %v4890 = vpop.xlane.xlu0 %4889
        %v4891 = vadd.f32 %v4879, %v4882
        %v4892 = vadd.f32 %v4887, %v4890
        %v4893 = vmul.f32 %v4891, 0.015625
        %v4894 = vmul.f32 %v4892, 0.015625
        %v4895 = vmul.f32 %v4893, %v4893
        %v4896 = vsub.f32 %v4894, %v4895
        %v4897 = vadd.f32 %v4896, 1e-05
        %v4898 = vrsqrt.pop %v4897
        %v4899 = vsub.f32 %v4873, %v4893
        %v4900 = vsub.f32 %v4874, %v4893
        %v4901 = vmul.f32 %v4898, %v4875
        %4903 = vset.pattern.permute.xlu0 0
        %4904 = vperm.xlu0 %4903, %v4901
        %v4905 = vpop.permute.xlu0 %4904
        %v4907 = vmul.f32 %v4899, %v4905
        %v4908 = vmul.f32 %v4900, %v4905
        %4910 = vset.pattern.permute.xlu0 0
        %4911 = vperm.xlu0 %4910, %v4876
        %v4912 = vpop.permute.xlu0 %4911
        %v4914 = vadd.f32 %v4907, %v4912
        %v4915 = vadd.f32 %v4908, %v4912
        %4916 = vst.msk [vmem:[#allocation2] sm:$0xff] %vm788, %v4914
        %4917 = vst.msk [vmem:[#allocation2 + $0x8] sm:$0xff] %vm788, %v4915
        %p4918 = scmp.eq.s32.totalorder %s29, 1
        // Predicated region
        $region93: #{tpu_custom_call.1} parent=87 // pred_check
          %p4919 = pneg %p4918
        $region94: #{tpu_custom_call.1} parent=87 // pred_check_branch
          %4921 = sbr.rel (%p4919) target = $region96
        $region95: #{tpu_custom_call.1} parent=87 // pred_region
          %4922 = vst.msk [vmem:[#allocation3] sm:$0xff] %vm788, %v4914
          %4923 = vst.msk [vmem:[#allocation3 + $0x8] sm:$0xff] %vm788, %v4915
        $region96: #{tpu_custom_call.1} parent=87 // pred_fallthru
          _
        // Predicated region
        $region97: #{tpu_custom_call.1} parent=87 // pred_check
          %p4924 = pneg %p469
        $region98: #{tpu_custom_call.1} parent=87 // pred_check_branch
          %4926 = sbr.rel (%p4924) target = $region100
        $region99: #{tpu_custom_call.1} parent=87 // pred_region
          %s4928 = ssub.s32 256, 256
          %4929 = vsyncadd [#allocation4], %s4928
          %s4930 = sshll.u32 [#allocation3], 4
          %s4931 = int_to_ptr.vmem [resolvable:$true] %s4930
          %4936 = dma.vmem_to_hbm [thread:$0]  %s4931, 256, %s17, [#allocation4], 128, 128, 8
        $region100: #{tpu_custom_call.1} parent=87 // pred_fallthru
          _
        // Predicated region
        $region101: #{tpu_custom_call.1} parent=87 // pred_check
          %p4937 = pneg %p469
        $region102: #{tpu_custom_call.1} parent=87 // pred_check_branch
          %4939 = sbr.rel (%p4937) target = $region104
        $region103: #{tpu_custom_call.1} parent=87 // pred_region
          %4940 = dma.done [#allocation4], 256
        $region104: #{tpu_custom_call.1} parent=87 // pred_fallthru
          _
      $region88: #{tpu_custom_call.1} parent=5 // pred_fallthru
        _
      %p4941 = scmp.le.s32.totalorder 2, %s24
      // Predicated region
      $region105: #{tpu_custom_call.1} parent=5 // pred_check
        %p4942 = pneg %p4941
      $region106: #{tpu_custom_call.1} parent=5 // pred_check_branch
        %4944 = sbr.rel (%p4942) target = $region108
      $region107: #{tpu_custom_call.1} parent=5 // pred_region
        %s4945 = ssub.s32 %s24, 2
      $region108: #{tpu_custom_call.1} parent=5 // pred_fallthru
        _
    $region6: #{tpu_custom_call.1} parent=1 // loop_footer
      %s28 = sadd.s32 1, %s24
    $region7: #{tpu_custom_call.1} parent=1 // loop_footer_branch
      %23 = sbr.rel target = $region3
    $region8: #{tpu_custom_call.1} parent=1 // loop_exit
      _
    %4946 = vsyncpa [#allocation4], 1
    %s4947 = scalar_lea.sflag [#allocation4], 1
    %4948 = vsyncpa %s4947, 1

</llo_original>
